<compile_context>
chip_gen: v5e
topology: v5e:2x2
jax: 0.10.0
libtpu: 0.0.40
codegen_flags: <defaults>
</compile_context>

<pallas_src>
import jax
import jax.numpy as jnp
import numpy as np
from jax.experimental import pallas as pl
from jax.experimental.pallas import tpu as pltpu


def basic_block_kernel(x_ref, w1_ref, w2_ref, bn_ref, out_ref, pad_ref, col_ref):
    """One batch image per grid step.

    x_ref  : (1, H, W, C)       input tile, NHWC, compute dtype (also identity branch)
    w1_ref : (9*C, C)           conv1 weights, tap-major im2col layout
    w2_ref : (9*C, C)           conv2 weights
    bn_ref : (4, C)   f32       rows = [scale1, bias1, scale2, bias2] (folded BN)
    out_ref: (1, H, W, C)       output tile, compute dtype
    pad_ref: (H+2, W+2, C)      VMEM scratch: zero-padded conv input (reused by both convs)
    col_ref: (H*W, 9*C)         VMEM scratch: im2col patch slab (reused by both convs)
    """
    _, H, W, C = x_ref.shape

    # ---- zero ONLY the 1-px border of the padded scratch (interior always overwritten;
    #      done every step so it stays correct under any per-core grid split).
    zrow = jnp.zeros((1, W + 2, C), pad_ref.dtype)
    zcol = jnp.zeros((H + 2, 1, C), pad_ref.dtype)
    pad_ref[0:1, :, :] = zrow
    pad_ref[H + 1:H + 2, :, :] = zrow
    pad_ref[:, 0:1, :] = zcol
    pad_ref[:, W + 1:W + 2, :] = zcol

    def im2col():
        # Build the (HW, 9C) patch slab once; each shifted slice is read exactly once.
        for tap in range(9):
            dy, dx = divmod(tap, 3)
            col_ref[:, tap * C:(tap + 1) * C] = (
                pad_ref[dy:dy + H, dx:dx + W, :].reshape(H * W, C))

    # ---- conv1 (single im2col matmul, K = 9C) + bn1 + relu -----------------------
    pad_ref[1:H + 1, 1:W + 1, :] = x_ref[0]
    im2col()
    y = jnp.dot(col_ref[...], w1_ref[...], preferred_element_type=jnp.float32)
    y = jnp.maximum(y * bn_ref[0:1, :] + bn_ref[1:2, :], 0.0)          # f32 (HW, C)

    # ---- conv2 + bn2 + residual + relu (fused epilogue, single output store) -----
    pad_ref[1:H + 1, 1:W + 1, :] = y.astype(pad_ref.dtype).reshape(H, W, C)
    im2col()
    z = jnp.dot(col_ref[...], w2_ref[...], preferred_element_type=jnp.float32)
    z = z * bn_ref[2:3, :] + bn_ref[3:4, :]
    z = z + x_ref[0].reshape(H * W, C).astype(jnp.float32)             # identity (f32 add)
    out_ref[0] = jnp.maximum(z, 0.0).reshape(H, W, C).astype(out_ref.dtype)


def _fold_bn(gamma, beta, mean, var, eps=1e-5):
    scale = gamma / jnp.sqrt(var + eps)
    bias = beta - mean * scale
    return scale, bias


def basic_block_forward_nhwc(x_nhwc, params, *, compute_dtype=jnp.bfloat16):
    """Production path: NHWC in, NHWC out, output in compute_dtype."""
    N, H, W, C = x_nhwc.shape
    x = x_nhwc.astype(compute_dtype)

    def prep_w(w):
        # torch layout (Cout, Cin, kH, kW) -> tap-major im2col matrix (9*Cin, Cout)
        return jnp.transpose(w, (2, 3, 1, 0)).reshape(9 * C, C).astype(compute_dtype)

    w1, w2 = prep_w(params["w1"]), prep_w(params["w2"])
    s1, b1 = _fold_bn(params["gamma1"], params["beta1"], params["mean1"], params["var1"])
    s2, b2 = _fold_bn(params["gamma2"], params["beta2"], params["mean2"], params["var2"])
    bn = jnp.stack([s1, b1, s2, b2], axis=0).astype(jnp.float32)       # (4, C)

    img_spec = pl.BlockSpec((1, H, W, C), lambda n: (n, 0, 0, 0))
    w_spec = pl.BlockSpec((9 * C, C), lambda n: (0, 0))                # resident across grid
    bn_spec = pl.BlockSpec((4, C), lambda n: (0, 0))

    return pl.pallas_call(
        basic_block_kernel,
        grid=(N,),
        in_specs=[img_spec, w_spec, w_spec, bn_spec],
        out_specs=img_spec,
        out_shape=jax.ShapeDtypeStruct((N, H, W, C), compute_dtype),
        scratch_shapes=[
            pltpu.VMEM((H + 2, W + 2, C), compute_dtype),   # shared padded conv input
            pltpu.VMEM((H * W, 9 * C), compute_dtype),      # im2col slab (both convs)
        ],
        compiler_params=pltpu.CompilerParams(
            dimension_semantics=("parallel",),
            vmem_limit_bytes=32 * 1024 * 1024,   # safe on v5e/v6e/v7x; usage is far below
        ),
    )(x, w1, w2, bn)


def basic_block_forward(x_nchw, params, *, compute_dtype=jnp.bfloat16):
    """Test-only wrapper matching the PyTorch NCHW/f32 interface."""
    x_nhwc = jnp.transpose(x_nchw, (0, 2, 3, 1))
    out = basic_block_forward_nhwc(x_nhwc, params, compute_dtype=compute_dtype)
    return jnp.transpose(out, (0, 3, 1, 2)).astype(jnp.float32)


# ---------------- pure-JAX reference (for verification) -------------------
def basic_block_reference(x_nchw, p):
    def conv(x, w):
        return jax.lax.conv_general_dilated(
            x, w, window_strides=(1, 1), padding=((1, 1), (1, 1)),
            dimension_numbers=("NCHW", "OIHW", "NCHW"))

    def bn(x, g, b, m, v, eps=1e-5):
        g, b, m, v = [a[None, :, None, None] for a in (g, b, m, v)]
        return (x - m) / jnp.sqrt(v + eps) * g + b

    out = jax.nn.relu(bn(conv(x_nchw, p["w1"]),
                         p["gamma1"], p["beta1"], p["mean1"], p["var1"]))
    out = bn(conv(out, p["w2"]), p["gamma2"], p["beta2"], p["mean2"], p["var2"])
    return jax.nn.relu(out + x_nchw)


if __name__ == "__main__":
    # Small shapes: inplanes = planes = 4, stride = 1, downsample = None.
    N, C, H, W = 2, 4, 16, 16
    key = jax.random.PRNGKey(0)
    keys = jax.random.split(key, 12)

    params = {
        "w1": 0.1 * jax.random.normal(keys[0], (C, C, 3, 3), jnp.float32),
        "w2": 0.1 * jax.random.normal(keys[1], (C, C, 3, 3), jnp.float32),
        "gamma1": jax.random.uniform(keys[2], (C,), jnp.float32, 0.5, 1.5),
        "beta1": 0.1 * jax.random.normal(keys[3], (C,), jnp.float32),
        "mean1": 0.1 * jax.random.normal(keys[4], (C,), jnp.float32),
        "var1": jax.random.uniform(keys[5], (C,), jnp.float32, 0.5, 1.5),
        "gamma2": jax.random.uniform(keys[6], (C,), jnp.float32, 0.5, 1.5),
        "beta2": 0.1 * jax.random.normal(keys[7], (C,), jnp.float32),
        "mean2": 0.1 * jax.random.normal(keys[8], (C,), jnp.float32),
        "var2": jax.random.uniform(keys[9], (C,), jnp.float32, 0.5, 1.5),
    }
    x = jax.random.normal(keys[10], (N, C, H, W), jnp.float32)

    ref = jax.block_until_ready(basic_block_reference(x, params))

    # f32 path: faithful to the PyTorch forward (tight tolerance).
    out_f32 = jax.block_until_ready(
        basic_block_forward(x, params, compute_dtype=jnp.float32))
    assert out_f32.shape == (N, C, H, W)
    np.testing.assert_allclose(np.asarray(out_f32), np.asarray(ref),
                               rtol=1e-4, atol=1e-4)

    # bf16 path: production configuration (bf16 im2col matmuls on the MXU,
    # f32 accumulate / BN / residual, bf16 output).
    out_bf16 = jax.block_until_ready(
        basic_block_forward(x, params, compute_dtype=jnp.bfloat16))
    assert out_bf16.shape == (N, C, H, W)
    np.testing.assert_allclose(np.asarray(out_bf16), np.asarray(ref),
                               rtol=5e-2, atol=5e-2)

    print("KERNEL_OK")
</pallas_src>

<mosaic_0001>
module attributes {stable_mosaic.version = 11 : i64} {
  func.func @basic_block_kernel(%arg0: i32, %arg1: memref<1x16x16x4xf32, #tpu.memory_space<vmem>>, %arg2: memref<36x4xf32, #tpu.memory_space<vmem>>, %arg3: memref<36x4xf32, #tpu.memory_space<vmem>>, %arg4: memref<4x4xf32, #tpu.memory_space<vmem>>, %arg5: memref<1x16x16x4xf32, #tpu.memory_space<vmem>>, %arg6: memref<18x18x4xf32, #tpu.memory_space<vmem>>, %arg7: memref<256x36xf32, #tpu.memory_space<vmem>>) attributes {dimension_semantics = [#tpu.dimension_semantics<parallel>], iteration_bounds = array<i64: 2>, scalar_prefetch = 0 : i64, scratch_operands = 2 : i64, tpu.core_type = #tpu.core_type<tc>, window_params = [{transform_indices = @transform_0, window_bounds = array<i64: 1, 16, 16, 4>}, {pipeline_mode = #tpu.pipeline_mode<synchronous>, transform_indices = @transform_1, window_bounds = array<i64: 36, 4>}, {pipeline_mode = #tpu.pipeline_mode<synchronous>, transform_indices = @transform_2, window_bounds = array<i64: 36, 4>}, {pipeline_mode = #tpu.pipeline_mode<synchronous>, transform_indices = @transform_3, window_bounds = array<i64: 4, 4>}, {transform_indices = @transform_4, window_bounds = array<i64: 1, 16, 16, 4>}]} {
    %cst = arith.constant 0.000000e+00 : f32
    %0 = vector.broadcast %cst : f32 to vector<1x18x4xf32>
    %cst_0 = arith.constant 0.000000e+00 : f32
    %1 = vector.broadcast %cst_0 : f32 to vector<18x1x4xf32>
    %c0 = arith.constant 0 : index
    %c0_1 = arith.constant 0 : index
    %c0_2 = arith.constant 0 : index
    %2 = vector.load %arg6[%c0, %c0_1, %c0_2] : memref<18x18x4xf32, #tpu.memory_space<vmem>>, vector<1x18x4xf32>
    tpu.vector_store %arg6[%c0, %c0_1, %c0_2], %0 {strides = array<i32>} : memref<18x18x4xf32, #tpu.memory_space<vmem>>, vector<1x18x4xf32>,
    %c17 = arith.constant 17 : index
    %c0_3 = arith.constant 0 : index
    %c0_4 = arith.constant 0 : index
    %3 = vector.load %arg6[%c17, %c0_3, %c0_4] : memref<18x18x4xf32, #tpu.memory_space<vmem>>, vector<1x18x4xf32>
    tpu.vector_store %arg6[%c17, %c0_3, %c0_4], %0 {strides = array<i32>} : memref<18x18x4xf32, #tpu.memory_space<vmem>>, vector<1x18x4xf32>,
    %c0_5 = arith.constant 0 : index
    %c0_6 = arith.constant 0 : index
    %c0_7 = arith.constant 0 : index
    %4 = vector.load %arg6[%c0_5, %c0_6, %c0_7] : memref<18x18x4xf32, #tpu.memory_space<vmem>>, vector<18x1x4xf32>
    tpu.vector_store %arg6[%c0_5, %c0_6, %c0_7], %1 {strides = array<i32>} : memref<18x18x4xf32, #tpu.memory_space<vmem>>, vector<18x1x4xf32>,
    %c0_8 = arith.constant 0 : index
    %c17_9 = arith.constant 17 : index
    %c0_10 = arith.constant 0 : index
    %5 = vector.load %arg6[%c0_8, %c17_9, %c0_10] : memref<18x18x4xf32, #tpu.memory_space<vmem>>, vector<18x1x4xf32>
    tpu.vector_store %arg6[%c0_8, %c17_9, %c0_10], %1 {strides = array<i32>} : memref<18x18x4xf32, #tpu.memory_space<vmem>>, vector<18x1x4xf32>,
    %c0_11 = arith.constant 0 : index
    %c0_12 = arith.constant 0 : index
    %c0_13 = arith.constant 0 : index
    %c0_14 = arith.constant 0 : index
    %6 = vector.load %arg1[%c0_11, %c0_12, %c0_13, %c0_14] : memref<1x16x16x4xf32, #tpu.memory_space<vmem>>, vector<1x16x16x4xf32>
    %7 = vector.shape_cast %6 : vector<1x16x16x4xf32> to vector<16x16x4xf32>
    %c1 = arith.constant 1 : index
    %c1_15 = arith.constant 1 : index
    %c0_16 = arith.constant 0 : index
    %8 = vector.load %arg6[%c1, %c1_15, %c0_16] : memref<18x18x4xf32, #tpu.memory_space<vmem>>, vector<16x16x4xf32>
    tpu.vector_store %arg6[%c1, %c1_15, %c0_16], %7 {strides = array<i32>} : memref<18x18x4xf32, #tpu.memory_space<vmem>>, vector<16x16x4xf32>,
    %c0_17 = arith.constant 0 : index
    %c0_18 = arith.constant 0 : index
    %c0_19 = arith.constant 0 : index
    %9 = vector.load %arg6[%c0_17, %c0_18, %c0_19] : memref<18x18x4xf32, #tpu.memory_space<vmem>>, vector<16x16x4xf32>
    %10 = vector.shape_cast %9 : vector<16x16x4xf32> to vector<256x4xf32>
    %c0_20 = arith.constant 0 : index
    %c0_21 = arith.constant 0 : index
    %11 = vector.load %arg7[%c0_20, %c0_21] : memref<256x36xf32, #tpu.memory_space<vmem>>, vector<256x4xf32>
    tpu.vector_store %arg7[%c0_20, %c0_21], %10 {strides = array<i32>} : memref<256x36xf32, #tpu.memory_space<vmem>>, vector<256x4xf32>,
    %c0_22 = arith.constant 0 : index
    %c1_23 = arith.constant 1 : index
    %c0_24 = arith.constant 0 : index
    %12 = vector.load %arg6[%c0_22, %c1_23, %c0_24] : memref<18x18x4xf32, #tpu.memory_space<vmem>>, vector<16x16x4xf32>
    %13 = vector.shape_cast %12 : vector<16x16x4xf32> to vector<256x4xf32>
    %c0_25 = arith.constant 0 : index
    %c4 = arith.constant 4 : index
    %14 = vector.load %arg7[%c0_25, %c4] : memref<256x36xf32, #tpu.memory_space<vmem>>, vector<256x4xf32>
    tpu.vector_store %arg7[%c0_25, %c4], %13 {strides = array<i32>} : memref<256x36xf32, #tpu.memory_space<vmem>>, vector<256x4xf32>,
    %c0_26 = arith.constant 0 : index
    %c2 = arith.constant 2 : index
    %c0_27 = arith.constant 0 : index
    %15 = vector.load %arg6[%c0_26, %c2, %c0_27] : memref<18x18x4xf32, #tpu.memory_space<vmem>>, vector<16x16x4xf32>
    %16 = vector.shape_cast %15 : vector<16x16x4xf32> to vector<256x4xf32>
    %c0_28 = arith.constant 0 : index
    %c8 = arith.constant 8 : index
    %17 = vector.load %arg7[%c0_28, %c8] : memref<256x36xf32, #tpu.memory_space<vmem>>, vector<256x4xf32>
    tpu.vector_store %arg7[%c0_28, %c8], %16 {strides = array<i32>} : memref<256x36xf32, #tpu.memory_space<vmem>>, vector<256x4xf32>,
    %c1_29 = arith.constant 1 : index
    %c0_30 = arith.constant 0 : index
    %c0_31 = arith.constant 0 : index
    %18 = vector.load %arg6[%c1_29, %c0_30, %c0_31] : memref<18x18x4xf32, #tpu.memory_space<vmem>>, vector<16x16x4xf32>
    %19 = vector.shape_cast %18 : vector<16x16x4xf32> to vector<256x4xf32>
    %c0_32 = arith.constant 0 : index
    %c12 = arith.constant 12 : index
    %20 = vector.load %arg7[%c0_32, %c12] : memref<256x36xf32, #tpu.memory_space<vmem>>, vector<256x4xf32>
    tpu.vector_store %arg7[%c0_32, %c12], %19 {strides = array<i32>} : memref<256x36xf32, #tpu.memory_space<vmem>>, vector<256x4xf32>,
    %c1_33 = arith.constant 1 : index
    %c1_34 = arith.constant 1 : index
    %c0_35 = arith.constant 0 : index
    %21 = vector.load %arg6[%c1_33, %c1_34, %c0_35] : memref<18x18x4xf32, #tpu.memory_space<vmem>>, vector<16x16x4xf32>
    %22 = vector.shape_cast %21 : vector<16x16x4xf32> to vector<256x4xf32>
    %c0_36 = arith.constant 0 : index
    %c16 = arith.constant 16 : index
    %23 = vector.load %arg7[%c0_36, %c16] : memref<256x36xf32, #tpu.memory_space<vmem>>, vector<256x4xf32>
    tpu.vector_store %arg7[%c0_36, %c16], %22 {strides = array<i32>} : memref<256x36xf32, #tpu.memory_space<vmem>>, vector<256x4xf32>,
    %c1_37 = arith.constant 1 : index
    %c2_38 = arith.constant 2 : index
    %c0_39 = arith.constant 0 : index
    %24 = vector.load %arg6[%c1_37, %c2_38, %c0_39] : memref<18x18x4xf32, #tpu.memory_space<vmem>>, vector<16x16x4xf32>
    %25 = vector.shape_cast %24 : vector<16x16x4xf32> to vector<256x4xf32>
    %c0_40 = arith.constant 0 : index
    %c20 = arith.constant 20 : index
    %26 = vector.load %arg7[%c0_40, %c20] : memref<256x36xf32, #tpu.memory_space<vmem>>, vector<256x4xf32>
    tpu.vector_store %arg7[%c0_40, %c20], %25 {strides = array<i32>} : memref<256x36xf32, #tpu.memory_space<vmem>>, vector<256x4xf32>,
    %c2_41 = arith.constant 2 : index
    %c0_42 = arith.constant 0 : index
    %c0_43 = arith.constant 0 : index
    %27 = vector.load %arg6[%c2_41, %c0_42, %c0_43] : memref<18x18x4xf32, #tpu.memory_space<vmem>>, vector<16x16x4xf32>
    %28 = vector.shape_cast %27 : vector<16x16x4xf32> to vector<256x4xf32>
    %c0_44 = arith.constant 0 : index
    %c24 = arith.constant 24 : index
    %29 = vector.load %arg7[%c0_44, %c24] : memref<256x36xf32, #tpu.memory_space<vmem>>, vector<256x4xf32>
    tpu.vector_store %arg7[%c0_44, %c24], %28 {strides = array<i32>} : memref<256x36xf32, #tpu.memory_space<vmem>>, vector<256x4xf32>,
    %c2_45 = arith.constant 2 : index
    %c1_46 = arith.constant 1 : index
    %c0_47 = arith.constant 0 : index
    %30 = vector.load %arg6[%c2_45, %c1_46, %c0_47] : memref<18x18x4xf32, #tpu.memory_space<vmem>>, vector<16x16x4xf32>
    %31 = vector.shape_cast %30 : vector<16x16x4xf32> to vector<256x4xf32>
    %c0_48 = arith.constant 0 : index
    %c28 = arith.constant 28 : index
    %32 = vector.load %arg7[%c0_48, %c28] : memref<256x36xf32, #tpu.memory_space<vmem>>, vector<256x4xf32>
    tpu.vector_store %arg7[%c0_48, %c28], %31 {strides = array<i32>} : memref<256x36xf32, #tpu.memory_space<vmem>>, vector<256x4xf32>,
    %c2_49 = arith.constant 2 : index
    %c2_50 = arith.constant 2 : index
    %c0_51 = arith.constant 0 : index
    %33 = vector.load %arg6[%c2_49, %c2_50, %c0_51] : memref<18x18x4xf32, #tpu.memory_space<vmem>>, vector<16x16x4xf32>
    %34 = vector.shape_cast %33 : vector<16x16x4xf32> to vector<256x4xf32>
    %c0_52 = arith.constant 0 : index
    %c32 = arith.constant 32 : index
    %35 = vector.load %arg7[%c0_52, %c32] : memref<256x36xf32, #tpu.memory_space<vmem>>, vector<256x4xf32>
    tpu.vector_store %arg7[%c0_52, %c32], %34 {strides = array<i32>} : memref<256x36xf32, #tpu.memory_space<vmem>>, vector<256x4xf32>,
    %c0_53 = arith.constant 0 : index
    %c0_54 = arith.constant 0 : index
    %36 = vector.load %arg7[%c0_53, %c0_54] : memref<256x36xf32, #tpu.memory_space<vmem>>, vector<256x36xf32>
    %c0_55 = arith.constant 0 : index
    %c0_56 = arith.constant 0 : index
    %37 = vector.load %arg2[%c0_55, %c0_56] : memref<36x4xf32, #tpu.memory_space<vmem>>, vector<36x4xf32>
    %cst_57 = arith.constant dense<0.000000e+00> : vector<256x4xf32>
    %38 = tpu.matmul %36, %37, %cst_57 {dimension_numbers = #tpu.dot_dimension_numbers<[1], [0], [0], [1], [0, 0, 1, 1], [], []>} : vector<256x36xf32>, vector<36x4xf32>, vector<256x4xf32> -> vector<256x4xf32>
    %c0_58 = arith.constant 0 : index
    %c0_59 = arith.constant 0 : index
    %39 = vector.load %arg4[%c0_58, %c0_59] : memref<4x4xf32, #tpu.memory_space<vmem>>, vector<1x4xf32>
    %40 = vector.broadcast %39 : vector<1x4xf32> to vector<256x4xf32>
    %41 = arith.mulf %38, %40 : vector<256x4xf32>
    %c1_60 = arith.constant 1 : index
    %c0_61 = arith.constant 0 : index
    %42 = vector.load %arg4[%c1_60, %c0_61] : memref<4x4xf32, #tpu.memory_space<vmem>>, vector<1x4xf32>
    %43 = vector.broadcast %42 : vector<1x4xf32> to vector<256x4xf32>
    %44 = arith.addf %41, %43 : vector<256x4xf32>
    %cst_62 = arith.constant 0.000000e+00 : f32
    %45 = vector.broadcast %cst_62 : f32 to vector<256x4xf32>
    %46 = arith.maximumf %44, %45 : vector<256x4xf32>
    %47 = vector.shape_cast %46 : vector<256x4xf32> to vector<16x16x4xf32>
    %c1_63 = arith.constant 1 : index
    %c1_64 = arith.constant 1 : index
    %c0_65 = arith.constant 0 : index
    %48 = vector.load %arg6[%c1_63, %c1_64, %c0_65] : memref<18x18x4xf32, #tpu.memory_space<vmem>>, vector<16x16x4xf32>
    tpu.vector_store %arg6[%c1_63, %c1_64, %c0_65], %47 {strides = array<i32>} : memref<18x18x4xf32, #tpu.memory_space<vmem>>, vector<16x16x4xf32>,
    %c0_66 = arith.constant 0 : index
    %c0_67 = arith.constant 0 : index
    %c0_68 = arith.constant 0 : index
    %49 = vector.load %arg6[%c0_66, %c0_67, %c0_68] : memref<18x18x4xf32, #tpu.memory_space<vmem>>, vector<16x16x4xf32>
    %50 = vector.shape_cast %49 : vector<16x16x4xf32> to vector<256x4xf32>
    %c0_69 = arith.constant 0 : index
    %c0_70 = arith.constant 0 : index
    %51 = vector.load %arg7[%c0_69, %c0_70] : memref<256x36xf32, #tpu.memory_space<vmem>>, vector<256x4xf32>
    tpu.vector_store %arg7[%c0_69, %c0_70], %50 {strides = array<i32>} : memref<256x36xf32, #tpu.memory_space<vmem>>, vector<256x4xf32>,
    %c0_71 = arith.constant 0 : index
    %c1_72 = arith.constant 1 : index
    %c0_73 = arith.constant 0 : index
    %52 = vector.load %arg6[%c0_71, %c1_72, %c0_73] : memref<18x18x4xf32, #tpu.memory_space<vmem>>, vector<16x16x4xf32>
    %53 = vector.shape_cast %52 : vector<16x16x4xf32> to vector<256x4xf32>
    %c0_74 = arith.constant 0 : index
    %c4_75 = arith.constant 4 : index
    %54 = vector.load %arg7[%c0_74, %c4_75] : memref<256x36xf32, #tpu.memory_space<vmem>>, vector<256x4xf32>
    tpu.vector_store %arg7[%c0_74, %c4_75], %53 {strides = array<i32>} : memref<256x36xf32, #tpu.memory_space<vmem>>, vector<256x4xf32>,
    %c0_76 = arith.constant 0 : index
    %c2_77 = arith.constant 2 : index
    %c0_78 = arith.constant 0 : index
    %55 = vector.load %arg6[%c0_76, %c2_77, %c0_78] : memref<18x18x4xf32, #tpu.memory_space<vmem>>, vector<16x16x4xf32>
    %56 = vector.shape_cast %55 : vector<16x16x4xf32> to vector<256x4xf32>
    %c0_79 = arith.constant 0 : index
    %c8_80 = arith.constant 8 : index
    %57 = vector.load %arg7[%c0_79, %c8_80] : memref<256x36xf32, #tpu.memory_space<vmem>>, vector<256x4xf32>
    tpu.vector_store %arg7[%c0_79, %c8_80], %56 {strides = array<i32>} : memref<256x36xf32, #tpu.memory_space<vmem>>, vector<256x4xf32>,
    %c1_81 = arith.constant 1 : index
    %c0_82 = arith.constant 0 : index
    %c0_83 = arith.constant 0 : index
    %58 = vector.load %arg6[%c1_81, %c0_82, %c0_83] : memref<18x18x4xf32, #tpu.memory_space<vmem>>, vector<16x16x4xf32>
    %59 = vector.shape_cast %58 : vector<16x16x4xf32> to vector<256x4xf32>
    %c0_84 = arith.constant 0 : index
    %c12_85 = arith.constant 12 : index
    %60 = vector.load %arg7[%c0_84, %c12_85] : memref<256x36xf32, #tpu.memory_space<vmem>>, vector<256x4xf32>
    tpu.vector_store %arg7[%c0_84, %c12_85], %59 {strides = array<i32>} : memref<256x36xf32, #tpu.memory_space<vmem>>, vector<256x4xf32>,
    %c1_86 = arith.constant 1 : index
    %c1_87 = arith.constant 1 : index
    %c0_88 = arith.constant 0 : index
    %61 = vector.load %arg6[%c1_86, %c1_87, %c0_88] : memref<18x18x4xf32, #tpu.memory_space<vmem>>, vector<16x16x4xf32>
    %62 = vector.shape_cast %61 : vector<16x16x4xf32> to vector<256x4xf32>
    %c0_89 = arith.constant 0 : index
    %c16_90 = arith.constant 16 : index
    %63 = vector.load %arg7[%c0_89, %c16_90] : memref<256x36xf32, #tpu.memory_space<vmem>>, vector<256x4xf32>
    tpu.vector_store %arg7[%c0_89, %c16_90], %62 {strides = array<i32>} : memref<256x36xf32, #tpu.memory_space<vmem>>, vector<256x4xf32>,
    %c1_91 = arith.constant 1 : index
    %c2_92 = arith.constant 2 : index
    %c0_93 = arith.constant 0 : index
    %64 = vector.load %arg6[%c1_91, %c2_92, %c0_93] : memref<18x18x4xf32, #tpu.memory_space<vmem>>, vector<16x16x4xf32>
    %65 = vector.shape_cast %64 : vector<16x16x4xf32> to vector<256x4xf32>
    %c0_94 = arith.constant 0 : index
    %c20_95 = arith.constant 20 : index
    %66 = vector.load %arg7[%c0_94, %c20_95] : memref<256x36xf32, #tpu.memory_space<vmem>>, vector<256x4xf32>
    tpu.vector_store %arg7[%c0_94, %c20_95], %65 {strides = array<i32>} : memref<256x36xf32, #tpu.memory_space<vmem>>, vector<256x4xf32>,
    %c2_96 = arith.constant 2 : index
    %c0_97 = arith.constant 0 : index
    %c0_98 = arith.constant 0 : index
    %67 = vector.load %arg6[%c2_96, %c0_97, %c0_98] : memref<18x18x4xf32, #tpu.memory_space<vmem>>, vector<16x16x4xf32>
    %68 = vector.shape_cast %67 : vector<16x16x4xf32> to vector<256x4xf32>
    %c0_99 = arith.constant 0 : index
    %c24_100 = arith.constant 24 : index
    %69 = vector.load %arg7[%c0_99, %c24_100] : memref<256x36xf32, #tpu.memory_space<vmem>>, vector<256x4xf32>
    tpu.vector_store %arg7[%c0_99, %c24_100], %68 {strides = array<i32>} : memref<256x36xf32, #tpu.memory_space<vmem>>, vector<256x4xf32>,
    %c2_101 = arith.constant 2 : index
    %c1_102 = arith.constant 1 : index
    %c0_103 = arith.constant 0 : index
    %70 = vector.load %arg6[%c2_101, %c1_102, %c0_103] : memref<18x18x4xf32, #tpu.memory_space<vmem>>, vector<16x16x4xf32>
    %71 = vector.shape_cast %70 : vector<16x16x4xf32> to vector<256x4xf32>
    %c0_104 = arith.constant 0 : index
    %c28_105 = arith.constant 28 : index
    %72 = vector.load %arg7[%c0_104, %c28_105] : memref<256x36xf32, #tpu.memory_space<vmem>>, vector<256x4xf32>
    tpu.vector_store %arg7[%c0_104, %c28_105], %71 {strides = array<i32>} : memref<256x36xf32, #tpu.memory_space<vmem>>, vector<256x4xf32>,
    %c2_106 = arith.constant 2 : index
    %c2_107 = arith.constant 2 : index
    %c0_108 = arith.constant 0 : index
    %73 = vector.load %arg6[%c2_106, %c2_107, %c0_108] : memref<18x18x4xf32, #tpu.memory_space<vmem>>, vector<16x16x4xf32>
    %74 = vector.shape_cast %73 : vector<16x16x4xf32> to vector<256x4xf32>
    %c0_109 = arith.constant 0 : index
    %c32_110 = arith.constant 32 : index
    %75 = vector.load %arg7[%c0_109, %c32_110] : memref<256x36xf32, #tpu.memory_space<vmem>>, vector<256x4xf32>
    tpu.vector_store %arg7[%c0_109, %c32_110], %74 {strides = array<i32>} : memref<256x36xf32, #tpu.memory_space<vmem>>, vector<256x4xf32>,
    %c0_111 = arith.constant 0 : index
    %c0_112 = arith.constant 0 : index
    %76 = vector.load %arg7[%c0_111, %c0_112] : memref<256x36xf32, #tpu.memory_space<vmem>>, vector<256x36xf32>
    %c0_113 = arith.constant 0 : index
    %c0_114 = arith.constant 0 : index
    %77 = vector.load %arg3[%c0_113, %c0_114] : memref<36x4xf32, #tpu.memory_space<vmem>>, vector<36x4xf32>
    %cst_115 = arith.constant dense<0.000000e+00> : vector<256x4xf32>
    %78 = tpu.matmul %76, %77, %cst_115 {dimension_numbers = #tpu.dot_dimension_numbers<[1], [0], [0], [1], [0, 0, 1, 1], [], []>} : vector<256x36xf32>, vector<36x4xf32>, vector<256x4xf32> -> vector<256x4xf32>
    %c2_116 = arith.constant 2 : index
    %c0_117 = arith.constant 0 : index
    %79 = vector.load %arg4[%c2_116, %c0_117] : memref<4x4xf32, #tpu.memory_space<vmem>>, vector<1x4xf32>
    %80 = vector.broadcast %79 : vector<1x4xf32> to vector<256x4xf32>
    %81 = arith.mulf %78, %80 : vector<256x4xf32>
    %c3 = arith.constant 3 : index
    %c0_118 = arith.constant 0 : index
    %82 = vector.load %arg4[%c3, %c0_118] : memref<4x4xf32, #tpu.memory_space<vmem>>, vector<1x4xf32>
    %83 = vector.broadcast %82 : vector<1x4xf32> to vector<256x4xf32>
    %84 = arith.addf %81, %83 : vector<256x4xf32>
    %c0_119 = arith.constant 0 : index
    %c0_120 = arith.constant 0 : index
    %c0_121 = arith.constant 0 : index
    %c0_122 = arith.constant 0 : index
    %85 = vector.load %arg1[%c0_119, %c0_120, %c0_121, %c0_122] : memref<1x16x16x4xf32, #tpu.memory_space<vmem>>, vector<1x16x16x4xf32>
    %86 = vector.shape_cast %85 : vector<1x16x16x4xf32> to vector<16x16x4xf32>
    %87 = vector.shape_cast %86 : vector<16x16x4xf32> to vector<256x4xf32>
    %88 = arith.addf %84, %87 : vector<256x4xf32>
    %cst_123 = arith.constant 0.000000e+00 : f32
    %89 = vector.broadcast %cst_123 : f32 to vector<256x4xf32>
    %90 = arith.maximumf %88, %89 : vector<256x4xf32>
    %91 = vector.shape_cast %90 : vector<256x4xf32> to vector<16x16x4xf32>
    %c0_124 = arith.constant 0 : index
    %c0_125 = arith.constant 0 : index
    %c0_126 = arith.constant 0 : index
    %c0_127 = arith.constant 0 : index
    %92 = vector.load %arg5[%c0_124, %c0_125, %c0_126, %c0_127] : memref<1x16x16x4xf32, #tpu.memory_space<vmem>>, vector<1x16x16x4xf32>
    %93 = vector.shape_cast %92 : vector<1x16x16x4xf32> to vector<16x16x4xf32>
    %94 = vector.shape_cast %91 : vector<16x16x4xf32> to vector<1x16x16x4xf32>
    tpu.vector_store %arg5[%c0_124, %c0_125, %c0_126, %c0_127], %94 {strides = array<i32>} : memref<1x16x16x4xf32, #tpu.memory_space<vmem>>, vector<1x16x16x4xf32>,
    return
  }
  func.func @transform_0(%arg0: i32) -> (i32, i32, i32, i32) {
    %c0_i32 = arith.constant 0 : i32
    %c0_i32_0 = arith.constant 0 : i32
    %c0_i32_1 = arith.constant 0 : i32
    %c0_i32_2 = arith.constant 0 : i32
    return %arg0, %c0_i32, %c0_i32_0, %c0_i32_1 : i32, i32, i32, i32
  }
  func.func @transform_1(%arg0: i32) -> (i32, i32) {
    %c0_i32 = arith.constant 0 : i32
    %c0_i32_0 = arith.constant 0 : i32
    %c0_i32_1 = arith.constant 0 : i32
    return %c0_i32, %c0_i32_0 : i32, i32
  }
  func.func @transform_2(%arg0: i32) -> (i32, i32) {
    %c0_i32 = arith.constant 0 : i32
    %c0_i32_0 = arith.constant 0 : i32
    %c0_i32_1 = arith.constant 0 : i32
    return %c0_i32, %c0_i32_0 : i32, i32
  }
  func.func @transform_3(%arg0: i32) -> (i32, i32) {
    %c0_i32 = arith.constant 0 : i32
    %c0_i32_0 = arith.constant 0 : i32
    %c0_i32_1 = arith.constant 0 : i32
    return %c0_i32, %c0_i32_0 : i32, i32
  }
  func.func @transform_4(%arg0: i32) -> (i32, i32, i32, i32) {
    %c0_i32 = arith.constant 0 : i32
    %c0_i32_0 = arith.constant 0 : i32
    %c0_i32_1 = arith.constant 0 : i32
    %c0_i32_2 = arith.constant 0 : i32
    return %arg0, %c0_i32, %c0_i32_0, %c0_i32_1 : i32, i32, i32, i32
  }
}

</mosaic_0001>

<llo_original>
// kernel: tpu_custom_call.1
$region0: #{tpu_custom_call.1}
  #allocation0 [shape = 'u32[]', space=smem, size = 0x4, offset = 0x4, fixed_abs, tag = 'smem constant byte address 0x4 - core index']
  #allocation1 [shape = 'u32[72,128]{1,0:T(1,128)}', space=vmem, size = 0x9000, scoped, tag = 'internal scratch']
  #allocation2 [shape = 'f32[18,18,4]{2,1,0:T(8,128)}', space=vmem, size = 0x36000, scoped, tag = 'scratch operand']
  #allocation3 [shape = 'f32[256,36]{1,0:T(8,128)}', space=vmem, size = 0x20000, scoped, tag = 'scratch operand']
  %s0 = inlined_call_operand.vmem [shape: f32[2,16,16,4], index: 0, kind: input, shape index: {}]
  %s1 = inlined_call_operand.vmem [shape: f32[36,4], index: 1, kind: input, shape index: {}]
  %s2 = inlined_call_operand.vmem [shape: f32[36,4], index: 2, kind: input, shape index: {}]
  %s3 = inlined_call_operand.vmem [shape: f32[4,4], index: 3, kind: input, shape index: {}]
  %s4 = inlined_call_operand.vmem [shape: f32[2,16,16,4], index: 4, kind: output, shape index: {}]
  %s5 = sld [smem:[#allocation0]]
  $region49: #{tpu_custom_call.1} parent=0
    _
  %s7 = ssub.s32 1, %s5
  %s8 = scalar_select 0, %s7, %s5
  loop: start=0, step=1, limit=4
  $region2: #{tpu_custom_call.1} parent=0 // loop_pre_header
    _
  $region3: #{tpu_custom_call.1} parent=0 // loop_header
    %s10 = sphi 0, %s14
    %p11 = scmp.ge.s32.totalorder %s10, 4
    %s20 = sphi 0, %s22
    %s23 = sphi 0, %s20
    %s24 = sphi 0, %s23
    %s40 = sphi 0, %s24
    %s44 = sphi 0, %s44
    %s46 = sphi 0, %s44
    %s47 = sphi 0, %s46
    %s61 = sphi 0, %s47
    %s65 = sphi 0, %s65
    %s67 = sphi 0, %s65
    %s68 = sphi 0, %s67
    %s82 = sphi 0, %s68
    %s86 = sphi 0, %s86
    %s88 = sphi 0, %s86
    %s89 = sphi 0, %s88
    %s103 = sphi 0, %s89
    %s109 = sphi 0, %s111
    %s112 = sphi 0, %s109
    %s113 = sphi 0, %s112
    %s129 = sphi 0, %s113
  $region4: #{tpu_custom_call.1} parent=0 // loop_header_branch
    %13 = sbr.rel (%p11) target = $region8
  $region5: #{tpu_custom_call.1} parent=0 // loop_body
    %s15 = ssub.s32 %s10, 1
    %s16 = ssub.s32 %s10, 2
    %s17 = sadd.s32 %s10, 1
    %s18 = ssub.s32 %s10, %s17
    %p19 = scmp.eq.s32.totalorder %s18, 0
    %s21 = sadd.s32 %s20, 1
    %s22 = scalar_select %p19, %s20, %s21
    %p25 = pneg %p19
    %p26 = scmp.eq.s32.totalorder %s10, 1
    %p27 = por %p25, %p26
    %p28 = scmp.ne.s32.totalorder %s20, %s23
    %p29 = scmp.eq.s32.totalorder %s10, 0
    %p30 = por %p28, %p29
    %p31 = scmp.ne.s32.totalorder %s20, %s23
    %p32 = scmp.eq.s32.totalorder %s15, 1
    %p33 = por %p31, %p32
    %p34 = scmp.ne.s32.totalorder %s23, %s24
    %p35 = scmp.eq.s32.totalorder %s15, 0
    %p36 = por %p34, %p35
    %p37 = scmp.ne.s32.totalorder %s23, %s24
    %p38 = scmp.eq.s32.totalorder %s16, 1
    %p39 = por %p37, %p38
    %p41 = scmp.ne.s32.totalorder %s24, %s40
    %p42 = scmp.eq.s32.totalorder %s16, 0
    %p43 = por %p41, %p42
    %s45 = sadd.s32 %s44, 1
    %p48 = scmp.eq.s32.totalorder %s10, 1
    %p49 = scmp.ne.s32.totalorder %s44, %s46
    %p50 = scmp.eq.s32.totalorder %s10, 0
    %p51 = por %p49, %p50
    %p52 = scmp.ne.s32.totalorder %s44, %s46
    %p53 = scmp.eq.s32.totalorder %s15, 1
    %p54 = por %p52, %p53
    %p55 = scmp.ne.s32.totalorder %s46, %s47
    %p56 = scmp.eq.s32.totalorder %s15, 0
    %p57 = por %p55, %p56
    %p58 = scmp.ne.s32.totalorder %s46, %s47
    %p59 = scmp.eq.s32.totalorder %s16, 1
    %p60 = por %p58, %p59
    %p62 = scmp.ne.s32.totalorder %s47, %s61
    %p63 = scmp.eq.s32.totalorder %s16, 0
    %p64 = por %p62, %p63
    %s66 = sadd.s32 %s65, 1
    %p69 = scmp.eq.s32.totalorder %s10, 1
    %p70 = scmp.ne.s32.totalorder %s65, %s67
    %p71 = scmp.eq.s32.totalorder %s10, 0
    %p72 = por %p70, %p71
    %p73 = scmp.ne.s32.totalorder %s65, %s67
    %p74 = scmp.eq.s32.totalorder %s15, 1
    %p75 = por %p73, %p74
    %p76 = scmp.ne.s32.totalorder %s67, %s68
    %p77 = scmp.eq.s32.totalorder %s15, 0
    %p78 = por %p76, %p77
    %p79 = scmp.ne.s32.totalorder %s67, %s68
    %p80 = scmp.eq.s32.totalorder %s16, 1
    %p81 = por %p79, %p80
    %p83 = scmp.ne.s32.totalorder %s68, %s82
    %p84 = scmp.eq.s32.totalorder %s16, 0
    %p85 = por %p83, %p84
    %s87 = sadd.s32 %s86, 1
    %p90 = scmp.eq.s32.totalorder %s10, 1
    %p91 = scmp.ne.s32.totalorder %s86, %s88
    %p92 = scmp.eq.s32.totalorder %s10, 0
    %p93 = por %p91, %p92
    %p94 = scmp.ne.s32.totalorder %s86, %s88
    %p95 = scmp.eq.s32.totalorder %s15, 1
    %p96 = por %p94, %p95
    %p97 = scmp.ne.s32.totalorder %s88, %s89
    %p98 = scmp.eq.s32.totalorder %s15, 0
    %p99 = por %p97, %p98
    %p100 = scmp.ne.s32.totalorder %s88, %s89
    %p101 = scmp.eq.s32.totalorder %s16, 1
    %p102 = por %p100, %p101
    %p104 = scmp.ne.s32.totalorder %s89, %s103
    %p105 = scmp.eq.s32.totalorder %s16, 0
    %p106 = por %p104, %p105
    %s107 = ssub.s32 %s10, %s17
    %p108 = scmp.eq.s32.totalorder %s107, 0
    %s110 = sadd.s32 %s109, 1
    %s111 = scalar_select %p108, %s109, %s110
    %p114 = pneg %p108
    %p115 = scmp.eq.s32.totalorder %s10, 1
    %p116 = por %p114, %p115
    %p117 = scmp.ne.s32.totalorder %s109, %s112
    %p118 = scmp.eq.s32.totalorder %s10, 0
    %p119 = por %p117, %p118
    %p120 = scmp.ne.s32.totalorder %s109, %s112
    %p121 = scmp.eq.s32.totalorder %s15, 1
    %p122 = por %p120, %p121
    %p123 = scmp.ne.s32.totalorder %s112, %s113
    %p124 = scmp.eq.s32.totalorder %s15, 0
    %p125 = por %p123, %p124
    %p126 = scmp.ne.s32.totalorder %s112, %s113
    %p127 = scmp.eq.s32.totalorder %s16, 1
    %p128 = por %p126, %p127
    %p130 = scmp.ne.s32.totalorder %s113, %s129
    %p131 = scmp.eq.s32.totalorder %s16, 0
    %p132 = por %p130, %p131
    %p133 = scmp.le.s32.totalorder 1, %s10
    %p134 = scmp.lt.s32.totalorder %s10, 3
    %p135 = pnand %p133, %p134
    %p136 = pneg %p135
    // Predicated region
    $region9: #{tpu_custom_call.1} parent=5 // pred_check
      _
    $region10: #{tpu_custom_call.1} parent=5 // pred_check_branch
      %138 = sbr.rel (%p135) target = $region12
    $region11: #{tpu_custom_call.1} parent=5 // pred_region
      %s139 = ssub.s32 %s10, 1
      // Predicated region
      $region13: #{tpu_custom_call.1} parent=11 // pred_check
        %p140 = pneg %p57
      $region14: #{tpu_custom_call.1} parent=11 // pred_check_branch
        %142 = sbr.rel (%p140) target = $region16
      $region15: #{tpu_custom_call.1} parent=11 // pred_region
        _
      $region16: #{tpu_custom_call.1} parent=11 // pred_fallthru
        _
      // Predicated region
      $region17: #{tpu_custom_call.1} parent=11 // pred_check
        %p143 = pneg %p78
      $region18: #{tpu_custom_call.1} parent=11 // pred_check_branch
        %145 = sbr.rel (%p143) target = $region20
      $region19: #{tpu_custom_call.1} parent=11 // pred_region
        _
      $region20: #{tpu_custom_call.1} parent=11 // pred_fallthru
        _
      // Predicated region
      $region21: #{tpu_custom_call.1} parent=11 // pred_check
        %p146 = pneg %p99
      $region22: #{tpu_custom_call.1} parent=11 // pred_check_branch
        %148 = sbr.rel (%p146) target = $region24
      $region23: #{tpu_custom_call.1} parent=11 // pred_region
        _
      $region24: #{tpu_custom_call.1} parent=11 // pred_fallthru
        _
    $region12: #{tpu_custom_call.1} parent=5 // pred_fallthru
      _
    %p149 = scmp.lt.s32.totalorder %s10, 2
    // Predicated region
    $region25: #{tpu_custom_call.1} parent=5 // pred_check
      %p150 = pneg %p149
    $region26: #{tpu_custom_call.1} parent=5 // pred_check_branch
      %152 = sbr.rel (%p150) target = $region28
    $region27: #{tpu_custom_call.1} parent=5 // pred_region
      // Predicated region
      $region29: #{tpu_custom_call.1} parent=27 // pred_check
        %p153 = pneg %p30
      $region30: #{tpu_custom_call.1} parent=27 // pred_check_branch
        %155 = sbr.rel (%p153) target = $region32
      $region31: #{tpu_custom_call.1} parent=27 // pred_region
        %p156 = scmp.lt.s32.totalorder %s10, 1
        %s157 = scalar_select %p156, %s10, 1
        %s158 = smul.addr %s157, 32
        %s159 = smul.addr %s158, 8
        %s160 = scalar_lea.vmem %s0, %s159
      $region32: #{tpu_custom_call.1} parent=27 // pred_fallthru
        _
    $region28: #{tpu_custom_call.1} parent=5 // pred_fallthru
      _
    %p161 = scmp.le.s32.totalorder 1, %s10
    %p162 = scmp.lt.s32.totalorder %s10, 3
    %p163 = pnand %p161, %p162
    %p164 = pneg %p163
    // Predicated region
    $region33: #{tpu_custom_call.1} parent=5 // pred_check
      _
    $region34: #{tpu_custom_call.1} parent=5 // pred_check_branch
      %166 = sbr.rel (%p163) target = $region36
    $region35: #{tpu_custom_call.1} parent=5 // pred_region
      %s167 = ssub.s32 %s10, 1
      %p168 = scmp.lt.s32.totalorder %s15, 1
      %s169 = scalar_select %p168, %s15, 1
      %s170 = smul.addr %s169, 32
      %s171 = smul.addr %s170, 8
      %s172 = scalar_lea.vmem %s0, %s171
      %p173 = pneg %p36
      %p174 = pneg %p33
      %p175 = pneg %p57
      %p176 = pneg %p54
      %p177 = pneg %p78
      %p178 = pneg %p75
      %p179 = pneg %p99
      %p180 = pneg %p96
      %p181 = pneg %p125
      %p182 = pneg %p122
      %p183 = scmp.lt.s32.totalorder %s15, 1
      %s184 = scalar_select %p183, %s15, 1
      %s185 = smul.addr %s184, 32
      %s186 = smul.addr %s185, 8
      %s187 = scalar_lea.vmem %s4, %s186
      %p188 = scmp.lt.s32.totalorder %s15, 1
      %s189 = scalar_select %p188, %s15, 1
      %s190 = smul.addr %s189, 32
      %s191 = smul.addr %s190, 8
      %s192 = scalar_lea.vmem %s0, %s191
      %p193 = scmp.lt.s32.totalorder %s15, 1
      %s194 = scalar_select %p193, %s15, 1
      %s195 = smul.addr %s194, 32
      %s196 = smul.addr %s195, 8
      %s197 = scalar_lea.vmem %s4, %s196
      %vm198 = vcmask 31744
      %199 = vst.msk [vmem:[#allocation2] sm:$0xff] %vm198, 0.0
      %200 = vst.msk [vmem:[#allocation2 + $0x8] sm:$0xff] %vm198, 0.0
      %vm201 = vcmask 25600
      %202 = vst.msk [vmem:[#allocation2 + $0x10] sm:$0x3] %vm201, 0.0
      %s203 = scalar_lea.vmem [#allocation2], 408
      %204 = vst.msk [vmem:[%s203] sm:$0xff] %vm198, 0.0
      %205 = vst.msk [vmem:[%s203 + $0x8] sm:$0xff] %vm198, 0.0
      %206 = vst.msk [vmem:[%s203 + $0x10] sm:$0x3] %vm201, 0.0
      %vm207 = vcmask 24576
      %208 = vst.msk [vmem:[#allocation2] sm:$0x1] %vm207, 0.0
      %209 = vst.msk [vmem:[#allocation2 + $0x18] sm:$0x1] %vm207, 0.0
      %210 = vst.msk [vmem:[#allocation2 + $0x30] sm:$0x1] %vm207, 0.0
      %211 = vst.msk [vmem:[#allocation2 + $0x48] sm:$0x1] %vm207, 0.0
      %212 = vst.msk [vmem:[#allocation2 + $0x60] sm:$0x1] %vm207, 0.0
      %213 = vst.msk [vmem:[#allocation2 + $0x78] sm:$0x1] %vm207, 0.0
      %214 = vst.msk [vmem:[#allocation2 + $0x90] sm:$0x1] %vm207, 0.0
      %215 = vst.msk [vmem:[#allocation2 + $0xa8] sm:$0x1] %vm207, 0.0
      %216 = vst.msk [vmem:[#allocation2 + $0xc0] sm:$0x1] %vm207, 0.0
      %217 = vst.msk [vmem:[#allocation2 + $0xd8] sm:$0x1] %vm207, 0.0
      %218 = vst.msk [vmem:[#allocation2 + $0xf0] sm:$0x1] %vm207, 0.0
      %219 = vst.msk [vmem:[#allocation2 + $0x108] sm:$0x1] %vm207, 0.0
      %220 = vst.msk [vmem:[#allocation2 + $0x120] sm:$0x1] %vm207, 0.0
      %221 = vst.msk [vmem:[#allocation2 + $0x138] sm:$0x1] %vm207, 0.0
      %222 = vst.msk [vmem:[#allocation2 + $0x150] sm:$0x1] %vm207, 0.0
      %223 = vst.msk [vmem:[#allocation2 + $0x168] sm:$0x1] %vm207, 0.0
      %224 = vst.msk [vmem:[#allocation2 + $0x180] sm:$0x1] %vm207, 0.0
      %225 = vst.msk [vmem:[#allocation2 + $0x198] sm:$0x1] %vm207, 0.0
      %226 = vst.msk [vmem:[#allocation2 + $0x11] sm:$0x1] %vm207, 0.0
      %227 = vst.msk [vmem:[#allocation2 + $0x29] sm:$0x1] %vm207, 0.0
      %228 = vst.msk [vmem:[#allocation2 + $0x41] sm:$0x1] %vm207, 0.0
      %229 = vst.msk [vmem:[#allocation2 + $0x59] sm:$0x1] %vm207, 0.0
      %230 = vst.msk [vmem:[#allocation2 + $0x71] sm:$0x1] %vm207, 0.0
      %231 = vst.msk [vmem:[#allocation2 + $0x89] sm:$0x1] %vm207, 0.0
      %232 = vst.msk [vmem:[#allocation2 + $0xa1] sm:$0x1] %vm207, 0.0
      %233 = vst.msk [vmem:[#allocation2 + $0xb9] sm:$0x1] %vm207, 0.0
      %234 = vst.msk [vmem:[#allocation2 + $0xd1] sm:$0x1] %vm207, 0.0
      %235 = vst.msk [vmem:[#allocation2 + $0xe9] sm:$0x1] %vm207, 0.0
      %236 = vst.msk [vmem:[#allocation2 + $0x101] sm:$0x1] %vm207, 0.0
      %237 = vst.msk [vmem:[#allocation2 + $0x119] sm:$0x1] %vm207, 0.0
      %238 = vst.msk [vmem:[#allocation2 + $0x131] sm:$0x1] %vm207, 0.0
      %239 = vst.msk [vmem:[#allocation2 + $0x149] sm:$0x1] %vm207, 0.0
      %240 = vst.msk [vmem:[#allocation2 + $0x161] sm:$0x1] %vm207, 0.0
      %241 = vst.msk [vmem:[#allocation2 + $0x179] sm:$0x1] %vm207, 0.0
      %242 = vst.msk [vmem:[#allocation2 + $0x191] sm:$0x1] %vm207, 0.0
      %243 = vst.msk [vmem:[#allocation2 + $0x1a9] sm:$0x1] %vm207, 0.0
      %v244 = vld [vmem:[%s192] sm:$0xff]
      %v245 = vld [vmem:[%s192 + $0x8] sm:$0xff]
      %v246 = vld [vmem:[%s192 + $0x10] sm:$0xff]
      %v247 = vld [vmem:[%s192 + $0x18] sm:$0xff]
      %v248 = vld [vmem:[%s192 + $0x20] sm:$0xff]
      %v249 = vld [vmem:[%s192 + $0x28] sm:$0xff]
      %v250 = vld [vmem:[%s192 + $0x30] sm:$0xff]
      %v251 = vld [vmem:[%s192 + $0x38] sm:$0xff]
      %v252 = vld [vmem:[%s192 + $0x40] sm:$0xff]
      %v253 = vld [vmem:[%s192 + $0x48] sm:$0xff]
      %v254 = vld [vmem:[%s192 + $0x50] sm:$0xff]
      %v255 = vld [vmem:[%s192 + $0x58] sm:$0xff]
      %v256 = vld [vmem:[%s192 + $0x60] sm:$0xff]
      %v257 = vld [vmem:[%s192 + $0x68] sm:$0xff]
      %v258 = vld [vmem:[%s192 + $0x70] sm:$0xff]
      %v259 = vld [vmem:[%s192 + $0x78] sm:$0xff]
      %v260 = vld [vmem:[%s192 + $0x80] sm:$0xff]
      %v261 = vld [vmem:[%s192 + $0x88] sm:$0xff]
      %v262 = vld [vmem:[%s192 + $0x90] sm:$0xff]
      %v263 = vld [vmem:[%s192 + $0x98] sm:$0xff]
      %v264 = vld [vmem:[%s192 + $0xa0] sm:$0xff]
      %v265 = vld [vmem:[%s192 + $0xa8] sm:$0xff]
      %v266 = vld [vmem:[%s192 + $0xb0] sm:$0xff]
      %v267 = vld [vmem:[%s192 + $0xb8] sm:$0xff]
      %v268 = vld [vmem:[%s192 + $0xc0] sm:$0xff]
      %v269 = vld [vmem:[%s192 + $0xc8] sm:$0xff]
      %v270 = vld [vmem:[%s192 + $0xd0] sm:$0xff]
      %v271 = vld [vmem:[%s192 + $0xd8] sm:$0xff]
      %v272 = vld [vmem:[%s192 + $0xe0] sm:$0xff]
      %v273 = vld [vmem:[%s192 + $0xe8] sm:$0xff]
      %v274 = vld [vmem:[%s192 + $0xf0] sm:$0xff]
      %v275 = vld [vmem:[%s192 + $0xf8] sm:$0xff]
      %s276 = scalar_lea.vmem [#allocation2], 24
      %277 = vst.msk [vmem:[%s276 + $0x1] sm:$0xff] %vm198, %v244
      %278 = vst.msk [vmem:[%s276 + $0x9] sm:$0xff] %vm198, %v245
      %279 = vst.msk [vmem:[%s276 + $0x19] sm:$0xff] %vm198, %v246
      %280 = vst.msk [vmem:[%s276 + $0x21] sm:$0xff] %vm198, %v247
      %281 = vst.msk [vmem:[%s276 + $0x31] sm:$0xff] %vm198, %v248
      %282 = vst.msk [vmem:[%s276 + $0x39] sm:$0xff] %vm198, %v249
      %283 = vst.msk [vmem:[%s276 + $0x49] sm:$0xff] %vm198, %v250
      %284 = vst.msk [vmem:[%s276 + $0x51] sm:$0xff] %vm198, %v251
      %285 = vst.msk [vmem:[%s276 + $0x61] sm:$0xff] %vm198, %v252
      %286 = vst.msk [vmem:[%s276 + $0x69] sm:$0xff] %vm198, %v253
      %287 = vst.msk [vmem:[%s276 + $0x79] sm:$0xff] %vm198, %v254
      %288 = vst.msk [vmem:[%s276 + $0x81] sm:$0xff] %vm198, %v255
      %289 = vst.msk [vmem:[%s276 + $0x91] sm:$0xff] %vm198, %v256
      %290 = vst.msk [vmem:[%s276 + $0x99] sm:$0xff] %vm198, %v257
      %291 = vst.msk [vmem:[%s276 + $0xa9] sm:$0xff] %vm198, %v258
      %292 = vst.msk [vmem:[%s276 + $0xb1] sm:$0xff] %vm198, %v259
      %293 = vst.msk [vmem:[%s276 + $0xc1] sm:$0xff] %vm198, %v260
      %294 = vst.msk [vmem:[%s276 + $0xc9] sm:$0xff] %vm198, %v261
      %295 = vst.msk [vmem:[%s276 + $0xd9] sm:$0xff] %vm198, %v262
      %296 = vst.msk [vmem:[%s276 + $0xe1] sm:$0xff] %vm198, %v263
      %297 = vst.msk [vmem:[%s276 + $0xf1] sm:$0xff] %vm198, %v264
      %298 = vst.msk [vmem:[%s276 + $0xf9] sm:$0xff] %vm198, %v265
      %299 = vst.msk [vmem:[%s276 + $0x109] sm:$0xff] %vm198, %v266
      %300 = vst.msk [vmem:[%s276 + $0x111] sm:$0xff] %vm198, %v267
      %301 = vst.msk [vmem:[%s276 + $0x121] sm:$0xff] %vm198, %v268
      %302 = vst.msk [vmem:[%s276 + $0x129] sm:$0xff] %vm198, %v269
      %303 = vst.msk [vmem:[%s276 + $0x139] sm:$0xff] %vm198, %v270
      %304 = vst.msk [vmem:[%s276 + $0x141] sm:$0xff] %vm198, %v271
      %305 = vst.msk [vmem:[%s276 + $0x151] sm:$0xff] %vm198, %v272
      %306 = vst.msk [vmem:[%s276 + $0x159] sm:$0xff] %vm198, %v273
      %307 = vst.msk [vmem:[%s276 + $0x169] sm:$0xff] %vm198, %v274
      %308 = vst.msk [vmem:[%s276 + $0x171] sm:$0xff] %vm198, %v275
      %v309 = vld [vmem:[#allocation2] sm:$0xff]
      %v310 = vld [vmem:[#allocation2 + $0x8] sm:$0xff]
      %v311 = vld [vmem:[#allocation2 + $0x18] sm:$0xff]
      %v312 = vld [vmem:[#allocation2 + $0x20] sm:$0xff]
      %v313 = vld [vmem:[#allocation2 + $0x30] sm:$0xff]
      %v314 = vld [vmem:[#allocation2 + $0x38] sm:$0xff]
      %v315 = vld [vmem:[#allocation2 + $0x48] sm:$0xff]
      %v316 = vld [vmem:[#allocation2 + $0x50] sm:$0xff]
      %v317 = vld [vmem:[#allocation2 + $0x60] sm:$0xff]
      %v318 = vld [vmem:[#allocation2 + $0x68] sm:$0xff]
      %v319 = vld [vmem:[#allocation2 + $0x78] sm:$0xff]
      %v320 = vld [vmem:[#allocation2 + $0x80] sm:$0xff]
      %v321 = vld [vmem:[#allocation2 + $0x90] sm:$0xff]
      %v322 = vld [vmem:[#allocation2 + $0x98] sm:$0xff]
      %v323 = vld [vmem:[#allocation2 + $0xa8] sm:$0xff]
      %v324 = vld [vmem:[#allocation2 + $0xb0] sm:$0xff]
      %v325 = vld [vmem:[#allocation2 + $0xc0] sm:$0xff]
      %v326 = vld [vmem:[#allocation2 + $0xc8] sm:$0xff]
      %v327 = vld [vmem:[#allocation2 + $0xd8] sm:$0xff]
      %v328 = vld [vmem:[#allocation2 + $0xe0] sm:$0xff]
      %v329 = vld [vmem:[#allocation2 + $0xf0] sm:$0xff]
      %v330 = vld [vmem:[#allocation2 + $0xf8] sm:$0xff]
      %v331 = vld [vmem:[#allocation2 + $0x108] sm:$0xff]
      %v332 = vld [vmem:[#allocation2 + $0x110] sm:$0xff]
      %v333 = vld [vmem:[#allocation2 + $0x120] sm:$0xff]
      %v334 = vld [vmem:[#allocation2 + $0x128] sm:$0xff]
      %v335 = vld [vmem:[#allocation2 + $0x138] sm:$0xff]
      %v336 = vld [vmem:[#allocation2 + $0x140] sm:$0xff]
      %v337 = vld [vmem:[#allocation2 + $0x150] sm:$0xff]
      %v338 = vld [vmem:[#allocation2 + $0x158] sm:$0xff]
      %v339 = vld [vmem:[#allocation2 + $0x168] sm:$0xff]
      %v340 = vld [vmem:[#allocation2 + $0x170] sm:$0xff]
      %341 = vst.msk [vmem:[#allocation3] sm:$0xff] %vm198, %v309
      %342 = vst.msk [vmem:[#allocation3 + $0x8] sm:$0xff] %vm198, %v310
      %343 = vst.msk [vmem:[#allocation3 + $0x10] sm:$0xff] %vm198, %v311
      %344 = vst.msk [vmem:[#allocation3 + $0x18] sm:$0xff] %vm198, %v312
      %345 = vst.msk [vmem:[#allocation3 + $0x20] sm:$0xff] %vm198, %v313
      %346 = vst.msk [vmem:[#allocation3 + $0x28] sm:$0xff] %vm198, %v314
      %347 = vst.msk [vmem:[#allocation3 + $0x30] sm:$0xff] %vm198, %v315
      %348 = vst.msk [vmem:[#allocation3 + $0x38] sm:$0xff] %vm198, %v316
      %349 = vst.msk [vmem:[#allocation3 + $0x40] sm:$0xff] %vm198, %v317
      %350 = vst.msk [vmem:[#allocation3 + $0x48] sm:$0xff] %vm198, %v318
      %351 = vst.msk [vmem:[#allocation3 + $0x50] sm:$0xff] %vm198, %v319
      %352 = vst.msk [vmem:[#allocation3 + $0x58] sm:$0xff] %vm198, %v320
      %353 = vst.msk [vmem:[#allocation3 + $0x60] sm:$0xff] %vm198, %v321
      %354 = vst.msk [vmem:[#allocation3 + $0x68] sm:$0xff] %vm198, %v322
      %355 = vst.msk [vmem:[#allocation3 + $0x70] sm:$0xff] %vm198, %v323
      %356 = vst.msk [vmem:[#allocation3 + $0x78] sm:$0xff] %vm198, %v324
      %357 = vst.msk [vmem:[#allocation3 + $0x80] sm:$0xff] %vm198, %v325
      %358 = vst.msk [vmem:[#allocation3 + $0x88] sm:$0xff] %vm198, %v326
      %359 = vst.msk [vmem:[#allocation3 + $0x90] sm:$0xff] %vm198, %v327
      %360 = vst.msk [vmem:[#allocation3 + $0x98] sm:$0xff] %vm198, %v328
      %361 = vst.msk [vmem:[#allocation3 + $0xa0] sm:$0xff] %vm198, %v329
      %362 = vst.msk [vmem:[#allocation3 + $0xa8] sm:$0xff] %vm198, %v330
      %363 = vst.msk [vmem:[#allocation3 + $0xb0] sm:$0xff] %vm198, %v331
      %364 = vst.msk [vmem:[#allocation3 + $0xb8] sm:$0xff] %vm198, %v332
      %365 = vst.msk [vmem:[#allocation3 + $0xc0] sm:$0xff] %vm198, %v333
      %366 = vst.msk [vmem:[#allocation3 + $0xc8] sm:$0xff] %vm198, %v334
      %367 = vst.msk [vmem:[#allocation3 + $0xd0] sm:$0xff] %vm198, %v335
      %368 = vst.msk [vmem:[#allocation3 + $0xd8] sm:$0xff] %vm198, %v336
      %369 = vst.msk [vmem:[#allocation3 + $0xe0] sm:$0xff] %vm198, %v337
      %370 = vst.msk [vmem:[#allocation3 + $0xe8] sm:$0xff] %vm198, %v338
      %371 = vst.msk [vmem:[#allocation3 + $0xf0] sm:$0xff] %vm198, %v339
      %372 = vst.msk [vmem:[#allocation3 + $0xf8] sm:$0xff] %vm198, %v340
      %v373 = vld [vmem:[#allocation2 + $0x1] sm:$0xff]
      %v374 = vld [vmem:[#allocation2 + $0x9] sm:$0xff]
      %v375 = vld [vmem:[#allocation2 + $0x19] sm:$0xff]
      %v376 = vld [vmem:[#allocation2 + $0x21] sm:$0xff]
      %v377 = vld [vmem:[#allocation2 + $0x31] sm:$0xff]
      %v378 = vld [vmem:[#allocation2 + $0x39] sm:$0xff]
      %v379 = vld [vmem:[#allocation2 + $0x49] sm:$0xff]
      %v380 = vld [vmem:[#allocation2 + $0x51] sm:$0xff]
      %v381 = vld [vmem:[#allocation2 + $0x61] sm:$0xff]
      %v382 = vld [vmem:[#allocation2 + $0x69] sm:$0xff]
      %v383 = vld [vmem:[#allocation2 + $0x79] sm:$0xff]
      %v384 = vld [vmem:[#allocation2 + $0x81] sm:$0xff]
      %v385 = vld [vmem:[#allocation2 + $0x91] sm:$0xff]
      %v386 = vld [vmem:[#allocation2 + $0x99] sm:$0xff]
      %v387 = vld [vmem:[#allocation2 + $0xa9] sm:$0xff]
      %v388 = vld [vmem:[#allocation2 + $0xb1] sm:$0xff]
      %v389 = vld [vmem:[#allocation2 + $0xc1] sm:$0xff]
      %v390 = vld [vmem:[#allocation2 + $0xc9] sm:$0xff]
      %v391 = vld [vmem:[#allocation2 + $0xd9] sm:$0xff]
      %v392 = vld [vmem:[#allocation2 + $0xe1] sm:$0xff]
      %v393 = vld [vmem:[#allocation2 + $0xf1] sm:$0xff]
      %v394 = vld [vmem:[#allocation2 + $0xf9] sm:$0xff]
      %v395 = vld [vmem:[#allocation2 + $0x109] sm:$0xff]
      %v396 = vld [vmem:[#allocation2 + $0x111] sm:$0xff]
      %v397 = vld [vmem:[#allocation2 + $0x121] sm:$0xff]
      %v398 = vld [vmem:[#allocation2 + $0x129] sm:$0xff]
      %v399 = vld [vmem:[#allocation2 + $0x139] sm:$0xff]
      %v400 = vld [vmem:[#allocation2 + $0x141] sm:$0xff]
      %v401 = vld [vmem:[#allocation2 + $0x151] sm:$0xff]
      %v402 = vld [vmem:[#allocation2 + $0x159] sm:$0xff]
      %v403 = vld [vmem:[#allocation2 + $0x169] sm:$0xff]
      %v404 = vld [vmem:[#allocation2 + $0x171] sm:$0xff]
      %437 = vrot.lane.b32.xlu0 %v373, 4
      %v438 = vpop.permute.xlu0 %437
      %439 = vrot.lane.b32.xlu0 %v374, 4
      %v440 = vpop.permute.xlu0 %439
      %441 = vrot.lane.b32.xlu0 %v375, 4
      %v442 = vpop.permute.xlu0 %441
      %443 = vrot.lane.b32.xlu0 %v376, 4
      %v444 = vpop.permute.xlu0 %443
      %445 = vrot.lane.b32.xlu0 %v377, 4
      %v446 = vpop.permute.xlu0 %445
      %447 = vrot.lane.b32.xlu0 %v378, 4
      %v448 = vpop.permute.xlu0 %447
      %449 = vrot.lane.b32.xlu0 %v379, 4
      %v450 = vpop.permute.xlu0 %449
      %451 = vrot.lane.b32.xlu0 %v380, 4
      %v452 = vpop.permute.xlu0 %451
      %453 = vrot.lane.b32.xlu0 %v381, 4
      %v454 = vpop.permute.xlu0 %453
      %455 = vrot.lane.b32.xlu0 %v382, 4
      %v456 = vpop.permute.xlu0 %455
      %457 = vrot.lane.b32.xlu0 %v383, 4
      %v458 = vpop.permute.xlu0 %457
      %459 = vrot.lane.b32.xlu0 %v384, 4
      %v460 = vpop.permute.xlu0 %459
      %461 = vrot.lane.b32.xlu0 %v385, 4
      %v462 = vpop.permute.xlu0 %461
      %463 = vrot.lane.b32.xlu0 %v386, 4
      %v464 = vpop.permute.xlu0 %463
      %465 = vrot.lane.b32.xlu0 %v387, 4
      %v466 = vpop.permute.xlu0 %465
      %467 = vrot.lane.b32.xlu0 %v388, 4
      %v468 = vpop.permute.xlu0 %467
      %469 = vrot.lane.b32.xlu0 %v389, 4
      %v470 = vpop.permute.xlu0 %469
      %471 = vrot.lane.b32.xlu0 %v390, 4
      %v472 = vpop.permute.xlu0 %471
      %473 = vrot.lane.b32.xlu0 %v391, 4
      %v474 = vpop.permute.xlu0 %473
      %475 = vrot.lane.b32.xlu0 %v392, 4
      %v476 = vpop.permute.xlu0 %475
      %477 = vrot.lane.b32.xlu0 %v393, 4
      %v478 = vpop.permute.xlu0 %477
      %479 = vrot.lane.b32.xlu0 %v394, 4
      %v480 = vpop.permute.xlu0 %479
      %481 = vrot.lane.b32.xlu0 %v395, 4
      %v482 = vpop.permute.xlu0 %481
      %483 = vrot.lane.b32.xlu0 %v396, 4
      %v484 = vpop.permute.xlu0 %483
      %485 = vrot.lane.b32.xlu0 %v397, 4
      %v486 = vpop.permute.xlu0 %485
      %487 = vrot.lane.b32.xlu0 %v398, 4
      %v488 = vpop.permute.xlu0 %487
      %489 = vrot.lane.b32.xlu0 %v399, 4
      %v490 = vpop.permute.xlu0 %489
      %491 = vrot.lane.b32.xlu0 %v400, 4
      %v492 = vpop.permute.xlu0 %491
      %493 = vrot.lane.b32.xlu0 %v401, 4
      %v494 = vpop.permute.xlu0 %493
      %495 = vrot.lane.b32.xlu0 %v402, 4
      %v496 = vpop.permute.xlu0 %495
      %497 = vrot.lane.b32.xlu0 %v403, 4
      %v498 = vpop.permute.xlu0 %497
      %499 = vrot.lane.b32.xlu0 %v404, 4
      %v500 = vpop.permute.xlu0 %499
      %vm533 = vcmask 64544
      %534 = vst.msk [vmem:[#allocation3] sm:$0xff] %vm533, %v438
      %535 = vst.msk [vmem:[#allocation3 + $0x8] sm:$0xff] %vm533, %v440
      %536 = vst.msk [vmem:[#allocation3 + $0x10] sm:$0xff] %vm533, %v442
      %537 = vst.msk [vmem:[#allocation3 + $0x18] sm:$0xff] %vm533, %v444
      %538 = vst.msk [vmem:[#allocation3 + $0x20] sm:$0xff] %vm533, %v446
      %539 = vst.msk [vmem:[#allocation3 + $0x28] sm:$0xff] %vm533, %v448
      %540 = vst.msk [vmem:[#allocation3 + $0x30] sm:$0xff] %vm533, %v450
      %541 = vst.msk [vmem:[#allocation3 + $0x38] sm:$0xff] %vm533, %v452
      %542 = vst.msk [vmem:[#allocation3 + $0x40] sm:$0xff] %vm533, %v454
      %543 = vst.msk [vmem:[#allocation3 + $0x48] sm:$0xff] %vm533, %v456
      %544 = vst.msk [vmem:[#allocation3 + $0x50] sm:$0xff] %vm533, %v458
      %545 = vst.msk [vmem:[#allocation3 + $0x58] sm:$0xff] %vm533, %v460
      %546 = vst.msk [vmem:[#allocation3 + $0x60] sm:$0xff] %vm533, %v462
      %547 = vst.msk [vmem:[#allocation3 + $0x68] sm:$0xff] %vm533, %v464
      %548 = vst.msk [vmem:[#allocation3 + $0x70] sm:$0xff] %vm533, %v466
      %549 = vst.msk [vmem:[#allocation3 + $0x78] sm:$0xff] %vm533, %v468
      %550 = vst.msk [vmem:[#allocation3 + $0x80] sm:$0xff] %vm533, %v470
      %551 = vst.msk [vmem:[#allocation3 + $0x88] sm:$0xff] %vm533, %v472
      %552 = vst.msk [vmem:[#allocation3 + $0x90] sm:$0xff] %vm533, %v474
      %553 = vst.msk [vmem:[#allocation3 + $0x98] sm:$0xff] %vm533, %v476
      %554 = vst.msk [vmem:[#allocation3 + $0xa0] sm:$0xff] %vm533, %v478
      %555 = vst.msk [vmem:[#allocation3 + $0xa8] sm:$0xff] %vm533, %v480
      %556 = vst.msk [vmem:[#allocation3 + $0xb0] sm:$0xff] %vm533, %v482
      %557 = vst.msk [vmem:[#allocation3 + $0xb8] sm:$0xff] %vm533, %v484
      %558 = vst.msk [vmem:[#allocation3 + $0xc0] sm:$0xff] %vm533, %v486
      %559 = vst.msk [vmem:[#allocation3 + $0xc8] sm:$0xff] %vm533, %v488
      %560 = vst.msk [vmem:[#allocation3 + $0xd0] sm:$0xff] %vm533, %v490
      %561 = vst.msk [vmem:[#allocation3 + $0xd8] sm:$0xff] %vm533, %v492
      %562 = vst.msk [vmem:[#allocation3 + $0xe0] sm:$0xff] %vm533, %v494
      %563 = vst.msk [vmem:[#allocation3 + $0xe8] sm:$0xff] %vm533, %v496
      %564 = vst.msk [vmem:[#allocation3 + $0xf0] sm:$0xff] %vm533, %v498
      %565 = vst.msk [vmem:[#allocation3 + $0xf8] sm:$0xff] %vm533, %v500
      %v566 = vld [vmem:[#allocation2 + $0x2] sm:$0xff]
      %v567 = vld [vmem:[#allocation2 + $0xa] sm:$0xff]
      %v568 = vld [vmem:[#allocation2 + $0x1a] sm:$0xff]
      %v569 = vld [vmem:[#allocation2 + $0x22] sm:$0xff]
      %v570 = vld [vmem:[#allocation2 + $0x32] sm:$0xff]
      %v571 = vld [vmem:[#allocation2 + $0x3a] sm:$0xff]
      %v572 = vld [vmem:[#allocation2 + $0x4a] sm:$0xff]
      %v573 = vld [vmem:[#allocation2 + $0x52] sm:$0xff]
      %v574 = vld [vmem:[#allocation2 + $0x62] sm:$0xff]
      %v575 = vld [vmem:[#allocation2 + $0x6a] sm:$0xff]
      %v576 = vld [vmem:[#allocation2 + $0x7a] sm:$0xff]
      %v577 = vld [vmem:[#allocation2 + $0x82] sm:$0xff]
      %v578 = vld [vmem:[#allocation2 + $0x92] sm:$0xff]
      %v579 = vld [vmem:[#allocation2 + $0x9a] sm:$0xff]
      %v580 = vld [vmem:[#allocation2 + $0xaa] sm:$0xff]
      %v581 = vld [vmem:[#allocation2 + $0xb2] sm:$0xff]
      %v582 = vld [vmem:[#allocation2 + $0xc2] sm:$0xff]
      %v583 = vld [vmem:[#allocation2 + $0xca] sm:$0xff]
      %v584 = vld [vmem:[#allocation2 + $0xda] sm:$0xff]
      %v585 = vld [vmem:[#allocation2 + $0xe2] sm:$0xff]
      %v586 = vld [vmem:[#allocation2 + $0xf2] sm:$0xff]
      %v587 = vld [vmem:[#allocation2 + $0xfa] sm:$0xff]
      %v588 = vld [vmem:[#allocation2 + $0x10a] sm:$0xff]
      %v589 = vld [vmem:[#allocation2 + $0x112] sm:$0xff]
      %v590 = vld [vmem:[#allocation2 + $0x122] sm:$0xff]
      %v591 = vld [vmem:[#allocation2 + $0x12a] sm:$0xff]
      %v592 = vld [vmem:[#allocation2 + $0x13a] sm:$0xff]
      %v593 = vld [vmem:[#allocation2 + $0x142] sm:$0xff]
      %v594 = vld [vmem:[#allocation2 + $0x152] sm:$0xff]
      %v595 = vld [vmem:[#allocation2 + $0x15a] sm:$0xff]
      %v596 = vld [vmem:[#allocation2 + $0x16a] sm:$0xff]
      %v597 = vld [vmem:[#allocation2 + $0x172] sm:$0xff]
      %630 = vrot.lane.b32.xlu0 %v566, 8
      %v631 = vpop.permute.xlu0 %630
      %632 = vrot.lane.b32.xlu0 %v567, 8
      %v633 = vpop.permute.xlu0 %632
      %634 = vrot.lane.b32.xlu0 %v568, 8
      %v635 = vpop.permute.xlu0 %634
      %636 = vrot.lane.b32.xlu0 %v569, 8
      %v637 = vpop.permute.xlu0 %636
      %638 = vrot.lane.b32.xlu0 %v570, 8
      %v639 = vpop.permute.xlu0 %638
      %640 = vrot.lane.b32.xlu0 %v571, 8
      %v641 = vpop.permute.xlu0 %640
      %642 = vrot.lane.b32.xlu0 %v572, 8
      %v643 = vpop.permute.xlu0 %642
      %644 = vrot.lane.b32.xlu0 %v573, 8
      %v645 = vpop.permute.xlu0 %644
      %646 = vrot.lane.b32.xlu0 %v574, 8
      %v647 = vpop.permute.xlu0 %646
      %648 = vrot.lane.b32.xlu0 %v575, 8
      %v649 = vpop.permute.xlu0 %648
      %650 = vrot.lane.b32.xlu0 %v576, 8
      %v651 = vpop.permute.xlu0 %650
      %652 = vrot.lane.b32.xlu0 %v577, 8
      %v653 = vpop.permute.xlu0 %652
      %654 = vrot.lane.b32.xlu0 %v578, 8
      %v655 = vpop.permute.xlu0 %654
      %656 = vrot.lane.b32.xlu0 %v579, 8
      %v657 = vpop.permute.xlu0 %656
      %658 = vrot.lane.b32.xlu0 %v580, 8
      %v659 = vpop.permute.xlu0 %658
      %660 = vrot.lane.b32.xlu0 %v581, 8
      %v661 = vpop.permute.xlu0 %660
      %662 = vrot.lane.b32.xlu0 %v582, 8
      %v663 = vpop.permute.xlu0 %662
      %664 = vrot.lane.b32.xlu0 %v583, 8
      %v665 = vpop.permute.xlu0 %664
      %666 = vrot.lane.b32.xlu0 %v584, 8
      %v667 = vpop.permute.xlu0 %666
      %668 = vrot.lane.b32.xlu0 %v585, 8
      %v669 = vpop.permute.xlu0 %668
      %670 = vrot.lane.b32.xlu0 %v586, 8
      %v671 = vpop.permute.xlu0 %670
      %672 = vrot.lane.b32.xlu0 %v587, 8
      %v673 = vpop.permute.xlu0 %672
      %674 = vrot.lane.b32.xlu0 %v588, 8
      %v675 = vpop.permute.xlu0 %674
      %676 = vrot.lane.b32.xlu0 %v589, 8
      %v677 = vpop.permute.xlu0 %676
      %678 = vrot.lane.b32.xlu0 %v590, 8
      %v679 = vpop.permute.xlu0 %678
      %680 = vrot.lane.b32.xlu0 %v591, 8
      %v681 = vpop.permute.xlu0 %680
      %682 = vrot.lane.b32.xlu0 %v592, 8
      %v683 = vpop.permute.xlu0 %682
      %684 = vrot.lane.b32.xlu0 %v593, 8
      %v685 = vpop.permute.xlu0 %684
      %686 = vrot.lane.b32.xlu0 %v594, 8
      %v687 = vpop.permute.xlu0 %686
      %688 = vrot.lane.b32.xlu0 %v595, 8
      %v689 = vpop.permute.xlu0 %688
      %690 = vrot.lane.b32.xlu0 %v596, 8
      %v691 = vpop.permute.xlu0 %690
      %692 = vrot.lane.b32.xlu0 %v597, 8
      %v693 = vpop.permute.xlu0 %692
      %vm726 = vcmask 97344
      %727 = vst.msk [vmem:[#allocation3] sm:$0xff] %vm726, %v631
      %728 = vst.msk [vmem:[#allocation3 + $0x8] sm:$0xff] %vm726, %v633
      %729 = vst.msk [vmem:[#allocation3 + $0x10] sm:$0xff] %vm726, %v635
      %730 = vst.msk [vmem:[#allocation3 + $0x18] sm:$0xff] %vm726, %v637
      %731 = vst.msk [vmem:[#allocation3 + $0x20] sm:$0xff] %vm726, %v639
      %732 = vst.msk [vmem:[#allocation3 + $0x28] sm:$0xff] %vm726, %v641
      %733 = vst.msk [vmem:[#allocation3 + $0x30] sm:$0xff] %vm726, %v643
      %734 = vst.msk [vmem:[#allocation3 + $0x38] sm:$0xff] %vm726, %v645
      %735 = vst.msk [vmem:[#allocation3 + $0x40] sm:$0xff] %vm726, %v647
      %736 = vst.msk [vmem:[#allocation3 + $0x48] sm:$0xff] %vm726, %v649
      %737 = vst.msk [vmem:[#allocation3 + $0x50] sm:$0xff] %vm726, %v651
      %738 = vst.msk [vmem:[#allocation3 + $0x58] sm:$0xff] %vm726, %v653
      %739 = vst.msk [vmem:[#allocation3 + $0x60] sm:$0xff] %vm726, %v655
      %740 = vst.msk [vmem:[#allocation3 + $0x68] sm:$0xff] %vm726, %v657
      %741 = vst.msk [vmem:[#allocation3 + $0x70] sm:$0xff] %vm726, %v659
      %742 = vst.msk [vmem:[#allocation3 + $0x78] sm:$0xff] %vm726, %v661
      %743 = vst.msk [vmem:[#allocation3 + $0x80] sm:$0xff] %vm726, %v663
      %744 = vst.msk [vmem:[#allocation3 + $0x88] sm:$0xff] %vm726, %v665
      %745 = vst.msk [vmem:[#allocation3 + $0x90] sm:$0xff] %vm726, %v667
      %746 = vst.msk [vmem:[#allocation3 + $0x98] sm:$0xff] %vm726, %v669
      %747 = vst.msk [vmem:[#allocation3 + $0xa0] sm:$0xff] %vm726, %v671
      %748 = vst.msk [vmem:[#allocation3 + $0xa8] sm:$0xff] %vm726, %v673
      %749 = vst.msk [vmem:[#allocation3 + $0xb0] sm:$0xff] %vm726, %v675
      %750 = vst.msk [vmem:[#allocation3 + $0xb8] sm:$0xff] %vm726, %v677
      %751 = vst.msk [vmem:[#allocation3 + $0xc0] sm:$0xff] %vm726, %v679
      %752 = vst.msk [vmem:[#allocation3 + $0xc8] sm:$0xff] %vm726, %v681
      %753 = vst.msk [vmem:[#allocation3 + $0xd0] sm:$0xff] %vm726, %v683
      %754 = vst.msk [vmem:[#allocation3 + $0xd8] sm:$0xff] %vm726, %v685
      %755 = vst.msk [vmem:[#allocation3 + $0xe0] sm:$0xff] %vm726, %v687
      %756 = vst.msk [vmem:[#allocation3 + $0xe8] sm:$0xff] %vm726, %v689
      %757 = vst.msk [vmem:[#allocation3 + $0xf0] sm:$0xff] %vm726, %v691
      %758 = vst.msk [vmem:[#allocation3 + $0xf8] sm:$0xff] %vm726, %v693
      %v759 = vld [vmem:[%s276] sm:$0xff]
      %v760 = vld [vmem:[%s276 + $0x8] sm:$0xff]
      %v761 = vld [vmem:[%s276 + $0x18] sm:$0xff]
      %v762 = vld [vmem:[%s276 + $0x20] sm:$0xff]
      %v763 = vld [vmem:[%s276 + $0x30] sm:$0xff]
      %v764 = vld [vmem:[%s276 + $0x38] sm:$0xff]
      %v765 = vld [vmem:[%s276 + $0x48] sm:$0xff]
      %v766 = vld [vmem:[%s276 + $0x50] sm:$0xff]
      %v767 = vld [vmem:[%s276 + $0x60] sm:$0xff]
      %v768 = vld [vmem:[%s276 + $0x68] sm:$0xff]
      %v769 = vld [vmem:[%s276 + $0x78] sm:$0xff]
      %v770 = vld [vmem:[%s276 + $0x80] sm:$0xff]
      %v771 = vld [vmem:[%s276 + $0x90] sm:$0xff]
      %v772 = vld [vmem:[%s276 + $0x98] sm:$0xff]
      %v773 = vld [vmem:[%s276 + $0xa8] sm:$0xff]
      %v774 = vld [vmem:[%s276 + $0xb0] sm:$0xff]
      %v775 = vld [vmem:[%s276 + $0xc0] sm:$0xff]
      %v776 = vld [vmem:[%s276 + $0xc8] sm:$0xff]
      %v777 = vld [vmem:[%s276 + $0xd8] sm:$0xff]
      %v778 = vld [vmem:[%s276 + $0xe0] sm:$0xff]
      %v779 = vld [vmem:[%s276 + $0xf0] sm:$0xff]
      %v780 = vld [vmem:[%s276 + $0xf8] sm:$0xff]
      %v781 = vld [vmem:[%s276 + $0x108] sm:$0xff]
      %v782 = vld [vmem:[%s276 + $0x110] sm:$0xff]
      %v783 = vld [vmem:[%s276 + $0x120] sm:$0xff]
      %v784 = vld [vmem:[%s276 + $0x128] sm:$0xff]
      %v785 = vld [vmem:[%s276 + $0x138] sm:$0xff]
      %v786 = vld [vmem:[%s276 + $0x140] sm:$0xff]
      %v787 = vld [vmem:[%s276 + $0x150] sm:$0xff]
      %v788 = vld [vmem:[%s276 + $0x158] sm:$0xff]
      %v789 = vld [vmem:[%s276 + $0x168] sm:$0xff]
      %v790 = vld [vmem:[%s276 + $0x170] sm:$0xff]
      %823 = vrot.lane.b32.xlu0 %v759, 12
      %v824 = vpop.permute.xlu0 %823
      %825 = vrot.lane.b32.xlu0 %v760, 12
      %v826 = vpop.permute.xlu0 %825
      %827 = vrot.lane.b32.xlu0 %v761, 12
      %v828 = vpop.permute.xlu0 %827
      %829 = vrot.lane.b32.xlu0 %v762, 12
      %v830 = vpop.permute.xlu0 %829
      %831 = vrot.lane.b32.xlu0 %v763, 12
      %v832 = vpop.permute.xlu0 %831
      %833 = vrot.lane.b32.xlu0 %v764, 12
      %v834 = vpop.permute.xlu0 %833
      %835 = vrot.lane.b32.xlu0 %v765, 12
      %v836 = vpop.permute.xlu0 %835
      %837 = vrot.lane.b32.xlu0 %v766, 12
      %v838 = vpop.permute.xlu0 %837
      %839 = vrot.lane.b32.xlu0 %v767, 12
      %v840 = vpop.permute.xlu0 %839
      %841 = vrot.lane.b32.xlu0 %v768, 12
      %v842 = vpop.permute.xlu0 %841
      %843 = vrot.lane.b32.xlu0 %v769, 12
      %v844 = vpop.permute.xlu0 %843
      %845 = vrot.lane.b32.xlu0 %v770, 12
      %v846 = vpop.permute.xlu0 %845
      %847 = vrot.lane.b32.xlu0 %v771, 12
      %v848 = vpop.permute.xlu0 %847
      %849 = vrot.lane.b32.xlu0 %v772, 12
      %v850 = vpop.permute.xlu0 %849
      %851 = vrot.lane.b32.xlu0 %v773, 12
      %v852 = vpop.permute.xlu0 %851
      %853 = vrot.lane.b32.xlu0 %v774, 12
      %v854 = vpop.permute.xlu0 %853
      %855 = vrot.lane.b32.xlu0 %v775, 12
      %v856 = vpop.permute.xlu0 %855
      %857 = vrot.lane.b32.xlu0 %v776, 12
      %v858 = vpop.permute.xlu0 %857
      %859 = vrot.lane.b32.xlu0 %v777, 12
      %v860 = vpop.permute.xlu0 %859
      %861 = vrot.lane.b32.xlu0 %v778, 12
      %v862 = vpop.permute.xlu0 %861
      %863 = vrot.lane.b32.xlu0 %v779, 12
      %v864 = vpop.permute.xlu0 %863
      %865 = vrot.lane.b32.xlu0 %v780, 12
      %v866 = vpop.permute.xlu0 %865
      %867 = vrot.lane.b32.xlu0 %v781, 12
      %v868 = vpop.permute.xlu0 %867
      %869 = vrot.lane.b32.xlu0 %v782, 12
      %v870 = vpop.permute.xlu0 %869
      %871 = vrot.lane.b32.xlu0 %v783, 12
      %v872 = vpop.permute.xlu0 %871
      %873 = vrot.lane.b32.xlu0 %v784, 12
      %v874 = vpop.permute.xlu0 %873
      %875 = vrot.lane.b32.xlu0 %v785, 12
      %v876 = vpop.permute.xlu0 %875
      %877 = vrot.lane.b32.xlu0 %v786, 12
      %v878 = vpop.permute.xlu0 %877
      %879 = vrot.lane.b32.xlu0 %v787, 12
      %v880 = vpop.permute.xlu0 %879
      %881 = vrot.lane.b32.xlu0 %v788, 12
      %v882 = vpop.permute.xlu0 %881
      %883 = vrot.lane.b32.xlu0 %v789, 12
      %v884 = vpop.permute.xlu0 %883
      %885 = vrot.lane.b32.xlu0 %v790, 12
      %v886 = vpop.permute.xlu0 %885
      %vm919 = vcmask 130144
      %920 = vst.msk [vmem:[#allocation3] sm:$0xff] %vm919, %v824
      %921 = vst.msk [vmem:[#allocation3 + $0x8] sm:$0xff] %vm919, %v826
      %922 = vst.msk [vmem:[#allocation3 + $0x10] sm:$0xff] %vm919, %v828
      %923 = vst.msk [vmem:[#allocation3 + $0x18] sm:$0xff] %vm919, %v830
      %924 = vst.msk [vmem:[#allocation3 + $0x20] sm:$0xff] %vm919, %v832
      %925 = vst.msk [vmem:[#allocation3 + $0x28] sm:$0xff] %vm919, %v834
      %926 = vst.msk [vmem:[#allocation3 + $0x30] sm:$0xff] %vm919, %v836
      %927 = vst.msk [vmem:[#allocation3 + $0x38] sm:$0xff] %vm919, %v838
      %928 = vst.msk [vmem:[#allocation3 + $0x40] sm:$0xff] %vm919, %v840
      %929 = vst.msk [vmem:[#allocation3 + $0x48] sm:$0xff] %vm919, %v842
      %930 = vst.msk [vmem:[#allocation3 + $0x50] sm:$0xff] %vm919, %v844
      %931 = vst.msk [vmem:[#allocation3 + $0x58] sm:$0xff] %vm919, %v846
      %932 = vst.msk [vmem:[#allocation3 + $0x60] sm:$0xff] %vm919, %v848
      %933 = vst.msk [vmem:[#allocation3 + $0x68] sm:$0xff] %vm919, %v850
      %934 = vst.msk [vmem:[#allocation3 + $0x70] sm:$0xff] %vm919, %v852
      %935 = vst.msk [vmem:[#allocation3 + $0x78] sm:$0xff] %vm919, %v854
      %936 = vst.msk [vmem:[#allocation3 + $0x80] sm:$0xff] %vm919, %v856
      %937 = vst.msk [vmem:[#allocation3 + $0x88] sm:$0xff] %vm919, %v858
      %938 = vst.msk [vmem:[#allocation3 + $0x90] sm:$0xff] %vm919, %v860
      %939 = vst.msk [vmem:[#allocation3 + $0x98] sm:$0xff] %vm919, %v862
      %940 = vst.msk [vmem:[#allocation3 + $0xa0] sm:$0xff] %vm919, %v864
      %941 = vst.msk [vmem:[#allocation3 + $0xa8] sm:$0xff] %vm919, %v866
      %942 = vst.msk [vmem:[#allocation3 + $0xb0] sm:$0xff] %vm919, %v868
      %943 = vst.msk [vmem:[#allocation3 + $0xb8] sm:$0xff] %vm919, %v870
      %944 = vst.msk [vmem:[#allocation3 + $0xc0] sm:$0xff] %vm919, %v872
      %945 = vst.msk [vmem:[#allocation3 + $0xc8] sm:$0xff] %vm919, %v874
      %946 = vst.msk [vmem:[#allocation3 + $0xd0] sm:$0xff] %vm919, %v876
      %947 = vst.msk [vmem:[#allocation3 + $0xd8] sm:$0xff] %vm919, %v878
      %948 = vst.msk [vmem:[#allocation3 + $0xe0] sm:$0xff] %vm919, %v880
      %949 = vst.msk [vmem:[#allocation3 + $0xe8] sm:$0xff] %vm919, %v882
      %950 = vst.msk [vmem:[#allocation3 + $0xf0] sm:$0xff] %vm919, %v884
      %951 = vst.msk [vmem:[#allocation3 + $0xf8] sm:$0xff] %vm919, %v886
      %v952 = vld [vmem:[%s276 + $0x1] sm:$0xff]
      %v953 = vld [vmem:[%s276 + $0x9] sm:$0xff]
      %v954 = vld [vmem:[%s276 + $0x19] sm:$0xff]
      %v955 = vld [vmem:[%s276 + $0x21] sm:$0xff]
      %v956 = vld [vmem:[%s276 + $0x31] sm:$0xff]
      %v957 = vld [vmem:[%s276 + $0x39] sm:$0xff]
      %v958 = vld [vmem:[%s276 + $0x49] sm:$0xff]
      %v959 = vld [vmem:[%s276 + $0x51] sm:$0xff]
      %v960 = vld [vmem:[%s276 + $0x61] sm:$0xff]
      %v961 = vld [vmem:[%s276 + $0x69] sm:$0xff]
      %v962 = vld [vmem:[%s276 + $0x79] sm:$0xff]
      %v963 = vld [vmem:[%s276 + $0x81] sm:$0xff]
      %v964 = vld [vmem:[%s276 + $0x91] sm:$0xff]
      %v965 = vld [vmem:[%s276 + $0x99] sm:$0xff]
      %v966 = vld [vmem:[%s276 + $0xa9] sm:$0xff]
      %v967 = vld [vmem:[%s276 + $0xb1] sm:$0xff]
      %v968 = vld [vmem:[%s276 + $0xc1] sm:$0xff]
      %v969 = vld [vmem:[%s276 + $0xc9] sm:$0xff]
      %v970 = vld [vmem:[%s276 + $0xd9] sm:$0xff]
      %v971 = vld [vmem:[%s276 + $0xe1] sm:$0xff]
      %v972 = vld [vmem:[%s276 + $0xf1] sm:$0xff]
      %v973 = vld [vmem:[%s276 + $0xf9] sm:$0xff]
      %v974 = vld [vmem:[%s276 + $0x109] sm:$0xff]
      %v975 = vld [vmem:[%s276 + $0x111] sm:$0xff]
      %v976 = vld [vmem:[%s276 + $0x121] sm:$0xff]
      %v977 = vld [vmem:[%s276 + $0x129] sm:$0xff]
      %v978 = vld [vmem:[%s276 + $0x139] sm:$0xff]
      %v979 = vld [vmem:[%s276 + $0x141] sm:$0xff]
      %v980 = vld [vmem:[%s276 + $0x151] sm:$0xff]
      %v981 = vld [vmem:[%s276 + $0x159] sm:$0xff]
      %v982 = vld [vmem:[%s276 + $0x169] sm:$0xff]
      %v983 = vld [vmem:[%s276 + $0x171] sm:$0xff]
      %1016 = vrot.lane.b32.xlu0 %v952, 16
      %v1017 = vpop.permute.xlu0 %1016
      %1018 = vrot.lane.b32.xlu0 %v953, 16
      %v1019 = vpop.permute.xlu0 %1018
      %1020 = vrot.lane.b32.xlu0 %v954, 16
      %v1021 = vpop.permute.xlu0 %1020
      %1022 = vrot.lane.b32.xlu0 %v955, 16
      %v1023 = vpop.permute.xlu0 %1022
      %1024 = vrot.lane.b32.xlu0 %v956, 16
      %v1025 = vpop.permute.xlu0 %1024
      %1026 = vrot.lane.b32.xlu0 %v957, 16
      %v1027 = vpop.permute.xlu0 %1026
      %1028 = vrot.lane.b32.xlu0 %v958, 16
      %v1029 = vpop.permute.xlu0 %1028
      %1030 = vrot.lane.b32.xlu0 %v959, 16
      %v1031 = vpop.permute.xlu0 %1030
      %1032 = vrot.lane.b32.xlu0 %v960, 16
      %v1033 = vpop.permute.xlu0 %1032
      %1034 = vrot.lane.b32.xlu0 %v961, 16
      %v1035 = vpop.permute.xlu0 %1034
      %1036 = vrot.lane.b32.xlu0 %v962, 16
      %v1037 = vpop.permute.xlu0 %1036
      %1038 = vrot.lane.b32.xlu0 %v963, 16
      %v1039 = vpop.permute.xlu0 %1038
      %1040 = vrot.lane.b32.xlu0 %v964, 16
      %v1041 = vpop.permute.xlu0 %1040
      %1042 = vrot.lane.b32.xlu0 %v965, 16
      %v1043 = vpop.permute.xlu0 %1042
      %1044 = vrot.lane.b32.xlu0 %v966, 16
      %v1045 = vpop.permute.xlu0 %1044
      %1046 = vrot.lane.b32.xlu0 %v967, 16
      %v1047 = vpop.permute.xlu0 %1046
      %1048 = vrot.lane.b32.xlu0 %v968, 16
      %v1049 = vpop.permute.xlu0 %1048
      %1050 = vrot.lane.b32.xlu0 %v969, 16
      %v1051 = vpop.permute.xlu0 %1050
      %1052 = vrot.lane.b32.xlu0 %v970, 16
      %v1053 = vpop.permute.xlu0 %1052
      %1054 = vrot.lane.b32.xlu0 %v971, 16
      %v1055 = vpop.permute.xlu0 %1054
      %1056 = vrot.lane.b32.xlu0 %v972, 16
      %v1057 = vpop.permute.xlu0 %1056
      %1058 = vrot.lane.b32.xlu0 %v973, 16
      %v1059 = vpop.permute.xlu0 %1058
      %1060 = vrot.lane.b32.xlu0 %v974, 16
      %v1061 = vpop.permute.xlu0 %1060
      %1062 = vrot.lane.b32.xlu0 %v975, 16
      %v1063 = vpop.permute.xlu0 %1062
      %1064 = vrot.lane.b32.xlu0 %v976, 16
      %v1065 = vpop.permute.xlu0 %1064
      %1066 = vrot.lane.b32.xlu0 %v977, 16
      %v1067 = vpop.permute.xlu0 %1066
      %1068 = vrot.lane.b32.xlu0 %v978, 16
      %v1069 = vpop.permute.xlu0 %1068
      %1070 = vrot.lane.b32.xlu0 %v979, 16
      %v1071 = vpop.permute.xlu0 %1070
      %1072 = vrot.lane.b32.xlu0 %v980, 16
      %v1073 = vpop.permute.xlu0 %1072
      %1074 = vrot.lane.b32.xlu0 %v981, 16
      %v1075 = vpop.permute.xlu0 %1074
      %1076 = vrot.lane.b32.xlu0 %v982, 16
      %v1077 = vpop.permute.xlu0 %1076
      %1078 = vrot.lane.b32.xlu0 %v983, 16
      %v1079 = vpop.permute.xlu0 %1078
      %vm1112 = vcmask 162944
      %1113 = vst.msk [vmem:[#allocation3] sm:$0xff] %vm1112, %v1017
      %1114 = vst.msk [vmem:[#allocation3 + $0x8] sm:$0xff] %vm1112, %v1019
      %1115 = vst.msk [vmem:[#allocation3 + $0x10] sm:$0xff] %vm1112, %v1021
      %1116 = vst.msk [vmem:[#allocation3 + $0x18] sm:$0xff] %vm1112, %v1023
      %1117 = vst.msk [vmem:[#allocation3 + $0x20] sm:$0xff] %vm1112, %v1025
      %1118 = vst.msk [vmem:[#allocation3 + $0x28] sm:$0xff] %vm1112, %v1027
      %1119 = vst.msk [vmem:[#allocation3 + $0x30] sm:$0xff] %vm1112, %v1029
      %1120 = vst.msk [vmem:[#allocation3 + $0x38] sm:$0xff] %vm1112, %v1031
      %1121 = vst.msk [vmem:[#allocation3 + $0x40] sm:$0xff] %vm1112, %v1033
      %1122 = vst.msk [vmem:[#allocation3 + $0x48] sm:$0xff] %vm1112, %v1035
      %1123 = vst.msk [vmem:[#allocation3 + $0x50] sm:$0xff] %vm1112, %v1037
      %1124 = vst.msk [vmem:[#allocation3 + $0x58] sm:$0xff] %vm1112, %v1039
      %1125 = vst.msk [vmem:[#allocation3 + $0x60] sm:$0xff] %vm1112, %v1041
      %1126 = vst.msk [vmem:[#allocation3 + $0x68] sm:$0xff] %vm1112, %v1043
      %1127 = vst.msk [vmem:[#allocation3 + $0x70] sm:$0xff] %vm1112, %v1045
      %1128 = vst.msk [vmem:[#allocation3 + $0x78] sm:$0xff] %vm1112, %v1047
      %1129 = vst.msk [vmem:[#allocation3 + $0x80] sm:$0xff] %vm1112, %v1049
      %1130 = vst.msk [vmem:[#allocation3 + $0x88] sm:$0xff] %vm1112, %v1051
      %1131 = vst.msk [vmem:[#allocation3 + $0x90] sm:$0xff] %vm1112, %v1053
      %1132 = vst.msk [vmem:[#allocation3 + $0x98] sm:$0xff] %vm1112, %v1055
      %1133 = vst.msk [vmem:[#allocation3 + $0xa0] sm:$0xff] %vm1112, %v1057
      %1134 = vst.msk [vmem:[#allocation3 + $0xa8] sm:$0xff] %vm1112, %v1059
      %1135 = vst.msk [vmem:[#allocation3 + $0xb0] sm:$0xff] %vm1112, %v1061
      %1136 = vst.msk [vmem:[#allocation3 + $0xb8] sm:$0xff] %vm1112, %v1063
      %1137 = vst.msk [vmem:[#allocation3 + $0xc0] sm:$0xff] %vm1112, %v1065
      %1138 = vst.msk [vmem:[#allocation3 + $0xc8] sm:$0xff] %vm1112, %v1067
      %1139 = vst.msk [vmem:[#allocation3 + $0xd0] sm:$0xff] %vm1112, %v1069
      %1140 = vst.msk [vmem:[#allocation3 + $0xd8] sm:$0xff] %vm1112, %v1071
      %1141 = vst.msk [vmem:[#allocation3 + $0xe0] sm:$0xff] %vm1112, %v1073
      %1142 = vst.msk [vmem:[#allocation3 + $0xe8] sm:$0xff] %vm1112, %v1075
      %1143 = vst.msk [vmem:[#allocation3 + $0xf0] sm:$0xff] %vm1112, %v1077
      %1144 = vst.msk [vmem:[#allocation3 + $0xf8] sm:$0xff] %vm1112, %v1079
      %v1145 = vld [vmem:[%s276 + $0x2] sm:$0xff]
      %v1146 = vld [vmem:[%s276 + $0xa] sm:$0xff]
      %v1147 = vld [vmem:[%s276 + $0x1a] sm:$0xff]
      %v1148 = vld [vmem:[%s276 + $0x22] sm:$0xff]
      %v1149 = vld [vmem:[%s276 + $0x32] sm:$0xff]
      %v1150 = vld [vmem:[%s276 + $0x3a] sm:$0xff]
      %v1151 = vld [vmem:[%s276 + $0x4a] sm:$0xff]
      %v1152 = vld [vmem:[%s276 + $0x52] sm:$0xff]
      %v1153 = vld [vmem:[%s276 + $0x62] sm:$0xff]
      %v1154 = vld [vmem:[%s276 + $0x6a] sm:$0xff]
      %v1155 = vld [vmem:[%s276 + $0x7a] sm:$0xff]
      %v1156 = vld [vmem:[%s276 + $0x82] sm:$0xff]
      %v1157 = vld [vmem:[%s276 + $0x92] sm:$0xff]
      %v1158 = vld [vmem:[%s276 + $0x9a] sm:$0xff]
      %v1159 = vld [vmem:[%s276 + $0xaa] sm:$0xff]
      %v1160 = vld [vmem:[%s276 + $0xb2] sm:$0xff]
      %v1161 = vld [vmem:[%s276 + $0xc2] sm:$0xff]
      %v1162 = vld [vmem:[%s276 + $0xca] sm:$0xff]
      %v1163 = vld [vmem:[%s276 + $0xda] sm:$0xff]
      %v1164 = vld [vmem:[%s276 + $0xe2] sm:$0xff]
      %v1165 = vld [vmem:[%s276 + $0xf2] sm:$0xff]
      %v1166 = vld [vmem:[%s276 + $0xfa] sm:$0xff]
      %v1167 = vld [vmem:[%s276 + $0x10a] sm:$0xff]
      %v1168 = vld [vmem:[%s276 + $0x112] sm:$0xff]
      %v1169 = vld [vmem:[%s276 + $0x122] sm:$0xff]
      %v1170 = vld [vmem:[%s276 + $0x12a] sm:$0xff]
      %v1171 = vld [vmem:[%s276 + $0x13a] sm:$0xff]
      %v1172 = vld [vmem:[%s276 + $0x142] sm:$0xff]
      %v1173 = vld [vmem:[%s276 + $0x152] sm:$0xff]
      %v1174 = vld [vmem:[%s276 + $0x15a] sm:$0xff]
      %v1175 = vld [vmem:[%s276 + $0x16a] sm:$0xff]
      %v1176 = vld [vmem:[%s276 + $0x172] sm:$0xff]
      %1209 = vrot.lane.b32.xlu0 %v1145, 20
      %v1210 = vpop.permute.xlu0 %1209
      %1211 = vrot.lane.b32.xlu0 %v1146, 20
      %v1212 = vpop.permute.xlu0 %1211
      %1213 = vrot.lane.b32.xlu0 %v1147, 20
      %v1214 = vpop.permute.xlu0 %1213
      %1215 = vrot.lane.b32.xlu0 %v1148, 20
      %v1216 = vpop.permute.xlu0 %1215
      %1217 = vrot.lane.b32.xlu0 %v1149, 20
      %v1218 = vpop.permute.xlu0 %1217
      %1219 = vrot.lane.b32.xlu0 %v1150, 20
      %v1220 = vpop.permute.xlu0 %1219
      %1221 = vrot.lane.b32.xlu0 %v1151, 20
      %v1222 = vpop.permute.xlu0 %1221
      %1223 = vrot.lane.b32.xlu0 %v1152, 20
      %v1224 = vpop.permute.xlu0 %1223
      %1225 = vrot.lane.b32.xlu0 %v1153, 20
      %v1226 = vpop.permute.xlu0 %1225
      %1227 = vrot.lane.b32.xlu0 %v1154, 20
      %v1228 = vpop.permute.xlu0 %1227
      %1229 = vrot.lane.b32.xlu0 %v1155, 20
      %v1230 = vpop.permute.xlu0 %1229
      %1231 = vrot.lane.b32.xlu0 %v1156, 20
      %v1232 = vpop.permute.xlu0 %1231
      %1233 = vrot.lane.b32.xlu0 %v1157, 20
      %v1234 = vpop.permute.xlu0 %1233
      %1235 = vrot.lane.b32.xlu0 %v1158, 20
      %v1236 = vpop.permute.xlu0 %1235
      %1237 = vrot.lane.b32.xlu0 %v1159, 20
      %v1238 = vpop.permute.xlu0 %1237
      %1239 = vrot.lane.b32.xlu0 %v1160, 20
      %v1240 = vpop.permute.xlu0 %1239
      %1241 = vrot.lane.b32.xlu0 %v1161, 20
      %v1242 = vpop.permute.xlu0 %1241
      %1243 = vrot.lane.b32.xlu0 %v1162, 20
      %v1244 = vpop.permute.xlu0 %1243
      %1245 = vrot.lane.b32.xlu0 %v1163, 20
      %v1246 = vpop.permute.xlu0 %1245
      %1247 = vrot.lane.b32.xlu0 %v1164, 20
      %v1248 = vpop.permute.xlu0 %1247
      %1249 = vrot.lane.b32.xlu0 %v1165, 20
      %v1250 = vpop.permute.xlu0 %1249
      %1251 = vrot.lane.b32.xlu0 %v1166, 20
      %v1252 = vpop.permute.xlu0 %1251
      %1253 = vrot.lane.b32.xlu0 %v1167, 20
      %v1254 = vpop.permute.xlu0 %1253
      %1255 = vrot.lane.b32.xlu0 %v1168, 20
      %v1256 = vpop.permute.xlu0 %1255
      %1257 = vrot.lane.b32.xlu0 %v1169, 20
      %v1258 = vpop.permute.xlu0 %1257
      %1259 = vrot.lane.b32.xlu0 %v1170, 20
      %v1260 = vpop.permute.xlu0 %1259
      %1261 = vrot.lane.b32.xlu0 %v1171, 20
      %v1262 = vpop.permute.xlu0 %1261
      %1263 = vrot.lane.b32.xlu0 %v1172, 20
      %v1264 = vpop.permute.xlu0 %1263
      %1265 = vrot.lane.b32.xlu0 %v1173, 20
      %v1266 = vpop.permute.xlu0 %1265
      %1267 = vrot.lane.b32.xlu0 %v1174, 20
      %v1268 = vpop.permute.xlu0 %1267
      %1269 = vrot.lane.b32.xlu0 %v1175, 20
      %v1270 = vpop.permute.xlu0 %1269
      %1271 = vrot.lane.b32.xlu0 %v1176, 20
      %v1272 = vpop.permute.xlu0 %1271
      %vm1305 = vcmask 195744
      %1306 = vst.msk [vmem:[#allocation3] sm:$0xff] %vm1305, %v1210
      %1307 = vst.msk [vmem:[#allocation3 + $0x8] sm:$0xff] %vm1305, %v1212
      %1308 = vst.msk [vmem:[#allocation3 + $0x10] sm:$0xff] %vm1305, %v1214
      %1309 = vst.msk [vmem:[#allocation3 + $0x18] sm:$0xff] %vm1305, %v1216
      %1310 = vst.msk [vmem:[#allocation3 + $0x20] sm:$0xff] %vm1305, %v1218
      %1311 = vst.msk [vmem:[#allocation3 + $0x28] sm:$0xff] %vm1305, %v1220
      %1312 = vst.msk [vmem:[#allocation3 + $0x30] sm:$0xff] %vm1305, %v1222
      %1313 = vst.msk [vmem:[#allocation3 + $0x38] sm:$0xff] %vm1305, %v1224
      %1314 = vst.msk [vmem:[#allocation3 + $0x40] sm:$0xff] %vm1305, %v1226
      %1315 = vst.msk [vmem:[#allocation3 + $0x48] sm:$0xff] %vm1305, %v1228
      %1316 = vst.msk [vmem:[#allocation3 + $0x50] sm:$0xff] %vm1305, %v1230
      %1317 = vst.msk [vmem:[#allocation3 + $0x58] sm:$0xff] %vm1305, %v1232
      %1318 = vst.msk [vmem:[#allocation3 + $0x60] sm:$0xff] %vm1305, %v1234
      %1319 = vst.msk [vmem:[#allocation3 + $0x68] sm:$0xff] %vm1305, %v1236
      %1320 = vst.msk [vmem:[#allocation3 + $0x70] sm:$0xff] %vm1305, %v1238
      %1321 = vst.msk [vmem:[#allocation3 + $0x78] sm:$0xff] %vm1305, %v1240
      %1322 = vst.msk [vmem:[#allocation3 + $0x80] sm:$0xff] %vm1305, %v1242
      %1323 = vst.msk [vmem:[#allocation3 + $0x88] sm:$0xff] %vm1305, %v1244
      %1324 = vst.msk [vmem:[#allocation3 + $0x90] sm:$0xff] %vm1305, %v1246
      %1325 = vst.msk [vmem:[#allocation3 + $0x98] sm:$0xff] %vm1305, %v1248
      %1326 = vst.msk [vmem:[#allocation3 + $0xa0] sm:$0xff] %vm1305, %v1250
      %1327 = vst.msk [vmem:[#allocation3 + $0xa8] sm:$0xff] %vm1305, %v1252
      %1328 = vst.msk [vmem:[#allocation3 + $0xb0] sm:$0xff] %vm1305, %v1254
      %1329 = vst.msk [vmem:[#allocation3 + $0xb8] sm:$0xff] %vm1305, %v1256
      %1330 = vst.msk [vmem:[#allocation3 + $0xc0] sm:$0xff] %vm1305, %v1258
      %1331 = vst.msk [vmem:[#allocation3 + $0xc8] sm:$0xff] %vm1305, %v1260
      %1332 = vst.msk [vmem:[#allocation3 + $0xd0] sm:$0xff] %vm1305, %v1262
      %1333 = vst.msk [vmem:[#allocation3 + $0xd8] sm:$0xff] %vm1305, %v1264
      %1334 = vst.msk [vmem:[#allocation3 + $0xe0] sm:$0xff] %vm1305, %v1266
      %1335 = vst.msk [vmem:[#allocation3 + $0xe8] sm:$0xff] %vm1305, %v1268
      %1336 = vst.msk [vmem:[#allocation3 + $0xf0] sm:$0xff] %vm1305, %v1270
      %1337 = vst.msk [vmem:[#allocation3 + $0xf8] sm:$0xff] %vm1305, %v1272
      %s1338 = scalar_lea.vmem [#allocation2], 48
      %v1339 = vld [vmem:[%s1338] sm:$0xff]
      %v1340 = vld [vmem:[%s1338 + $0x8] sm:$0xff]
      %v1341 = vld [vmem:[%s1338 + $0x18] sm:$0xff]
      %v1342 = vld [vmem:[%s1338 + $0x20] sm:$0xff]
      %v1343 = vld [vmem:[%s1338 + $0x30] sm:$0xff]
      %v1344 = vld [vmem:[%s1338 + $0x38] sm:$0xff]
      %v1345 = vld [vmem:[%s1338 + $0x48] sm:$0xff]
      %v1346 = vld [vmem:[%s1338 + $0x50] sm:$0xff]
      %v1347 = vld [vmem:[%s1338 + $0x60] sm:$0xff]
      %v1348 = vld [vmem:[%s1338 + $0x68] sm:$0xff]
      %v1349 = vld [vmem:[%s1338 + $0x78] sm:$0xff]
      %v1350 = vld [vmem:[%s1338 + $0x80] sm:$0xff]
      %v1351 = vld [vmem:[%s1338 + $0x90] sm:$0xff]
      %v1352 = vld [vmem:[%s1338 + $0x98] sm:$0xff]
      %v1353 = vld [vmem:[%s1338 + $0xa8] sm:$0xff]
      %v1354 = vld [vmem:[%s1338 + $0xb0] sm:$0xff]
      %v1355 = vld [vmem:[%s1338 + $0xc0] sm:$0xff]
      %v1356 = vld [vmem:[%s1338 + $0xc8] sm:$0xff]
      %v1357 = vld [vmem:[%s1338 + $0xd8] sm:$0xff]
      %v1358 = vld [vmem:[%s1338 + $0xe0] sm:$0xff]
      %v1359 = vld [vmem:[%s1338 + $0xf0] sm:$0xff]
      %v1360 = vld [vmem:[%s1338 + $0xf8] sm:$0xff]
      %v1361 = vld [vmem:[%s1338 + $0x108] sm:$0xff]
      %v1362 = vld [vmem:[%s1338 + $0x110] sm:$0xff]
      %v1363 = vld [vmem:[%s1338 + $0x120] sm:$0xff]
      %v1364 = vld [vmem:[%s1338 + $0x128] sm:$0xff]
      %v1365 = vld [vmem:[%s1338 + $0x138] sm:$0xff]
      %v1366 = vld [vmem:[%s1338 + $0x140] sm:$0xff]
      %v1367 = vld [vmem:[%s1338 + $0x150] sm:$0xff]
      %v1368 = vld [vmem:[%s1338 + $0x158] sm:$0xff]
      %v1369 = vld [vmem:[%s1338 + $0x168] sm:$0xff]
      %v1370 = vld [vmem:[%s1338 + $0x170] sm:$0xff]
      %1403 = vrot.lane.b32.xlu0 %v1339, 24
      %v1404 = vpop.permute.xlu0 %1403
      %1405 = vrot.lane.b32.xlu0 %v1340, 24
      %v1406 = vpop.permute.xlu0 %1405
      %1407 = vrot.lane.b32.xlu0 %v1341, 24
      %v1408 = vpop.permute.xlu0 %1407
      %1409 = vrot.lane.b32.xlu0 %v1342, 24
      %v1410 = vpop.permute.xlu0 %1409
      %1411 = vrot.lane.b32.xlu0 %v1343, 24
      %v1412 = vpop.permute.xlu0 %1411
      %1413 = vrot.lane.b32.xlu0 %v1344, 24
      %v1414 = vpop.permute.xlu0 %1413
      %1415 = vrot.lane.b32.xlu0 %v1345, 24
      %v1416 = vpop.permute.xlu0 %1415
      %1417 = vrot.lane.b32.xlu0 %v1346, 24
      %v1418 = vpop.permute.xlu0 %1417
      %1419 = vrot.lane.b32.xlu0 %v1347, 24
      %v1420 = vpop.permute.xlu0 %1419
      %1421 = vrot.lane.b32.xlu0 %v1348, 24
      %v1422 = vpop.permute.xlu0 %1421
      %1423 = vrot.lane.b32.xlu0 %v1349, 24
      %v1424 = vpop.permute.xlu0 %1423
      %1425 = vrot.lane.b32.xlu0 %v1350, 24
      %v1426 = vpop.permute.xlu0 %1425
      %1427 = vrot.lane.b32.xlu0 %v1351, 24
      %v1428 = vpop.permute.xlu0 %1427
      %1429 = vrot.lane.b32.xlu0 %v1352, 24
      %v1430 = vpop.permute.xlu0 %1429
      %1431 = vrot.lane.b32.xlu0 %v1353, 24
      %v1432 = vpop.permute.xlu0 %1431
      %1433 = vrot.lane.b32.xlu0 %v1354, 24
      %v1434 = vpop.permute.xlu0 %1433
      %1435 = vrot.lane.b32.xlu0 %v1355, 24
      %v1436 = vpop.permute.xlu0 %1435
      %1437 = vrot.lane.b32.xlu0 %v1356, 24
      %v1438 = vpop.permute.xlu0 %1437
      %1439 = vrot.lane.b32.xlu0 %v1357, 24
      %v1440 = vpop.permute.xlu0 %1439
      %1441 = vrot.lane.b32.xlu0 %v1358, 24
      %v1442 = vpop.permute.xlu0 %1441
      %1443 = vrot.lane.b32.xlu0 %v1359, 24
      %v1444 = vpop.permute.xlu0 %1443
      %1445 = vrot.lane.b32.xlu0 %v1360, 24
      %v1446 = vpop.permute.xlu0 %1445
      %1447 = vrot.lane.b32.xlu0 %v1361, 24
      %v1448 = vpop.permute.xlu0 %1447
      %1449 = vrot.lane.b32.xlu0 %v1362, 24
      %v1450 = vpop.permute.xlu0 %1449
      %1451 = vrot.lane.b32.xlu0 %v1363, 24
      %v1452 = vpop.permute.xlu0 %1451
      %1453 = vrot.lane.b32.xlu0 %v1364, 24
      %v1454 = vpop.permute.xlu0 %1453
      %1455 = vrot.lane.b32.xlu0 %v1365, 24
      %v1456 = vpop.permute.xlu0 %1455
      %1457 = vrot.lane.b32.xlu0 %v1366, 24
      %v1458 = vpop.permute.xlu0 %1457
      %1459 = vrot.lane.b32.xlu0 %v1367, 24
      %v1460 = vpop.permute.xlu0 %1459
      %1461 = vrot.lane.b32.xlu0 %v1368, 24
      %v1462 = vpop.permute.xlu0 %1461
      %1463 = vrot.lane.b32.xlu0 %v1369, 24
      %v1464 = vpop.permute.xlu0 %1463
      %1465 = vrot.lane.b32.xlu0 %v1370, 24
      %v1466 = vpop.permute.xlu0 %1465
      %vm1499 = vcmask 228544
      %1500 = vst.msk [vmem:[#allocation3] sm:$0xff] %vm1499, %v1404
      %1501 = vst.msk [vmem:[#allocation3 + $0x8] sm:$0xff] %vm1499, %v1406
      %1502 = vst.msk [vmem:[#allocation3 + $0x10] sm:$0xff] %vm1499, %v1408
      %1503 = vst.msk [vmem:[#allocation3 + $0x18] sm:$0xff] %vm1499, %v1410
      %1504 = vst.msk [vmem:[#allocation3 + $0x20] sm:$0xff] %vm1499, %v1412
      %1505 = vst.msk [vmem:[#allocation3 + $0x28] sm:$0xff] %vm1499, %v1414
      %1506 = vst.msk [vmem:[#allocation3 + $0x30] sm:$0xff] %vm1499, %v1416
      %1507 = vst.msk [vmem:[#allocation3 + $0x38] sm:$0xff] %vm1499, %v1418
      %1508 = vst.msk [vmem:[#allocation3 + $0x40] sm:$0xff] %vm1499, %v1420
      %1509 = vst.msk [vmem:[#allocation3 + $0x48] sm:$0xff] %vm1499, %v1422
      %1510 = vst.msk [vmem:[#allocation3 + $0x50] sm:$0xff] %vm1499, %v1424
      %1511 = vst.msk [vmem:[#allocation3 + $0x58] sm:$0xff] %vm1499, %v1426
      %1512 = vst.msk [vmem:[#allocation3 + $0x60] sm:$0xff] %vm1499, %v1428
      %1513 = vst.msk [vmem:[#allocation3 + $0x68] sm:$0xff] %vm1499, %v1430
      %1514 = vst.msk [vmem:[#allocation3 + $0x70] sm:$0xff] %vm1499, %v1432
      %1515 = vst.msk [vmem:[#allocation3 + $0x78] sm:$0xff] %vm1499, %v1434
      %1516 = vst.msk [vmem:[#allocation3 + $0x80] sm:$0xff] %vm1499, %v1436
      %1517 = vst.msk [vmem:[#allocation3 + $0x88] sm:$0xff] %vm1499, %v1438
      %1518 = vst.msk [vmem:[#allocation3 + $0x90] sm:$0xff] %vm1499, %v1440
      %1519 = vst.msk [vmem:[#allocation3 + $0x98] sm:$0xff] %vm1499, %v1442
      %1520 = vst.msk [vmem:[#allocation3 + $0xa0] sm:$0xff] %vm1499, %v1444
      %1521 = vst.msk [vmem:[#allocation3 + $0xa8] sm:$0xff] %vm1499, %v1446
      %1522 = vst.msk [vmem:[#allocation3 + $0xb0] sm:$0xff] %vm1499, %v1448
      %1523 = vst.msk [vmem:[#allocation3 + $0xb8] sm:$0xff] %vm1499, %v1450
      %1524 = vst.msk [vmem:[#allocation3 + $0xc0] sm:$0xff] %vm1499, %v1452
      %1525 = vst.msk [vmem:[#allocation3 + $0xc8] sm:$0xff] %vm1499, %v1454
      %1526 = vst.msk [vmem:[#allocation3 + $0xd0] sm:$0xff] %vm1499, %v1456
      %1527 = vst.msk [vmem:[#allocation3 + $0xd8] sm:$0xff] %vm1499, %v1458
      %1528 = vst.msk [vmem:[#allocation3 + $0xe0] sm:$0xff] %vm1499, %v1460
      %1529 = vst.msk [vmem:[#allocation3 + $0xe8] sm:$0xff] %vm1499, %v1462
      %1530 = vst.msk [vmem:[#allocation3 + $0xf0] sm:$0xff] %vm1499, %v1464
      %1531 = vst.msk [vmem:[#allocation3 + $0xf8] sm:$0xff] %vm1499, %v1466
      %v1532 = vld [vmem:[%s1338 + $0x1] sm:$0xff]
      %v1533 = vld [vmem:[%s1338 + $0x9] sm:$0xff]
      %v1534 = vld [vmem:[%s1338 + $0x19] sm:$0xff]
      %v1535 = vld [vmem:[%s1338 + $0x21] sm:$0xff]
      %v1536 = vld [vmem:[%s1338 + $0x31] sm:$0xff]
      %v1537 = vld [vmem:[%s1338 + $0x39] sm:$0xff]
      %v1538 = vld [vmem:[%s1338 + $0x49] sm:$0xff]
      %v1539 = vld [vmem:[%s1338 + $0x51] sm:$0xff]
      %v1540 = vld [vmem:[%s1338 + $0x61] sm:$0xff]
      %v1541 = vld [vmem:[%s1338 + $0x69] sm:$0xff]
      %v1542 = vld [vmem:[%s1338 + $0x79] sm:$0xff]
      %v1543 = vld [vmem:[%s1338 + $0x81] sm:$0xff]
      %v1544 = vld [vmem:[%s1338 + $0x91] sm:$0xff]
      %v1545 = vld [vmem:[%s1338 + $0x99] sm:$0xff]
      %v1546 = vld [vmem:[%s1338 + $0xa9] sm:$0xff]
      %v1547 = vld [vmem:[%s1338 + $0xb1] sm:$0xff]
      %v1548 = vld [vmem:[%s1338 + $0xc1] sm:$0xff]
      %v1549 = vld [vmem:[%s1338 + $0xc9] sm:$0xff]
      %v1550 = vld [vmem:[%s1338 + $0xd9] sm:$0xff]
      %v1551 = vld [vmem:[%s1338 + $0xe1] sm:$0xff]
      %v1552 = vld [vmem:[%s1338 + $0xf1] sm:$0xff]
      %v1553 = vld [vmem:[%s1338 + $0xf9] sm:$0xff]
      %v1554 = vld [vmem:[%s1338 + $0x109] sm:$0xff]
      %v1555 = vld [vmem:[%s1338 + $0x111] sm:$0xff]
      %v1556 = vld [vmem:[%s1338 + $0x121] sm:$0xff]
      %v1557 = vld [vmem:[%s1338 + $0x129] sm:$0xff]
      %v1558 = vld [vmem:[%s1338 + $0x139] sm:$0xff]
      %v1559 = vld [vmem:[%s1338 + $0x141] sm:$0xff]
      %v1560 = vld [vmem:[%s1338 + $0x151] sm:$0xff]
      %v1561 = vld [vmem:[%s1338 + $0x159] sm:$0xff]
      %v1562 = vld [vmem:[%s1338 + $0x169] sm:$0xff]
      %v1563 = vld [vmem:[%s1338 + $0x171] sm:$0xff]
      %1596 = vrot.lane.b32.xlu0 %v1532, 28
      %v1597 = vpop.permute.xlu0 %1596
      %1598 = vrot.lane.b32.xlu0 %v1533, 28
      %v1599 = vpop.permute.xlu0 %1598
      %1600 = vrot.lane.b32.xlu0 %v1534, 28
      %v1601 = vpop.permute.xlu0 %1600
      %1602 = vrot.lane.b32.xlu0 %v1535, 28
      %v1603 = vpop.permute.xlu0 %1602
      %1604 = vrot.lane.b32.xlu0 %v1536, 28
      %v1605 = vpop.permute.xlu0 %1604
      %1606 = vrot.lane.b32.xlu0 %v1537, 28
      %v1607 = vpop.permute.xlu0 %1606
      %1608 = vrot.lane.b32.xlu0 %v1538, 28
      %v1609 = vpop.permute.xlu0 %1608
      %1610 = vrot.lane.b32.xlu0 %v1539, 28
      %v1611 = vpop.permute.xlu0 %1610
      %1612 = vrot.lane.b32.xlu0 %v1540, 28
      %v1613 = vpop.permute.xlu0 %1612
      %1614 = vrot.lane.b32.xlu0 %v1541, 28
      %v1615 = vpop.permute.xlu0 %1614
      %1616 = vrot.lane.b32.xlu0 %v1542, 28
      %v1617 = vpop.permute.xlu0 %1616
      %1618 = vrot.lane.b32.xlu0 %v1543, 28
      %v1619 = vpop.permute.xlu0 %1618
      %1620 = vrot.lane.b32.xlu0 %v1544, 28
      %v1621 = vpop.permute.xlu0 %1620
      %1622 = vrot.lane.b32.xlu0 %v1545, 28
      %v1623 = vpop.permute.xlu0 %1622
      %1624 = vrot.lane.b32.xlu0 %v1546, 28
      %v1625 = vpop.permute.xlu0 %1624
      %1626 = vrot.lane.b32.xlu0 %v1547, 28
      %v1627 = vpop.permute.xlu0 %1626
      %1628 = vrot.lane.b32.xlu0 %v1548, 28
      %v1629 = vpop.permute.xlu0 %1628
      %1630 = vrot.lane.b32.xlu0 %v1549, 28
      %v1631 = vpop.permute.xlu0 %1630
      %1632 = vrot.lane.b32.xlu0 %v1550, 28
      %v1633 = vpop.permute.xlu0 %1632
      %1634 = vrot.lane.b32.xlu0 %v1551, 28
      %v1635 = vpop.permute.xlu0 %1634
      %1636 = vrot.lane.b32.xlu0 %v1552, 28
      %v1637 = vpop.permute.xlu0 %1636
      %1638 = vrot.lane.b32.xlu0 %v1553, 28
      %v1639 = vpop.permute.xlu0 %1638
      %1640 = vrot.lane.b32.xlu0 %v1554, 28
      %v1641 = vpop.permute.xlu0 %1640
      %1642 = vrot.lane.b32.xlu0 %v1555, 28
      %v1643 = vpop.permute.xlu0 %1642
      %1644 = vrot.lane.b32.xlu0 %v1556, 28
      %v1645 = vpop.permute.xlu0 %1644
      %1646 = vrot.lane.b32.xlu0 %v1557, 28
      %v1647 = vpop.permute.xlu0 %1646
      %1648 = vrot.lane.b32.xlu0 %v1558, 28
      %v1649 = vpop.permute.xlu0 %1648
      %1650 = vrot.lane.b32.xlu0 %v1559, 28
      %v1651 = vpop.permute.xlu0 %1650
      %1652 = vrot.lane.b32.xlu0 %v1560, 28
      %v1653 = vpop.permute.xlu0 %1652
      %1654 = vrot.lane.b32.xlu0 %v1561, 28
      %v1655 = vpop.permute.xlu0 %1654
      %1656 = vrot.lane.b32.xlu0 %v1562, 28
      %v1657 = vpop.permute.xlu0 %1656
      %1658 = vrot.lane.b32.xlu0 %v1563, 28
      %v1659 = vpop.permute.xlu0 %1658
      %vm1692 = vcmask 261344
      %1693 = vst.msk [vmem:[#allocation3] sm:$0xff] %vm1692, %v1597
      %1694 = vst.msk [vmem:[#allocation3 + $0x8] sm:$0xff] %vm1692, %v1599
      %1695 = vst.msk [vmem:[#allocation3 + $0x10] sm:$0xff] %vm1692, %v1601
      %1696 = vst.msk [vmem:[#allocation3 + $0x18] sm:$0xff] %vm1692, %v1603
      %1697 = vst.msk [vmem:[#allocation3 + $0x20] sm:$0xff] %vm1692, %v1605
      %1698 = vst.msk [vmem:[#allocation3 + $0x28] sm:$0xff] %vm1692, %v1607
      %1699 = vst.msk [vmem:[#allocation3 + $0x30] sm:$0xff] %vm1692, %v1609
      %1700 = vst.msk [vmem:[#allocation3 + $0x38] sm:$0xff] %vm1692, %v1611
      %1701 = vst.msk [vmem:[#allocation3 + $0x40] sm:$0xff] %vm1692, %v1613
      %1702 = vst.msk [vmem:[#allocation3 + $0x48] sm:$0xff] %vm1692, %v1615
      %1703 = vst.msk [vmem:[#allocation3 + $0x50] sm:$0xff] %vm1692, %v1617
      %1704 = vst.msk [vmem:[#allocation3 + $0x58] sm:$0xff] %vm1692, %v1619
      %1705 = vst.msk [vmem:[#allocation3 + $0x60] sm:$0xff] %vm1692, %v1621
      %1706 = vst.msk [vmem:[#allocation3 + $0x68] sm:$0xff] %vm1692, %v1623
      %1707 = vst.msk [vmem:[#allocation3 + $0x70] sm:$0xff] %vm1692, %v1625
      %1708 = vst.msk [vmem:[#allocation3 + $0x78] sm:$0xff] %vm1692, %v1627
      %1709 = vst.msk [vmem:[#allocation3 + $0x80] sm:$0xff] %vm1692, %v1629
      %1710 = vst.msk [vmem:[#allocation3 + $0x88] sm:$0xff] %vm1692, %v1631
      %1711 = vst.msk [vmem:[#allocation3 + $0x90] sm:$0xff] %vm1692, %v1633
      %1712 = vst.msk [vmem:[#allocation3 + $0x98] sm:$0xff] %vm1692, %v1635
      %1713 = vst.msk [vmem:[#allocation3 + $0xa0] sm:$0xff] %vm1692, %v1637
      %1714 = vst.msk [vmem:[#allocation3 + $0xa8] sm:$0xff] %vm1692, %v1639
      %1715 = vst.msk [vmem:[#allocation3 + $0xb0] sm:$0xff] %vm1692, %v1641
      %1716 = vst.msk [vmem:[#allocation3 + $0xb8] sm:$0xff] %vm1692, %v1643
      %1717 = vst.msk [vmem:[#allocation3 + $0xc0] sm:$0xff] %vm1692, %v1645
      %1718 = vst.msk [vmem:[#allocation3 + $0xc8] sm:$0xff] %vm1692, %v1647
      %1719 = vst.msk [vmem:[#allocation3 + $0xd0] sm:$0xff] %vm1692, %v1649
      %1720 = vst.msk [vmem:[#allocation3 + $0xd8] sm:$0xff] %vm1692, %v1651
      %1721 = vst.msk [vmem:[#allocation3 + $0xe0] sm:$0xff] %vm1692, %v1653
      %1722 = vst.msk [vmem:[#allocation3 + $0xe8] sm:$0xff] %vm1692, %v1655
      %1723 = vst.msk [vmem:[#allocation3 + $0xf0] sm:$0xff] %vm1692, %v1657
      %1724 = vst.msk [vmem:[#allocation3 + $0xf8] sm:$0xff] %vm1692, %v1659
      %v1725 = vld [vmem:[%s1338 + $0x2] sm:$0xff]
      %v1726 = vld [vmem:[%s1338 + $0xa] sm:$0xff]
      %v1727 = vld [vmem:[%s1338 + $0x1a] sm:$0xff]
      %v1728 = vld [vmem:[%s1338 + $0x22] sm:$0xff]
      %v1729 = vld [vmem:[%s1338 + $0x32] sm:$0xff]
      %v1730 = vld [vmem:[%s1338 + $0x3a] sm:$0xff]
      %v1731 = vld [vmem:[%s1338 + $0x4a] sm:$0xff]
      %v1732 = vld [vmem:[%s1338 + $0x52] sm:$0xff]
      %v1733 = vld [vmem:[%s1338 + $0x62] sm:$0xff]
      %v1734 = vld [vmem:[%s1338 + $0x6a] sm:$0xff]
      %v1735 = vld [vmem:[%s1338 + $0x7a] sm:$0xff]
      %v1736 = vld [vmem:[%s1338 + $0x82] sm:$0xff]
      %v1737 = vld [vmem:[%s1338 + $0x92] sm:$0xff]
      %v1738 = vld [vmem:[%s1338 + $0x9a] sm:$0xff]
      %v1739 = vld [vmem:[%s1338 + $0xaa] sm:$0xff]
      %v1740 = vld [vmem:[%s1338 + $0xb2] sm:$0xff]
      %v1741 = vld [vmem:[%s1338 + $0xc2] sm:$0xff]
      %v1742 = vld [vmem:[%s1338 + $0xca] sm:$0xff]
      %v1743 = vld [vmem:[%s1338 + $0xda] sm:$0xff]
      %v1744 = vld [vmem:[%s1338 + $0xe2] sm:$0xff]
      %v1745 = vld [vmem:[%s1338 + $0xf2] sm:$0xff]
      %v1746 = vld [vmem:[%s1338 + $0xfa] sm:$0xff]
      %v1747 = vld [vmem:[%s1338 + $0x10a] sm:$0xff]
      %v1748 = vld [vmem:[%s1338 + $0x112] sm:$0xff]
      %v1749 = vld [vmem:[%s1338 + $0x122] sm:$0xff]
      %v1750 = vld [vmem:[%s1338 + $0x12a] sm:$0xff]
      %v1751 = vld [vmem:[%s1338 + $0x13a] sm:$0xff]
      %v1752 = vld [vmem:[%s1338 + $0x142] sm:$0xff]
      %v1753 = vld [vmem:[%s1338 + $0x152] sm:$0xff]
      %v1754 = vld [vmem:[%s1338 + $0x15a] sm:$0xff]
      %v1755 = vld [vmem:[%s1338 + $0x16a] sm:$0xff]
      %v1756 = vld [vmem:[%s1338 + $0x172] sm:$0xff]
      %1789 = vrot.lane.b32.xlu0 %v1725, 32
      %v1790 = vpop.permute.xlu0 %1789
      %1791 = vrot.lane.b32.xlu0 %v1726, 32
      %v1792 = vpop.permute.xlu0 %1791
      %1793 = vrot.lane.b32.xlu0 %v1727, 32
      %v1794 = vpop.permute.xlu0 %1793
      %1795 = vrot.lane.b32.xlu0 %v1728, 32
      %v1796 = vpop.permute.xlu0 %1795
      %1797 = vrot.lane.b32.xlu0 %v1729, 32
      %v1798 = vpop.permute.xlu0 %1797
      %1799 = vrot.lane.b32.xlu0 %v1730, 32
      %v1800 = vpop.permute.xlu0 %1799
      %1801 = vrot.lane.b32.xlu0 %v1731, 32
      %v1802 = vpop.permute.xlu0 %1801
      %1803 = vrot.lane.b32.xlu0 %v1732, 32
      %v1804 = vpop.permute.xlu0 %1803
      %1805 = vrot.lane.b32.xlu0 %v1733, 32
      %v1806 = vpop.permute.xlu0 %1805
      %1807 = vrot.lane.b32.xlu0 %v1734, 32
      %v1808 = vpop.permute.xlu0 %1807
      %1809 = vrot.lane.b32.xlu0 %v1735, 32
      %v1810 = vpop.permute.xlu0 %1809
      %1811 = vrot.lane.b32.xlu0 %v1736, 32
      %v1812 = vpop.permute.xlu0 %1811
      %1813 = vrot.lane.b32.xlu0 %v1737, 32
      %v1814 = vpop.permute.xlu0 %1813
      %1815 = vrot.lane.b32.xlu0 %v1738, 32
      %v1816 = vpop.permute.xlu0 %1815
      %1817 = vrot.lane.b32.xlu0 %v1739, 32
      %v1818 = vpop.permute.xlu0 %1817
      %1819 = vrot.lane.b32.xlu0 %v1740, 32
      %v1820 = vpop.permute.xlu0 %1819
      %1821 = vrot.lane.b32.xlu0 %v1741, 32
      %v1822 = vpop.permute.xlu0 %1821
      %1823 = vrot.lane.b32.xlu0 %v1742, 32
      %v1824 = vpop.permute.xlu0 %1823
      %1825 = vrot.lane.b32.xlu0 %v1743, 32
      %v1826 = vpop.permute.xlu0 %1825
      %1827 = vrot.lane.b32.xlu0 %v1744, 32
      %v1828 = vpop.permute.xlu0 %1827
      %1829 = vrot.lane.b32.xlu0 %v1745, 32
      %v1830 = vpop.permute.xlu0 %1829
      %1831 = vrot.lane.b32.xlu0 %v1746, 32
      %v1832 = vpop.permute.xlu0 %1831
      %1833 = vrot.lane.b32.xlu0 %v1747, 32
      %v1834 = vpop.permute.xlu0 %1833
      %1835 = vrot.lane.b32.xlu0 %v1748, 32
      %v1836 = vpop.permute.xlu0 %1835
      %1837 = vrot.lane.b32.xlu0 %v1749, 32
      %v1838 = vpop.permute.xlu0 %1837
      %1839 = vrot.lane.b32.xlu0 %v1750, 32
      %v1840 = vpop.permute.xlu0 %1839
      %1841 = vrot.lane.b32.xlu0 %v1751, 32
      %v1842 = vpop.permute.xlu0 %1841
      %1843 = vrot.lane.b32.xlu0 %v1752, 32
      %v1844 = vpop.permute.xlu0 %1843
      %1845 = vrot.lane.b32.xlu0 %v1753, 32
      %v1846 = vpop.permute.xlu0 %1845
      %1847 = vrot.lane.b32.xlu0 %v1754, 32
      %v1848 = vpop.permute.xlu0 %1847
      %1849 = vrot.lane.b32.xlu0 %v1755, 32
      %v1850 = vpop.permute.xlu0 %1849
      %1851 = vrot.lane.b32.xlu0 %v1756, 32
      %v1852 = vpop.permute.xlu0 %1851
      %vm1885 = vcmask 294144
      %1886 = vst.msk [vmem:[#allocation3] sm:$0xff] %vm1885, %v1790
      %1887 = vst.msk [vmem:[#allocation3 + $0x8] sm:$0xff] %vm1885, %v1792
      %1888 = vst.msk [vmem:[#allocation3 + $0x10] sm:$0xff] %vm1885, %v1794
      %1889 = vst.msk [vmem:[#allocation3 + $0x18] sm:$0xff] %vm1885, %v1796
      %1890 = vst.msk [vmem:[#allocation3 + $0x20] sm:$0xff] %vm1885, %v1798
      %1891 = vst.msk [vmem:[#allocation3 + $0x28] sm:$0xff] %vm1885, %v1800
      %1892 = vst.msk [vmem:[#allocation3 + $0x30] sm:$0xff] %vm1885, %v1802
      %1893 = vst.msk [vmem:[#allocation3 + $0x38] sm:$0xff] %vm1885, %v1804
      %1894 = vst.msk [vmem:[#allocation3 + $0x40] sm:$0xff] %vm1885, %v1806
      %1895 = vst.msk [vmem:[#allocation3 + $0x48] sm:$0xff] %vm1885, %v1808
      %1896 = vst.msk [vmem:[#allocation3 + $0x50] sm:$0xff] %vm1885, %v1810
      %1897 = vst.msk [vmem:[#allocation3 + $0x58] sm:$0xff] %vm1885, %v1812
      %1898 = vst.msk [vmem:[#allocation3 + $0x60] sm:$0xff] %vm1885, %v1814
      %1899 = vst.msk [vmem:[#allocation3 + $0x68] sm:$0xff] %vm1885, %v1816
      %1900 = vst.msk [vmem:[#allocation3 + $0x70] sm:$0xff] %vm1885, %v1818
      %1901 = vst.msk [vmem:[#allocation3 + $0x78] sm:$0xff] %vm1885, %v1820
      %1902 = vst.msk [vmem:[#allocation3 + $0x80] sm:$0xff] %vm1885, %v1822
      %1903 = vst.msk [vmem:[#allocation3 + $0x88] sm:$0xff] %vm1885, %v1824
      %1904 = vst.msk [vmem:[#allocation3 + $0x90] sm:$0xff] %vm1885, %v1826
      %1905 = vst.msk [vmem:[#allocation3 + $0x98] sm:$0xff] %vm1885, %v1828
      %1906 = vst.msk [vmem:[#allocation3 + $0xa0] sm:$0xff] %vm1885, %v1830
      %1907 = vst.msk [vmem:[#allocation3 + $0xa8] sm:$0xff] %vm1885, %v1832
      %1908 = vst.msk [vmem:[#allocation3 + $0xb0] sm:$0xff] %vm1885, %v1834
      %1909 = vst.msk [vmem:[#allocation3 + $0xb8] sm:$0xff] %vm1885, %v1836
      %1910 = vst.msk [vmem:[#allocation3 + $0xc0] sm:$0xff] %vm1885, %v1838
      %1911 = vst.msk [vmem:[#allocation3 + $0xc8] sm:$0xff] %vm1885, %v1840
      %1912 = vst.msk [vmem:[#allocation3 + $0xd0] sm:$0xff] %vm1885, %v1842
      %1913 = vst.msk [vmem:[#allocation3 + $0xd8] sm:$0xff] %vm1885, %v1844
      %1914 = vst.msk [vmem:[#allocation3 + $0xe0] sm:$0xff] %vm1885, %v1846
      %1915 = vst.msk [vmem:[#allocation3 + $0xe8] sm:$0xff] %vm1885, %v1848
      %1916 = vst.msk [vmem:[#allocation3 + $0xf0] sm:$0xff] %vm1885, %v1850
      %1917 = vst.msk [vmem:[#allocation3 + $0xf8] sm:$0xff] %vm1885, %v1852
      %v1918 = vld [vmem:[#allocation3] sm:$0xff]
      %v1919 = vld [vmem:[#allocation3 + $0x8] sm:$0xff]
      %v1920 = vld [vmem:[#allocation3 + $0x10] sm:$0xff]
      %v1921 = vld [vmem:[#allocation3 + $0x18] sm:$0xff]
      %v1922 = vld [vmem:[#allocation3 + $0x20] sm:$0xff]
      %v1923 = vld [vmem:[#allocation3 + $0x28] sm:$0xff]
      %v1924 = vld [vmem:[#allocation3 + $0x30] sm:$0xff]
      %v1925 = vld [vmem:[#allocation3 + $0x38] sm:$0xff]
      %v1926 = vld [vmem:[#allocation3 + $0x40] sm:$0xff]
      %v1927 = vld [vmem:[#allocation3 + $0x48] sm:$0xff]
      %v1928 = vld [vmem:[#allocation3 + $0x50] sm:$0xff]
      %v1929 = vld [vmem:[#allocation3 + $0x58] sm:$0xff]
      %v1930 = vld [vmem:[#allocation3 + $0x60] sm:$0xff]
      %v1931 = vld [vmem:[#allocation3 + $0x68] sm:$0xff]
      %v1932 = vld [vmem:[#allocation3 + $0x70] sm:$0xff]
      %v1933 = vld [vmem:[#allocation3 + $0x78] sm:$0xff]
      %v1934 = vld [vmem:[#allocation3 + $0x80] sm:$0xff]
      %v1935 = vld [vmem:[#allocation3 + $0x88] sm:$0xff]
      %v1936 = vld [vmem:[#allocation3 + $0x90] sm:$0xff]
      %v1937 = vld [vmem:[#allocation3 + $0x98] sm:$0xff]
      %v1938 = vld [vmem:[#allocation3 + $0xa0] sm:$0xff]
      %v1939 = vld [vmem:[#allocation3 + $0xa8] sm:$0xff]
      %v1940 = vld [vmem:[#allocation3 + $0xb0] sm:$0xff]
      %v1941 = vld [vmem:[#allocation3 + $0xb8] sm:$0xff]
      %v1942 = vld [vmem:[#allocation3 + $0xc0] sm:$0xff]
      %v1943 = vld [vmem:[#allocation3 + $0xc8] sm:$0xff]
      %v1944 = vld [vmem:[#allocation3 + $0xd0] sm:$0xff]
      %v1945 = vld [vmem:[#allocation3 + $0xd8] sm:$0xff]
      %v1946 = vld [vmem:[#allocation3 + $0xe0] sm:$0xff]
      %v1947 = vld [vmem:[#allocation3 + $0xe8] sm:$0xff]
      %v1948 = vld [vmem:[#allocation3 + $0xf0] sm:$0xff]
      %v1949 = vld [vmem:[#allocation3 + $0xf8] sm:$0xff]
      %v1950 = vld [vmem:[%s1] sm:$0xff]
      %v1951 = vld [vmem:[%s1 + $0x8] sm:$0xff]
      %v1952 = vld [vmem:[%s1 + $0x10] sm:$0xff]
      %v1953 = vld [vmem:[%s1 + $0x18] sm:$0xff]
      %v1954 = vld [vmem:[%s1 + $0x20] sm:$0xf]
      %vm1955 = vcmask 293888
      %v1957 = vsel %vm1955, %v1918, 0
      %v1960 = vsel %vm1955, %v1919, 0
      %v1963 = vsel %vm1955, %v1920, 0
      %v1966 = vsel %vm1955, %v1921, 0
      %v1969 = vsel %vm1955, %v1922, 0
      %v1972 = vsel %vm1955, %v1923, 0
      %v1975 = vsel %vm1955, %v1924, 0
      %v1978 = vsel %vm1955, %v1925, 0
      %v1981 = vsel %vm1955, %v1926, 0
      %v1984 = vsel %vm1955, %v1927, 0
      %v1987 = vsel %vm1955, %v1928, 0
      %v1990 = vsel %vm1955, %v1929, 0
      %v1993 = vsel %vm1955, %v1930, 0
      %v1996 = vsel %vm1955, %v1931, 0
      %v1999 = vsel %vm1955, %v1932, 0
      %v2002 = vsel %vm1955, %v1933, 0
      %v2005 = vsel %vm1955, %v1934, 0
      %v2008 = vsel %vm1955, %v1935, 0
      %v2011 = vsel %vm1955, %v1936, 0
      %v2014 = vsel %vm1955, %v1937, 0
      %v2017 = vsel %vm1955, %v1938, 0
      %v2020 = vsel %vm1955, %v1939, 0
      %v2023 = vsel %vm1955, %v1940, 0
      %v2026 = vsel %vm1955, %v1941, 0
      %v2029 = vsel %vm1955, %v1942, 0
      %v2032 = vsel %vm1955, %v1943, 0
      %v2035 = vsel %vm1955, %v1944, 0
      %v2038 = vsel %vm1955, %v1945, 0
      %v2041 = vsel %vm1955, %v1946, 0
      %v2044 = vsel %vm1955, %v1947, 0
      %v2047 = vsel %vm1955, %v1948, 0
      %v2050 = vsel %vm1955, %v1949, 0
      %vm2052 = vcmask 1043456
      %v2054 = vsel %vm2052, %v1954, 0
      %2056 = vmatpush.msra.mxu0 0.0
      %2057 = vmatpush.msra.mxu0 0.0
      %2058 = vmatpush.msra.mxu0 0.0
      %2059 = vmatpush.msra.mxu0 0.0
      %2060 = vmatpush.msra.mxu0 0.0
      %2061 = vmatpush.msra.mxu0 0.0
      %2062 = vmatpush.msra.mxu0 0.0
      %2063 = vmatpush.msra.mxu0 0.0
      %2064 = vmatpush.msra.mxu0 0.0
      %2065 = vmatpush.msra.mxu0 0.0
      %2066 = vmatpush.msra.mxu0 0.0
      %2067 = vmatpush.msra.mxu0 %v2054
      %2068 = vmatpush.msra.mxu0 %v1953
      %2069 = vmatpush.msra.mxu0 %v1952
      %2070 = vmatpush.msra.mxu0 %v1951
      %2071 = vmatpush.msra.mxu0 %v1950
      %2072 = vmatmul.f32.gmra.mxu0 %v1957
      %v2073 = vpop.f32.mrf.mxu0
      %v2074 = vadd.f32 0.0, %v2073
      %2075 = vmatmul.f32.gmra.mxu0 %v1960
      %v2076 = vpop.f32.mrf.mxu0
      %v2077 = vadd.f32 0.0, %v2076
      %2078 = vmatmul.f32.gmra.mxu0 %v1963
      %v2079 = vpop.f32.mrf.mxu0
      %v2080 = vadd.f32 0.0, %v2079
      %2081 = vmatmul.f32.gmra.mxu0 %v1966
      %v2082 = vpop.f32.mrf.mxu0
      %v2083 = vadd.f32 0.0, %v2082
      %2084 = vmatmul.f32.gmra.mxu0 %v1969
      %v2085 = vpop.f32.mrf.mxu0
      %v2086 = vadd.f32 0.0, %v2085
      %2087 = vmatmul.f32.gmra.mxu0 %v1972
      %v2088 = vpop.f32.mrf.mxu0
      %v2089 = vadd.f32 0.0, %v2088
      %2090 = vmatmul.f32.gmra.mxu0 %v1975
      %v2091 = vpop.f32.mrf.mxu0
      %v2092 = vadd.f32 0.0, %v2091
      %2093 = vmatmul.f32.gmra.mxu0 %v1978
      %v2094 = vpop.f32.mrf.mxu0
      %v2095 = vadd.f32 0.0, %v2094
      %2096 = vmatmul.f32.gmra.mxu0 %v1981
      %v2097 = vpop.f32.mrf.mxu0
      %v2098 = vadd.f32 0.0, %v2097
      %2099 = vmatmul.f32.gmra.mxu0 %v1984
      %v2100 = vpop.f32.mrf.mxu0
      %v2101 = vadd.f32 0.0, %v2100
      %2102 = vmatmul.f32.gmra.mxu0 %v1987
      %v2103 = vpop.f32.mrf.mxu0
      %v2104 = vadd.f32 0.0, %v2103
      %2105 = vmatmul.f32.gmra.mxu0 %v1990
      %v2106 = vpop.f32.mrf.mxu0
      %v2107 = vadd.f32 0.0, %v2106
      %2108 = vmatmul.f32.gmra.mxu0 %v1993
      %v2109 = vpop.f32.mrf.mxu0
      %v2110 = vadd.f32 0.0, %v2109
      %2111 = vmatmul.f32.gmra.mxu0 %v1996
      %v2112 = vpop.f32.mrf.mxu0
      %v2113 = vadd.f32 0.0, %v2112
      %2114 = vmatmul.f32.gmra.mxu0 %v1999
      %v2115 = vpop.f32.mrf.mxu0
      %v2116 = vadd.f32 0.0, %v2115
      %2117 = vmatmul.f32.gmra.mxu0 %v2002
      %v2118 = vpop.f32.mrf.mxu0
      %v2119 = vadd.f32 0.0, %v2118
      %2120 = vmatmul.f32.gmra.mxu0 %v2005
      %v2121 = vpop.f32.mrf.mxu0
      %v2122 = vadd.f32 0.0, %v2121
      %2123 = vmatmul.f32.gmra.mxu0 %v2008
      %v2124 = vpop.f32.mrf.mxu0
      %v2125 = vadd.f32 0.0, %v2124
      %2126 = vmatmul.f32.gmra.mxu0 %v2011
      %v2127 = vpop.f32.mrf.mxu0
      %v2128 = vadd.f32 0.0, %v2127
      %2129 = vmatmul.f32.gmra.mxu0 %v2014
      %v2130 = vpop.f32.mrf.mxu0
      %v2131 = vadd.f32 0.0, %v2130
      %2132 = vmatmul.f32.gmra.mxu0 %v2017
      %v2133 = vpop.f32.mrf.mxu0
      %v2134 = vadd.f32 0.0, %v2133
      %2135 = vmatmul.f32.gmra.mxu0 %v2020
      %v2136 = vpop.f32.mrf.mxu0
      %v2137 = vadd.f32 0.0, %v2136
      %2138 = vmatmul.f32.gmra.mxu0 %v2023
      %v2139 = vpop.f32.mrf.mxu0
      %v2140 = vadd.f32 0.0, %v2139
      %2141 = vmatmul.f32.gmra.mxu0 %v2026
      %v2142 = vpop.f32.mrf.mxu0
      %v2143 = vadd.f32 0.0, %v2142
      %2144 = vmatmul.f32.gmra.mxu0 %v2029
      %v2145 = vpop.f32.mrf.mxu0
      %v2146 = vadd.f32 0.0, %v2145
      %2147 = vmatmul.f32.gmra.mxu0 %v2032
      %v2148 = vpop.f32.mrf.mxu0
      %v2149 = vadd.f32 0.0, %v2148
      %2150 = vmatmul.f32.gmra.mxu0 %v2035
      %v2151 = vpop.f32.mrf.mxu0
      %v2152 = vadd.f32 0.0, %v2151
      %2153 = vmatmul.f32.gmra.mxu0 %v2038
      %v2154 = vpop.f32.mrf.mxu0
      %v2155 = vadd.f32 0.0, %v2154
      %2156 = vmatmul.f32.gmra.mxu0 %v2041
      %v2157 = vpop.f32.mrf.mxu0
      %v2158 = vadd.f32 0.0, %v2157
      %2159 = vmatmul.f32.gmra.mxu0 %v2044
      %v2160 = vpop.f32.mrf.mxu0
      %v2161 = vadd.f32 0.0, %v2160
      %2162 = vmatmul.f32.gmra.mxu0 %v2047
      %v2163 = vpop.f32.mrf.mxu0
      %v2164 = vadd.f32 0.0, %v2163
      %2165 = vmatmul.f32.gmra.mxu0 %v2050
      %v2166 = vpop.f32.mrf.mxu0
      %v2167 = vadd.f32 0.0, %v2166
      %2168 = vdwg.mxu0
      %v2169 = vld [vmem:[%s3] sm:$0x1]
      %v2170 = vperm.slane %v2169, 0
      %v2171 = vmul.f32 %v2074, %v2170
      %v2172 = vmul.f32 %v2077, %v2170
      %v2173 = vmul.f32 %v2080, %v2170
      %v2174 = vmul.f32 %v2083, %v2170
      %v2175 = vmul.f32 %v2086, %v2170
      %v2176 = vmul.f32 %v2089, %v2170
      %v2177 = vmul.f32 %v2092, %v2170
      %v2178 = vmul.f32 %v2095, %v2170
      %v2179 = vmul.f32 %v2098, %v2170
      %v2180 = vmul.f32 %v2101, %v2170
      %v2181 = vmul.f32 %v2104, %v2170
      %v2182 = vmul.f32 %v2107, %v2170
      %v2183 = vmul.f32 %v2110, %v2170
      %v2184 = vmul.f32 %v2113, %v2170
      %v2185 = vmul.f32 %v2116, %v2170
      %v2186 = vmul.f32 %v2119, %v2170
      %v2187 = vmul.f32 %v2122, %v2170
      %v2188 = vmul.f32 %v2125, %v2170
      %v2189 = vmul.f32 %v2128, %v2170
      %v2190 = vmul.f32 %v2131, %v2170
      %v2191 = vmul.f32 %v2134, %v2170
      %v2192 = vmul.f32 %v2137, %v2170
      %v2193 = vmul.f32 %v2140, %v2170
      %v2194 = vmul.f32 %v2143, %v2170
      %v2195 = vmul.f32 %v2146, %v2170
      %v2196 = vmul.f32 %v2149, %v2170
      %v2197 = vmul.f32 %v2152, %v2170
      %v2198 = vmul.f32 %v2155, %v2170
      %v2199 = vmul.f32 %v2158, %v2170
      %v2200 = vmul.f32 %v2161, %v2170
      %v2201 = vmul.f32 %v2164, %v2170
      %v2202 = vmul.f32 %v2167, %v2170
      %v2203 = vld [vmem:[%s3 + $0x1] sm:$0x1]
      %v2204 = vperm.slane %v2203, 0
      %v2205 = vadd.f32 %v2171, %v2204
      %v2206 = vadd.f32 %v2172, %v2204
      %v2207 = vadd.f32 %v2173, %v2204
      %v2208 = vadd.f32 %v2174, %v2204
      %v2209 = vadd.f32 %v2175, %v2204
      %v2210 = vadd.f32 %v2176, %v2204
      %v2211 = vadd.f32 %v2177, %v2204
      %v2212 = vadd.f32 %v2178, %v2204
      %v2213 = vadd.f32 %v2179, %v2204
      %v2214 = vadd.f32 %v2180, %v2204
      %v2215 = vadd.f32 %v2181, %v2204
      %v2216 = vadd.f32 %v2182, %v2204
      %v2217 = vadd.f32 %v2183, %v2204
      %v2218 = vadd.f32 %v2184, %v2204
      %v2219 = vadd.f32 %v2185, %v2204
      %v2220 = vadd.f32 %v2186, %v2204
      %v2221 = vadd.f32 %v2187, %v2204
      %v2222 = vadd.f32 %v2188, %v2204
      %v2223 = vadd.f32 %v2189, %v2204
      %v2224 = vadd.f32 %v2190, %v2204
      %v2225 = vadd.f32 %v2191, %v2204
      %v2226 = vadd.f32 %v2192, %v2204
      %v2227 = vadd.f32 %v2193, %v2204
      %v2228 = vadd.f32 %v2194, %v2204
      %v2229 = vadd.f32 %v2195, %v2204
      %v2230 = vadd.f32 %v2196, %v2204
      %v2231 = vadd.f32 %v2197, %v2204
      %v2232 = vadd.f32 %v2198, %v2204
      %v2233 = vadd.f32 %v2199, %v2204
      %v2234 = vadd.f32 %v2200, %v2204
      %v2235 = vadd.f32 %v2201, %v2204
      %v2236 = vadd.f32 %v2202, %v2204
      %v2237 = vmax.f32 %v2205, 0.0
      %v2238 = vmax.f32 %v2206, 0.0
      %v2239 = vmax.f32 %v2207, 0.0
      %v2240 = vmax.f32 %v2208, 0.0
      %v2241 = vmax.f32 %v2209, 0.0
      %v2242 = vmax.f32 %v2210, 0.0
      %v2243 = vmax.f32 %v2211, 0.0
      %v2244 = vmax.f32 %v2212, 0.0
      %v2245 = vmax.f32 %v2213, 0.0
      %v2246 = vmax.f32 %v2214, 0.0
      %v2247 = vmax.f32 %v2215, 0.0
      %v2248 = vmax.f32 %v2216, 0.0
      %v2249 = vmax.f32 %v2217, 0.0
      %v2250 = vmax.f32 %v2218, 0.0
      %v2251 = vmax.f32 %v2219, 0.0
      %v2252 = vmax.f32 %v2220, 0.0
      %v2253 = vmax.f32 %v2221, 0.0
      %v2254 = vmax.f32 %v2222, 0.0
      %v2255 = vmax.f32 %v2223, 0.0
      %v2256 = vmax.f32 %v2224, 0.0
      %v2257 = vmax.f32 %v2225, 0.0
      %v2258 = vmax.f32 %v2226, 0.0
      %v2259 = vmax.f32 %v2227, 0.0
      %v2260 = vmax.f32 %v2228, 0.0
      %v2261 = vmax.f32 %v2229, 0.0
      %v2262 = vmax.f32 %v2230, 0.0
      %v2263 = vmax.f32 %v2231, 0.0
      %v2264 = vmax.f32 %v2232, 0.0
      %v2265 = vmax.f32 %v2233, 0.0
      %v2266 = vmax.f32 %v2234, 0.0
      %v2267 = vmax.f32 %v2235, 0.0
      %v2268 = vmax.f32 %v2236, 0.0
      %2269 = vst.msk [vmem:[%s276 + $0x1] sm:$0xff] %vm198, %v2237
      %2270 = vst.msk [vmem:[%s276 + $0x9] sm:$0xff] %vm198, %v2238
      %2271 = vst.msk [vmem:[%s276 + $0x19] sm:$0xff] %vm198, %v2239
      %2272 = vst.msk [vmem:[%s276 + $0x21] sm:$0xff] %vm198, %v2240
      %2273 = vst.msk [vmem:[%s276 + $0x31] sm:$0xff] %vm198, %v2241
      %2274 = vst.msk [vmem:[%s276 + $0x39] sm:$0xff] %vm198, %v2242
      %2275 = vst.msk [vmem:[%s276 + $0x49] sm:$0xff] %vm198, %v2243
      %2276 = vst.msk [vmem:[%s276 + $0x51] sm:$0xff] %vm198, %v2244
      %2277 = vst.msk [vmem:[%s276 + $0x61] sm:$0xff] %vm198, %v2245
      %2278 = vst.msk [vmem:[%s276 + $0x69] sm:$0xff] %vm198, %v2246
      %2279 = vst.msk [vmem:[%s276 + $0x79] sm:$0xff] %vm198, %v2247
      %2280 = vst.msk [vmem:[%s276 + $0x81] sm:$0xff] %vm198, %v2248
      %2281 = vst.msk [vmem:[%s276 + $0x91] sm:$0xff] %vm198, %v2249
      %2282 = vst.msk [vmem:[%s276 + $0x99] sm:$0xff] %vm198, %v2250
      %2283 = vst.msk [vmem:[%s276 + $0xa9] sm:$0xff] %vm198, %v2251
      %2284 = vst.msk [vmem:[%s276 + $0xb1] sm:$0xff] %vm198, %v2252
      %2285 = vst.msk [vmem:[%s276 + $0xc1] sm:$0xff] %vm198, %v2253
      %2286 = vst.msk [vmem:[%s276 + $0xc9] sm:$0xff] %vm198, %v2254
      %2287 = vst.msk [vmem:[%s276 + $0xd9] sm:$0xff] %vm198, %v2255
      %2288 = vst.msk [vmem:[%s276 + $0xe1] sm:$0xff] %vm198, %v2256
      %2289 = vst.msk [vmem:[%s276 + $0xf1] sm:$0xff] %vm198, %v2257
      %2290 = vst.msk [vmem:[%s276 + $0xf9] sm:$0xff] %vm198, %v2258
      %2291 = vst.msk [vmem:[%s276 + $0x109] sm:$0xff] %vm198, %v2259
      %2292 = vst.msk [vmem:[%s276 + $0x111] sm:$0xff] %vm198, %v2260
      %2293 = vst.msk [vmem:[%s276 + $0x121] sm:$0xff] %vm198, %v2261
      %2294 = vst.msk [vmem:[%s276 + $0x129] sm:$0xff] %vm198, %v2262
      %2295 = vst.msk [vmem:[%s276 + $0x139] sm:$0xff] %vm198, %v2263
      %2296 = vst.msk [vmem:[%s276 + $0x141] sm:$0xff] %vm198, %v2264
      %2297 = vst.msk [vmem:[%s276 + $0x151] sm:$0xff] %vm198, %v2265
      %2298 = vst.msk [vmem:[%s276 + $0x159] sm:$0xff] %vm198, %v2266
      %2299 = vst.msk [vmem:[%s276 + $0x169] sm:$0xff] %vm198, %v2267
      %2300 = vst.msk [vmem:[%s276 + $0x171] sm:$0xff] %vm198, %v2268
      %v2301 = vld [vmem:[#allocation2] sm:$0xff]
      %v2302 = vld [vmem:[#allocation2 + $0x8] sm:$0xff]
      %v2303 = vld [vmem:[#allocation2 + $0x18] sm:$0xff]
      %v2304 = vld [vmem:[#allocation2 + $0x20] sm:$0xff]
      %v2305 = vld [vmem:[#allocation2 + $0x30] sm:$0xff]
      %v2306 = vld [vmem:[#allocation2 + $0x38] sm:$0xff]
      %v2307 = vld [vmem:[#allocation2 + $0x48] sm:$0xff]
      %v2308 = vld [vmem:[#allocation2 + $0x50] sm:$0xff]
      %v2309 = vld [vmem:[#allocation2 + $0x60] sm:$0xff]
      %v2310 = vld [vmem:[#allocation2 + $0x68] sm:$0xff]
      %v2311 = vld [vmem:[#allocation2 + $0x78] sm:$0xff]
      %v2312 = vld [vmem:[#allocation2 + $0x80] sm:$0xff]
      %v2313 = vld [vmem:[#allocation2 + $0x90] sm:$0xff]
      %v2314 = vld [vmem:[#allocation2 + $0x98] sm:$0xff]
      %v2315 = vld [vmem:[#allocation2 + $0xa8] sm:$0xff]
      %v2316 = vld [vmem:[#allocation2 + $0xb0] sm:$0xff]
      %v2317 = vld [vmem:[#allocation2 + $0xc0] sm:$0xff]
      %v2318 = vld [vmem:[#allocation2 + $0xc8] sm:$0xff]
      %v2319 = vld [vmem:[#allocation2 + $0xd8] sm:$0xff]
      %v2320 = vld [vmem:[#allocation2 + $0xe0] sm:$0xff]
      %v2321 = vld [vmem:[#allocation2 + $0xf0] sm:$0xff]
      %v2322 = vld [vmem:[#allocation2 + $0xf8] sm:$0xff]
      %v2323 = vld [vmem:[#allocation2 + $0x108] sm:$0xff]
      %v2324 = vld [vmem:[#allocation2 + $0x110] sm:$0xff]
      %v2325 = vld [vmem:[#allocation2 + $0x120] sm:$0xff]
      %v2326 = vld [vmem:[#allocation2 + $0x128] sm:$0xff]
      %v2327 = vld [vmem:[#allocation2 + $0x138] sm:$0xff]
      %v2328 = vld [vmem:[#allocation2 + $0x140] sm:$0xff]
      %v2329 = vld [vmem:[#allocation2 + $0x150] sm:$0xff]
      %v2330 = vld [vmem:[#allocation2 + $0x158] sm:$0xff]
      %v2331 = vld [vmem:[#allocation2 + $0x168] sm:$0xff]
      %v2332 = vld [vmem:[#allocation2 + $0x170] sm:$0xff]
      %2333 = vst.msk [vmem:[#allocation3] sm:$0xff] %vm198, %v2301
      %2334 = vst.msk [vmem:[#allocation3 + $0x8] sm:$0xff] %vm198, %v2302
      %2335 = vst.msk [vmem:[#allocation3 + $0x10] sm:$0xff] %vm198, %v2303
      %2336 = vst.msk [vmem:[#allocation3 + $0x18] sm:$0xff] %vm198, %v2304
      %2337 = vst.msk [vmem:[#allocation3 + $0x20] sm:$0xff] %vm198, %v2305
      %2338 = vst.msk [vmem:[#allocation3 + $0x28] sm:$0xff] %vm198, %v2306
      %2339 = vst.msk [vmem:[#allocation3 + $0x30] sm:$0xff] %vm198, %v2307
      %2340 = vst.msk [vmem:[#allocation3 + $0x38] sm:$0xff] %vm198, %v2308
      %2341 = vst.msk [vmem:[#allocation3 + $0x40] sm:$0xff] %vm198, %v2309
      %2342 = vst.msk [vmem:[#allocation3 + $0x48] sm:$0xff] %vm198, %v2310
      %2343 = vst.msk [vmem:[#allocation3 + $0x50] sm:$0xff] %vm198, %v2311
      %2344 = vst.msk [vmem:[#allocation3 + $0x58] sm:$0xff] %vm198, %v2312
      %2345 = vst.msk [vmem:[#allocation3 + $0x60] sm:$0xff] %vm198, %v2313
      %2346 = vst.msk [vmem:[#allocation3 + $0x68] sm:$0xff] %vm198, %v2314
      %2347 = vst.msk [vmem:[#allocation3 + $0x70] sm:$0xff] %vm198, %v2315
      %2348 = vst.msk [vmem:[#allocation3 + $0x78] sm:$0xff] %vm198, %v2316
      %2349 = vst.msk [vmem:[#allocation3 + $0x80] sm:$0xff] %vm198, %v2317
      %2350 = vst.msk [vmem:[#allocation3 + $0x88] sm:$0xff] %vm198, %v2318
      %2351 = vst.msk [vmem:[#allocation3 + $0x90] sm:$0xff] %vm198, %v2319
      %2352 = vst.msk [vmem:[#allocation3 + $0x98] sm:$0xff] %vm198, %v2320
      %2353 = vst.msk [vmem:[#allocation3 + $0xa0] sm:$0xff] %vm198, %v2321
      %2354 = vst.msk [vmem:[#allocation3 + $0xa8] sm:$0xff] %vm198, %v2322
      %2355 = vst.msk [vmem:[#allocation3 + $0xb0] sm:$0xff] %vm198, %v2323
      %2356 = vst.msk [vmem:[#allocation3 + $0xb8] sm:$0xff] %vm198, %v2324
      %2357 = vst.msk [vmem:[#allocation3 + $0xc0] sm:$0xff] %vm198, %v2325
      %2358 = vst.msk [vmem:[#allocation3 + $0xc8] sm:$0xff] %vm198, %v2326
      %2359 = vst.msk [vmem:[#allocation3 + $0xd0] sm:$0xff] %vm198, %v2327
      %2360 = vst.msk [vmem:[#allocation3 + $0xd8] sm:$0xff] %vm198, %v2328
      %2361 = vst.msk [vmem:[#allocation3 + $0xe0] sm:$0xff] %vm198, %v2329
      %2362 = vst.msk [vmem:[#allocation3 + $0xe8] sm:$0xff] %vm198, %v2330
      %2363 = vst.msk [vmem:[#allocation3 + $0xf0] sm:$0xff] %vm198, %v2331
      %2364 = vst.msk [vmem:[#allocation3 + $0xf8] sm:$0xff] %vm198, %v2332
      %v2365 = vld [vmem:[#allocation2 + $0x1] sm:$0xff]
      %v2366 = vld [vmem:[#allocation2 + $0x9] sm:$0xff]
      %v2367 = vld [vmem:[#allocation2 + $0x19] sm:$0xff]
      %v2368 = vld [vmem:[#allocation2 + $0x21] sm:$0xff]
      %v2369 = vld [vmem:[#allocation2 + $0x31] sm:$0xff]
      %v2370 = vld [vmem:[#allocation2 + $0x39] sm:$0xff]
      %v2371 = vld [vmem:[#allocation2 + $0x49] sm:$0xff]
      %v2372 = vld [vmem:[#allocation2 + $0x51] sm:$0xff]
      %v2373 = vld [vmem:[#allocation2 + $0x61] sm:$0xff]
      %v2374 = vld [vmem:[#allocation2 + $0x69] sm:$0xff]
      %v2375 = vld [vmem:[#allocation2 + $0x79] sm:$0xff]
      %v2376 = vld [vmem:[#allocation2 + $0x81] sm:$0xff]
      %v2377 = vld [vmem:[#allocation2 + $0x91] sm:$0xff]
      %v2378 = vld [vmem:[#allocation2 + $0x99] sm:$0xff]
      %v2379 = vld [vmem:[#allocation2 + $0xa9] sm:$0xff]
      %v2380 = vld [vmem:[#allocation2 + $0xb1] sm:$0xff]
      %v2381 = vld [vmem:[#allocation2 + $0xc1] sm:$0xff]
      %v2382 = vld [vmem:[#allocation2 + $0xc9] sm:$0xff]
      %v2383 = vld [vmem:[#allocation2 + $0xd9] sm:$0xff]
      %v2384 = vld [vmem:[#allocation2 + $0xe1] sm:$0xff]
      %v2385 = vld [vmem:[#allocation2 + $0xf1] sm:$0xff]
      %v2386 = vld [vmem:[#allocation2 + $0xf9] sm:$0xff]
      %v2387 = vld [vmem:[#allocation2 + $0x109] sm:$0xff]
      %v2388 = vld [vmem:[#allocation2 + $0x111] sm:$0xff]
      %v2389 = vld [vmem:[#allocation2 + $0x121] sm:$0xff]
      %v2390 = vld [vmem:[#allocation2 + $0x129] sm:$0xff]
      %v2391 = vld [vmem:[#allocation2 + $0x139] sm:$0xff]
      %v2392 = vld [vmem:[#allocation2 + $0x141] sm:$0xff]
      %v2393 = vld [vmem:[#allocation2 + $0x151] sm:$0xff]
      %v2394 = vld [vmem:[#allocation2 + $0x159] sm:$0xff]
      %v2395 = vld [vmem:[#allocation2 + $0x169] sm:$0xff]
      %v2396 = vld [vmem:[#allocation2 + $0x171] sm:$0xff]
      %2429 = vrot.lane.b32.xlu0 %v2365, 4
      %v2430 = vpop.permute.xlu0 %2429
      %2431 = vrot.lane.b32.xlu0 %v2366, 4
      %v2432 = vpop.permute.xlu0 %2431
      %2433 = vrot.lane.b32.xlu0 %v2367, 4
      %v2434 = vpop.permute.xlu0 %2433
      %2435 = vrot.lane.b32.xlu0 %v2368, 4
      %v2436 = vpop.permute.xlu0 %2435
      %2437 = vrot.lane.b32.xlu0 %v2369, 4
      %v2438 = vpop.permute.xlu0 %2437
      %2439 = vrot.lane.b32.xlu0 %v2370, 4
      %v2440 = vpop.permute.xlu0 %2439
      %2441 = vrot.lane.b32.xlu0 %v2371, 4
      %v2442 = vpop.permute.xlu0 %2441
      %2443 = vrot.lane.b32.xlu0 %v2372, 4
      %v2444 = vpop.permute.xlu0 %2443
      %2445 = vrot.lane.b32.xlu0 %v2373, 4
      %v2446 = vpop.permute.xlu0 %2445
      %2447 = vrot.lane.b32.xlu0 %v2374, 4
      %v2448 = vpop.permute.xlu0 %2447
      %2449 = vrot.lane.b32.xlu0 %v2375, 4
      %v2450 = vpop.permute.xlu0 %2449
      %2451 = vrot.lane.b32.xlu0 %v2376, 4
      %v2452 = vpop.permute.xlu0 %2451
      %2453 = vrot.lane.b32.xlu0 %v2377, 4
      %v2454 = vpop.permute.xlu0 %2453
      %2455 = vrot.lane.b32.xlu0 %v2378, 4
      %v2456 = vpop.permute.xlu0 %2455
      %2457 = vrot.lane.b32.xlu0 %v2379, 4
      %v2458 = vpop.permute.xlu0 %2457
      %2459 = vrot.lane.b32.xlu0 %v2380, 4
      %v2460 = vpop.permute.xlu0 %2459
      %2461 = vrot.lane.b32.xlu0 %v2381, 4
      %v2462 = vpop.permute.xlu0 %2461
      %2463 = vrot.lane.b32.xlu0 %v2382, 4
      %v2464 = vpop.permute.xlu0 %2463
      %2465 = vrot.lane.b32.xlu0 %v2383, 4
      %v2466 = vpop.permute.xlu0 %2465
      %2467 = vrot.lane.b32.xlu0 %v2384, 4
      %v2468 = vpop.permute.xlu0 %2467
      %2469 = vrot.lane.b32.xlu0 %v2385, 4
      %v2470 = vpop.permute.xlu0 %2469
      %2471 = vrot.lane.b32.xlu0 %v2386, 4
      %v2472 = vpop.permute.xlu0 %2471
      %2473 = vrot.lane.b32.xlu0 %v2387, 4
      %v2474 = vpop.permute.xlu0 %2473
      %2475 = vrot.lane.b32.xlu0 %v2388, 4
      %v2476 = vpop.permute.xlu0 %2475
      %2477 = vrot.lane.b32.xlu0 %v2389, 4
      %v2478 = vpop.permute.xlu0 %2477
      %2479 = vrot.lane.b32.xlu0 %v2390, 4
      %v2480 = vpop.permute.xlu0 %2479
      %2481 = vrot.lane.b32.xlu0 %v2391, 4
      %v2482 = vpop.permute.xlu0 %2481
      %2483 = vrot.lane.b32.xlu0 %v2392, 4
      %v2484 = vpop.permute.xlu0 %2483
      %2485 = vrot.lane.b32.xlu0 %v2393, 4
      %v2486 = vpop.permute.xlu0 %2485
      %2487 = vrot.lane.b32.xlu0 %v2394, 4
      %v2488 = vpop.permute.xlu0 %2487
      %2489 = vrot.lane.b32.xlu0 %v2395, 4
      %v2490 = vpop.permute.xlu0 %2489
      %2491 = vrot.lane.b32.xlu0 %v2396, 4
      %v2492 = vpop.permute.xlu0 %2491
      %2525 = vst.msk [vmem:[#allocation3] sm:$0xff] %vm533, %v2430
      %2526 = vst.msk [vmem:[#allocation3 + $0x8] sm:$0xff] %vm533, %v2432
      %2527 = vst.msk [vmem:[#allocation3 + $0x10] sm:$0xff] %vm533, %v2434
      %2528 = vst.msk [vmem:[#allocation3 + $0x18] sm:$0xff] %vm533, %v2436
      %2529 = vst.msk [vmem:[#allocation3 + $0x20] sm:$0xff] %vm533, %v2438
      %2530 = vst.msk [vmem:[#allocation3 + $0x28] sm:$0xff] %vm533, %v2440
      %2531 = vst.msk [vmem:[#allocation3 + $0x30] sm:$0xff] %vm533, %v2442
      %2532 = vst.msk [vmem:[#allocation3 + $0x38] sm:$0xff] %vm533, %v2444
      %2533 = vst.msk [vmem:[#allocation3 + $0x40] sm:$0xff] %vm533, %v2446
      %2534 = vst.msk [vmem:[#allocation3 + $0x48] sm:$0xff] %vm533, %v2448
      %2535 = vst.msk [vmem:[#allocation3 + $0x50] sm:$0xff] %vm533, %v2450
      %2536 = vst.msk [vmem:[#allocation3 + $0x58] sm:$0xff] %vm533, %v2452
      %2537 = vst.msk [vmem:[#allocation3 + $0x60] sm:$0xff] %vm533, %v2454
      %2538 = vst.msk [vmem:[#allocation3 + $0x68] sm:$0xff] %vm533, %v2456
      %2539 = vst.msk [vmem:[#allocation3 + $0x70] sm:$0xff] %vm533, %v2458
      %2540 = vst.msk [vmem:[#allocation3 + $0x78] sm:$0xff] %vm533, %v2460
      %2541 = vst.msk [vmem:[#allocation3 + $0x80] sm:$0xff] %vm533, %v2462
      %2542 = vst.msk [vmem:[#allocation3 + $0x88] sm:$0xff] %vm533, %v2464
      %2543 = vst.msk [vmem:[#allocation3 + $0x90] sm:$0xff] %vm533, %v2466
      %2544 = vst.msk [vmem:[#allocation3 + $0x98] sm:$0xff] %vm533, %v2468
      %2545 = vst.msk [vmem:[#allocation3 + $0xa0] sm:$0xff] %vm533, %v2470
      %2546 = vst.msk [vmem:[#allocation3 + $0xa8] sm:$0xff] %vm533, %v2472
      %2547 = vst.msk [vmem:[#allocation3 + $0xb0] sm:$0xff] %vm533, %v2474
      %2548 = vst.msk [vmem:[#allocation3 + $0xb8] sm:$0xff] %vm533, %v2476
      %2549 = vst.msk [vmem:[#allocation3 + $0xc0] sm:$0xff] %vm533, %v2478
      %2550 = vst.msk [vmem:[#allocation3 + $0xc8] sm:$0xff] %vm533, %v2480
      %2551 = vst.msk [vmem:[#allocation3 + $0xd0] sm:$0xff] %vm533, %v2482
      %2552 = vst.msk [vmem:[#allocation3 + $0xd8] sm:$0xff] %vm533, %v2484
      %2553 = vst.msk [vmem:[#allocation3 + $0xe0] sm:$0xff] %vm533, %v2486
      %2554 = vst.msk [vmem:[#allocation3 + $0xe8] sm:$0xff] %vm533, %v2488
      %2555 = vst.msk [vmem:[#allocation3 + $0xf0] sm:$0xff] %vm533, %v2490
      %2556 = vst.msk [vmem:[#allocation3 + $0xf8] sm:$0xff] %vm533, %v2492
      %v2557 = vld [vmem:[#allocation2 + $0x2] sm:$0xff]
      %v2558 = vld [vmem:[#allocation2 + $0xa] sm:$0xff]
      %v2559 = vld [vmem:[#allocation2 + $0x1a] sm:$0xff]
      %v2560 = vld [vmem:[#allocation2 + $0x22] sm:$0xff]
      %v2561 = vld [vmem:[#allocation2 + $0x32] sm:$0xff]
      %v2562 = vld [vmem:[#allocation2 + $0x3a] sm:$0xff]
      %v2563 = vld [vmem:[#allocation2 + $0x4a] sm:$0xff]
      %v2564 = vld [vmem:[#allocation2 + $0x52] sm:$0xff]
      %v2565 = vld [vmem:[#allocation2 + $0x62] sm:$0xff]
      %v2566 = vld [vmem:[#allocation2 + $0x6a] sm:$0xff]
      %v2567 = vld [vmem:[#allocation2 + $0x7a] sm:$0xff]
      %v2568 = vld [vmem:[#allocation2 + $0x82] sm:$0xff]
      %v2569 = vld [vmem:[#allocation2 + $0x92] sm:$0xff]
      %v2570 = vld [vmem:[#allocation2 + $0x9a] sm:$0xff]
      %v2571 = vld [vmem:[#allocation2 + $0xaa] sm:$0xff]
      %v2572 = vld [vmem:[#allocation2 + $0xb2] sm:$0xff]
      %v2573 = vld [vmem:[#allocation2 + $0xc2] sm:$0xff]
      %v2574 = vld [vmem:[#allocation2 + $0xca] sm:$0xff]
      %v2575 = vld [vmem:[#allocation2 + $0xda] sm:$0xff]
      %v2576 = vld [vmem:[#allocation2 + $0xe2] sm:$0xff]
      %v2577 = vld [vmem:[#allocation2 + $0xf2] sm:$0xff]
      %v2578 = vld [vmem:[#allocation2 + $0xfa] sm:$0xff]
      %v2579 = vld [vmem:[#allocation2 + $0x10a] sm:$0xff]
      %v2580 = vld [vmem:[#allocation2 + $0x112] sm:$0xff]
      %v2581 = vld [vmem:[#allocation2 + $0x122] sm:$0xff]
      %v2582 = vld [vmem:[#allocation2 + $0x12a] sm:$0xff]
      %v2583 = vld [vmem:[#allocation2 + $0x13a] sm:$0xff]
      %v2584 = vld [vmem:[#allocation2 + $0x142] sm:$0xff]
      %v2585 = vld [vmem:[#allocation2 + $0x152] sm:$0xff]
      %v2586 = vld [vmem:[#allocation2 + $0x15a] sm:$0xff]
      %v2587 = vld [vmem:[#allocation2 + $0x16a] sm:$0xff]
      %v2588 = vld [vmem:[#allocation2 + $0x172] sm:$0xff]
      %2621 = vrot.lane.b32.xlu0 %v2557, 8
      %v2622 = vpop.permute.xlu0 %2621
      %2623 = vrot.lane.b32.xlu0 %v2558, 8
      %v2624 = vpop.permute.xlu0 %2623
      %2625 = vrot.lane.b32.xlu0 %v2559, 8
      %v2626 = vpop.permute.xlu0 %2625
      %2627 = vrot.lane.b32.xlu0 %v2560, 8
      %v2628 = vpop.permute.xlu0 %2627
      %2629 = vrot.lane.b32.xlu0 %v2561, 8
      %v2630 = vpop.permute.xlu0 %2629
      %2631 = vrot.lane.b32.xlu0 %v2562, 8
      %v2632 = vpop.permute.xlu0 %2631
      %2633 = vrot.lane.b32.xlu0 %v2563, 8
      %v2634 = vpop.permute.xlu0 %2633
      %2635 = vrot.lane.b32.xlu0 %v2564, 8
      %v2636 = vpop.permute.xlu0 %2635
      %2637 = vrot.lane.b32.xlu0 %v2565, 8
      %v2638 = vpop.permute.xlu0 %2637
      %2639 = vrot.lane.b32.xlu0 %v2566, 8
      %v2640 = vpop.permute.xlu0 %2639
      %2641 = vrot.lane.b32.xlu0 %v2567, 8
      %v2642 = vpop.permute.xlu0 %2641
      %2643 = vrot.lane.b32.xlu0 %v2568, 8
      %v2644 = vpop.permute.xlu0 %2643
      %2645 = vrot.lane.b32.xlu0 %v2569, 8
      %v2646 = vpop.permute.xlu0 %2645
      %2647 = vrot.lane.b32.xlu0 %v2570, 8
      %v2648 = vpop.permute.xlu0 %2647
      %2649 = vrot.lane.b32.xlu0 %v2571, 8
      %v2650 = vpop.permute.xlu0 %2649
      %2651 = vrot.lane.b32.xlu0 %v2572, 8
      %v2652 = vpop.permute.xlu0 %2651
      %2653 = vrot.lane.b32.xlu0 %v2573, 8
      %v2654 = vpop.permute.xlu0 %2653
      %2655 = vrot.lane.b32.xlu0 %v2574, 8
      %v2656 = vpop.permute.xlu0 %2655
      %2657 = vrot.lane.b32.xlu0 %v2575, 8
      %v2658 = vpop.permute.xlu0 %2657
      %2659 = vrot.lane.b32.xlu0 %v2576, 8
      %v2660 = vpop.permute.xlu0 %2659
      %2661 = vrot.lane.b32.xlu0 %v2577, 8
      %v2662 = vpop.permute.xlu0 %2661
      %2663 = vrot.lane.b32.xlu0 %v2578, 8
      %v2664 = vpop.permute.xlu0 %2663
      %2665 = vrot.lane.b32.xlu0 %v2579, 8
      %v2666 = vpop.permute.xlu0 %2665
      %2667 = vrot.lane.b32.xlu0 %v2580, 8
      %v2668 = vpop.permute.xlu0 %2667
      %2669 = vrot.lane.b32.xlu0 %v2581, 8
      %v2670 = vpop.permute.xlu0 %2669
      %2671 = vrot.lane.b32.xlu0 %v2582, 8
      %v2672 = vpop.permute.xlu0 %2671
      %2673 = vrot.lane.b32.xlu0 %v2583, 8
      %v2674 = vpop.permute.xlu0 %2673
      %2675 = vrot.lane.b32.xlu0 %v2584, 8
      %v2676 = vpop.permute.xlu0 %2675
      %2677 = vrot.lane.b32.xlu0 %v2585, 8
      %v2678 = vpop.permute.xlu0 %2677
      %2679 = vrot.lane.b32.xlu0 %v2586, 8
      %v2680 = vpop.permute.xlu0 %2679
      %2681 = vrot.lane.b32.xlu0 %v2587, 8
      %v2682 = vpop.permute.xlu0 %2681
      %2683 = vrot.lane.b32.xlu0 %v2588, 8
      %v2684 = vpop.permute.xlu0 %2683
      %2717 = vst.msk [vmem:[#allocation3] sm:$0xff] %vm726, %v2622
      %2718 = vst.msk [vmem:[#allocation3 + $0x8] sm:$0xff] %vm726, %v2624
      %2719 = vst.msk [vmem:[#allocation3 + $0x10] sm:$0xff] %vm726, %v2626
      %2720 = vst.msk [vmem:[#allocation3 + $0x18] sm:$0xff] %vm726, %v2628
      %2721 = vst.msk [vmem:[#allocation3 + $0x20] sm:$0xff] %vm726, %v2630
      %2722 = vst.msk [vmem:[#allocation3 + $0x28] sm:$0xff] %vm726, %v2632
      %2723 = vst.msk [vmem:[#allocation3 + $0x30] sm:$0xff] %vm726, %v2634
      %2724 = vst.msk [vmem:[#allocation3 + $0x38] sm:$0xff] %vm726, %v2636
      %2725 = vst.msk [vmem:[#allocation3 + $0x40] sm:$0xff] %vm726, %v2638
      %2726 = vst.msk [vmem:[#allocation3 + $0x48] sm:$0xff] %vm726, %v2640
      %2727 = vst.msk [vmem:[#allocation3 + $0x50] sm:$0xff] %vm726, %v2642
      %2728 = vst.msk [vmem:[#allocation3 + $0x58] sm:$0xff] %vm726, %v2644
      %2729 = vst.msk [vmem:[#allocation3 + $0x60] sm:$0xff] %vm726, %v2646
      %2730 = vst.msk [vmem:[#allocation3 + $0x68] sm:$0xff] %vm726, %v2648
      %2731 = vst.msk [vmem:[#allocation3 + $0x70] sm:$0xff] %vm726, %v2650
      %2732 = vst.msk [vmem:[#allocation3 + $0x78] sm:$0xff] %vm726, %v2652
      %2733 = vst.msk [vmem:[#allocation3 + $0x80] sm:$0xff] %vm726, %v2654
      %2734 = vst.msk [vmem:[#allocation3 + $0x88] sm:$0xff] %vm726, %v2656
      %2735 = vst.msk [vmem:[#allocation3 + $0x90] sm:$0xff] %vm726, %v2658
      %2736 = vst.msk [vmem:[#allocation3 + $0x98] sm:$0xff] %vm726, %v2660
      %2737 = vst.msk [vmem:[#allocation3 + $0xa0] sm:$0xff] %vm726, %v2662
      %2738 = vst.msk [vmem:[#allocation3 + $0xa8] sm:$0xff] %vm726, %v2664
      %2739 = vst.msk [vmem:[#allocation3 + $0xb0] sm:$0xff] %vm726, %v2666
      %2740 = vst.msk [vmem:[#allocation3 + $0xb8] sm:$0xff] %vm726, %v2668
      %2741 = vst.msk [vmem:[#allocation3 + $0xc0] sm:$0xff] %vm726, %v2670
      %2742 = vst.msk [vmem:[#allocation3 + $0xc8] sm:$0xff] %vm726, %v2672
      %2743 = vst.msk [vmem:[#allocation3 + $0xd0] sm:$0xff] %vm726, %v2674
      %2744 = vst.msk [vmem:[#allocation3 + $0xd8] sm:$0xff] %vm726, %v2676
      %2745 = vst.msk [vmem:[#allocation3 + $0xe0] sm:$0xff] %vm726, %v2678
      %2746 = vst.msk [vmem:[#allocation3 + $0xe8] sm:$0xff] %vm726, %v2680
      %2747 = vst.msk [vmem:[#allocation3 + $0xf0] sm:$0xff] %vm726, %v2682
      %2748 = vst.msk [vmem:[#allocation3 + $0xf8] sm:$0xff] %vm726, %v2684
      %v2749 = vld [vmem:[%s276] sm:$0xff]
      %v2750 = vld [vmem:[%s276 + $0x8] sm:$0xff]
      %v2751 = vld [vmem:[%s276 + $0x18] sm:$0xff]
      %v2752 = vld [vmem:[%s276 + $0x20] sm:$0xff]
      %v2753 = vld [vmem:[%s276 + $0x30] sm:$0xff]
      %v2754 = vld [vmem:[%s276 + $0x38] sm:$0xff]
      %v2755 = vld [vmem:[%s276 + $0x48] sm:$0xff]
      %v2756 = vld [vmem:[%s276 + $0x50] sm:$0xff]
      %v2757 = vld [vmem:[%s276 + $0x60] sm:$0xff]
      %v2758 = vld [vmem:[%s276 + $0x68] sm:$0xff]
      %v2759 = vld [vmem:[%s276 + $0x78] sm:$0xff]
      %v2760 = vld [vmem:[%s276 + $0x80] sm:$0xff]
      %v2761 = vld [vmem:[%s276 + $0x90] sm:$0xff]
      %v2762 = vld [vmem:[%s276 + $0x98] sm:$0xff]
      %v2763 = vld [vmem:[%s276 + $0xa8] sm:$0xff]
      %v2764 = vld [vmem:[%s276 + $0xb0] sm:$0xff]
      %v2765 = vld [vmem:[%s276 + $0xc0] sm:$0xff]
      %v2766 = vld [vmem:[%s276 + $0xc8] sm:$0xff]
      %v2767 = vld [vmem:[%s276 + $0xd8] sm:$0xff]
      %v2768 = vld [vmem:[%s276 + $0xe0] sm:$0xff]
      %v2769 = vld [vmem:[%s276 + $0xf0] sm:$0xff]
      %v2770 = vld [vmem:[%s276 + $0xf8] sm:$0xff]
      %v2771 = vld [vmem:[%s276 + $0x108] sm:$0xff]
      %v2772 = vld [vmem:[%s276 + $0x110] sm:$0xff]
      %v2773 = vld [vmem:[%s276 + $0x120] sm:$0xff]
      %v2774 = vld [vmem:[%s276 + $0x128] sm:$0xff]
      %v2775 = vld [vmem:[%s276 + $0x138] sm:$0xff]
      %v2776 = vld [vmem:[%s276 + $0x140] sm:$0xff]
      %v2777 = vld [vmem:[%s276 + $0x150] sm:$0xff]
      %v2778 = vld [vmem:[%s276 + $0x158] sm:$0xff]
      %v2779 = vld [vmem:[%s276 + $0x168] sm:$0xff]
      %v2780 = vld [vmem:[%s276 + $0x170] sm:$0xff]
      %2813 = vrot.lane.b32.xlu0 %v2749, 12
      %v2814 = vpop.permute.xlu0 %2813
      %2815 = vrot.lane.b32.xlu0 %v2750, 12
      %v2816 = vpop.permute.xlu0 %2815
      %2817 = vrot.lane.b32.xlu0 %v2751, 12
      %v2818 = vpop.permute.xlu0 %2817
      %2819 = vrot.lane.b32.xlu0 %v2752, 12
      %v2820 = vpop.permute.xlu0 %2819
      %2821 = vrot.lane.b32.xlu0 %v2753, 12
      %v2822 = vpop.permute.xlu0 %2821
      %2823 = vrot.lane.b32.xlu0 %v2754, 12
      %v2824 = vpop.permute.xlu0 %2823
      %2825 = vrot.lane.b32.xlu0 %v2755, 12
      %v2826 = vpop.permute.xlu0 %2825
      %2827 = vrot.lane.b32.xlu0 %v2756, 12
      %v2828 = vpop.permute.xlu0 %2827
      %2829 = vrot.lane.b32.xlu0 %v2757, 12
      %v2830 = vpop.permute.xlu0 %2829
      %2831 = vrot.lane.b32.xlu0 %v2758, 12
      %v2832 = vpop.permute.xlu0 %2831
      %2833 = vrot.lane.b32.xlu0 %v2759, 12
      %v2834 = vpop.permute.xlu0 %2833
      %2835 = vrot.lane.b32.xlu0 %v2760, 12
      %v2836 = vpop.permute.xlu0 %2835
      %2837 = vrot.lane.b32.xlu0 %v2761, 12
      %v2838 = vpop.permute.xlu0 %2837
      %2839 = vrot.lane.b32.xlu0 %v2762, 12
      %v2840 = vpop.permute.xlu0 %2839
      %2841 = vrot.lane.b32.xlu0 %v2763, 12
      %v2842 = vpop.permute.xlu0 %2841
      %2843 = vrot.lane.b32.xlu0 %v2764, 12
      %v2844 = vpop.permute.xlu0 %2843
      %2845 = vrot.lane.b32.xlu0 %v2765, 12
      %v2846 = vpop.permute.xlu0 %2845
      %2847 = vrot.lane.b32.xlu0 %v2766, 12
      %v2848 = vpop.permute.xlu0 %2847
      %2849 = vrot.lane.b32.xlu0 %v2767, 12
      %v2850 = vpop.permute.xlu0 %2849
      %2851 = vrot.lane.b32.xlu0 %v2768, 12
      %v2852 = vpop.permute.xlu0 %2851
      %2853 = vrot.lane.b32.xlu0 %v2769, 12
      %v2854 = vpop.permute.xlu0 %2853
      %2855 = vrot.lane.b32.xlu0 %v2770, 12
      %v2856 = vpop.permute.xlu0 %2855
      %2857 = vrot.lane.b32.xlu0 %v2771, 12
      %v2858 = vpop.permute.xlu0 %2857
      %2859 = vrot.lane.b32.xlu0 %v2772, 12
      %v2860 = vpop.permute.xlu0 %2859
      %2861 = vrot.lane.b32.xlu0 %v2773, 12
      %v2862 = vpop.permute.xlu0 %2861
      %2863 = vrot.lane.b32.xlu0 %v2774, 12
      %v2864 = vpop.permute.xlu0 %2863
      %2865 = vrot.lane.b32.xlu0 %v2775, 12
      %v2866 = vpop.permute.xlu0 %2865
      %2867 = vrot.lane.b32.xlu0 %v2776, 12
      %v2868 = vpop.permute.xlu0 %2867
      %2869 = vrot.lane.b32.xlu0 %v2777, 12
      %v2870 = vpop.permute.xlu0 %2869
      %2871 = vrot.lane.b32.xlu0 %v2778, 12
      %v2872 = vpop.permute.xlu0 %2871
      %2873 = vrot.lane.b32.xlu0 %v2779, 12
      %v2874 = vpop.permute.xlu0 %2873
      %2875 = vrot.lane.b32.xlu0 %v2780, 12
      %v2876 = vpop.permute.xlu0 %2875
      %2909 = vst.msk [vmem:[#allocation3] sm:$0xff] %vm919, %v2814
      %2910 = vst.msk [vmem:[#allocation3 + $0x8] sm:$0xff] %vm919, %v2816
      %2911 = vst.msk [vmem:[#allocation3 + $0x10] sm:$0xff] %vm919, %v2818
      %2912 = vst.msk [vmem:[#allocation3 + $0x18] sm:$0xff] %vm919, %v2820
      %2913 = vst.msk [vmem:[#allocation3 + $0x20] sm:$0xff] %vm919, %v2822
      %2914 = vst.msk [vmem:[#allocation3 + $0x28] sm:$0xff] %vm919, %v2824
      %2915 = vst.msk [vmem:[#allocation3 + $0x30] sm:$0xff] %vm919, %v2826
      %2916 = vst.msk [vmem:[#allocation3 + $0x38] sm:$0xff] %vm919, %v2828
      %2917 = vst.msk [vmem:[#allocation3 + $0x40] sm:$0xff] %vm919, %v2830
      %2918 = vst.msk [vmem:[#allocation3 + $0x48] sm:$0xff] %vm919, %v2832
      %2919 = vst.msk [vmem:[#allocation3 + $0x50] sm:$0xff] %vm919, %v2834
      %2920 = vst.msk [vmem:[#allocation3 + $0x58] sm:$0xff] %vm919, %v2836
      %2921 = vst.msk [vmem:[#allocation3 + $0x60] sm:$0xff] %vm919, %v2838
      %2922 = vst.msk [vmem:[#allocation3 + $0x68] sm:$0xff] %vm919, %v2840
      %2923 = vst.msk [vmem:[#allocation3 + $0x70] sm:$0xff] %vm919, %v2842
      %2924 = vst.msk [vmem:[#allocation3 + $0x78] sm:$0xff] %vm919, %v2844
      %2925 = vst.msk [vmem:[#allocation3 + $0x80] sm:$0xff] %vm919, %v2846
      %2926 = vst.msk [vmem:[#allocation3 + $0x88] sm:$0xff] %vm919, %v2848
      %2927 = vst.msk [vmem:[#allocation3 + $0x90] sm:$0xff] %vm919, %v2850
      %2928 = vst.msk [vmem:[#allocation3 + $0x98] sm:$0xff] %vm919, %v2852
      %2929 = vst.msk [vmem:[#allocation3 + $0xa0] sm:$0xff] %vm919, %v2854
      %2930 = vst.msk [vmem:[#allocation3 + $0xa8] sm:$0xff] %vm919, %v2856
      %2931 = vst.msk [vmem:[#allocation3 + $0xb0] sm:$0xff] %vm919, %v2858
      %2932 = vst.msk [vmem:[#allocation3 + $0xb8] sm:$0xff] %vm919, %v2860
      %2933 = vst.msk [vmem:[#allocation3 + $0xc0] sm:$0xff] %vm919, %v2862
      %2934 = vst.msk [vmem:[#allocation3 + $0xc8] sm:$0xff] %vm919, %v2864
      %2935 = vst.msk [vmem:[#allocation3 + $0xd0] sm:$0xff] %vm919, %v2866
      %2936 = vst.msk [vmem:[#allocation3 + $0xd8] sm:$0xff] %vm919, %v2868
      %2937 = vst.msk [vmem:[#allocation3 + $0xe0] sm:$0xff] %vm919, %v2870
      %2938 = vst.msk [vmem:[#allocation3 + $0xe8] sm:$0xff] %vm919, %v2872
      %2939 = vst.msk [vmem:[#allocation3 + $0xf0] sm:$0xff] %vm919, %v2874
      %2940 = vst.msk [vmem:[#allocation3 + $0xf8] sm:$0xff] %vm919, %v2876
      %v2941 = vld [vmem:[%s276 + $0x1] sm:$0xff]
      %v2942 = vld [vmem:[%s276 + $0x9] sm:$0xff]
      %v2943 = vld [vmem:[%s276 + $0x19] sm:$0xff]
      %v2944 = vld [vmem:[%s276 + $0x21] sm:$0xff]
      %v2945 = vld [vmem:[%s276 + $0x31] sm:$0xff]
      %v2946 = vld [vmem:[%s276 + $0x39] sm:$0xff]
      %v2947 = vld [vmem:[%s276 + $0x49] sm:$0xff]
      %v2948 = vld [vmem:[%s276 + $0x51] sm:$0xff]
      %v2949 = vld [vmem:[%s276 + $0x61] sm:$0xff]
      %v2950 = vld [vmem:[%s276 + $0x69] sm:$0xff]
      %v2951 = vld [vmem:[%s276 + $0x79] sm:$0xff]
      %v2952 = vld [vmem:[%s276 + $0x81] sm:$0xff]
      %v2953 = vld [vmem:[%s276 + $0x91] sm:$0xff]
      %v2954 = vld [vmem:[%s276 + $0x99] sm:$0xff]
      %v2955 = vld [vmem:[%s276 + $0xa9] sm:$0xff]
      %v2956 = vld [vmem:[%s276 + $0xb1] sm:$0xff]
      %v2957 = vld [vmem:[%s276 + $0xc1] sm:$0xff]
      %v2958 = vld [vmem:[%s276 + $0xc9] sm:$0xff]
      %v2959 = vld [vmem:[%s276 + $0xd9] sm:$0xff]
      %v2960 = vld [vmem:[%s276 + $0xe1] sm:$0xff]
      %v2961 = vld [vmem:[%s276 + $0xf1] sm:$0xff]
      %v2962 = vld [vmem:[%s276 + $0xf9] sm:$0xff]
      %v2963 = vld [vmem:[%s276 + $0x109] sm:$0xff]
      %v2964 = vld [vmem:[%s276 + $0x111] sm:$0xff]
      %v2965 = vld [vmem:[%s276 + $0x121] sm:$0xff]
      %v2966 = vld [vmem:[%s276 + $0x129] sm:$0xff]
      %v2967 = vld [vmem:[%s276 + $0x139] sm:$0xff]
      %v2968 = vld [vmem:[%s276 + $0x141] sm:$0xff]
      %v2969 = vld [vmem:[%s276 + $0x151] sm:$0xff]
      %v2970 = vld [vmem:[%s276 + $0x159] sm:$0xff]
      %v2971 = vld [vmem:[%s276 + $0x169] sm:$0xff]
      %v2972 = vld [vmem:[%s276 + $0x171] sm:$0xff]
      %3005 = vrot.lane.b32.xlu0 %v2941, 16
      %v3006 = vpop.permute.xlu0 %3005
      %3007 = vrot.lane.b32.xlu0 %v2942, 16
      %v3008 = vpop.permute.xlu0 %3007
      %3009 = vrot.lane.b32.xlu0 %v2943, 16
      %v3010 = vpop.permute.xlu0 %3009
      %3011 = vrot.lane.b32.xlu0 %v2944, 16
      %v3012 = vpop.permute.xlu0 %3011
      %3013 = vrot.lane.b32.xlu0 %v2945, 16
      %v3014 = vpop.permute.xlu0 %3013
      %3015 = vrot.lane.b32.xlu0 %v2946, 16
      %v3016 = vpop.permute.xlu0 %3015
      %3017 = vrot.lane.b32.xlu0 %v2947, 16
      %v3018 = vpop.permute.xlu0 %3017
      %3019 = vrot.lane.b32.xlu0 %v2948, 16
      %v3020 = vpop.permute.xlu0 %3019
      %3021 = vrot.lane.b32.xlu0 %v2949, 16
      %v3022 = vpop.permute.xlu0 %3021
      %3023 = vrot.lane.b32.xlu0 %v2950, 16
      %v3024 = vpop.permute.xlu0 %3023
      %3025 = vrot.lane.b32.xlu0 %v2951, 16
      %v3026 = vpop.permute.xlu0 %3025
      %3027 = vrot.lane.b32.xlu0 %v2952, 16
      %v3028 = vpop.permute.xlu0 %3027
      %3029 = vrot.lane.b32.xlu0 %v2953, 16
      %v3030 = vpop.permute.xlu0 %3029
      %3031 = vrot.lane.b32.xlu0 %v2954, 16
      %v3032 = vpop.permute.xlu0 %3031
      %3033 = vrot.lane.b32.xlu0 %v2955, 16
      %v3034 = vpop.permute.xlu0 %3033
      %3035 = vrot.lane.b32.xlu0 %v2956, 16
      %v3036 = vpop.permute.xlu0 %3035
      %3037 = vrot.lane.b32.xlu0 %v2957, 16
      %v3038 = vpop.permute.xlu0 %3037
      %3039 = vrot.lane.b32.xlu0 %v2958, 16
      %v3040 = vpop.permute.xlu0 %3039
      %3041 = vrot.lane.b32.xlu0 %v2959, 16
      %v3042 = vpop.permute.xlu0 %3041
      %3043 = vrot.lane.b32.xlu0 %v2960, 16
      %v3044 = vpop.permute.xlu0 %3043
      %3045 = vrot.lane.b32.xlu0 %v2961, 16
      %v3046 = vpop.permute.xlu0 %3045
      %3047 = vrot.lane.b32.xlu0 %v2962, 16
      %v3048 = vpop.permute.xlu0 %3047
      %3049 = vrot.lane.b32.xlu0 %v2963, 16
      %v3050 = vpop.permute.xlu0 %3049
      %3051 = vrot.lane.b32.xlu0 %v2964, 16
      %v3052 = vpop.permute.xlu0 %3051
      %3053 = vrot.lane.b32.xlu0 %v2965, 16
      %v3054 = vpop.permute.xlu0 %3053
      %3055 = vrot.lane.b32.xlu0 %v2966, 16
      %v3056 = vpop.permute.xlu0 %3055
      %3057 = vrot.lane.b32.xlu0 %v2967, 16
      %v3058 = vpop.permute.xlu0 %3057
      %3059 = vrot.lane.b32.xlu0 %v2968, 16
      %v3060 = vpop.permute.xlu0 %3059
      %3061 = vrot.lane.b32.xlu0 %v2969, 16
      %v3062 = vpop.permute.xlu0 %3061
      %3063 = vrot.lane.b32.xlu0 %v2970, 16
      %v3064 = vpop.permute.xlu0 %3063
      %3065 = vrot.lane.b32.xlu0 %v2971, 16
      %v3066 = vpop.permute.xlu0 %3065
      %3067 = vrot.lane.b32.xlu0 %v2972, 16
      %v3068 = vpop.permute.xlu0 %3067
      %3101 = vst.msk [vmem:[#allocation3] sm:$0xff] %vm1112, %v3006
      %3102 = vst.msk [vmem:[#allocation3 + $0x8] sm:$0xff] %vm1112, %v3008
      %3103 = vst.msk [vmem:[#allocation3 + $0x10] sm:$0xff] %vm1112, %v3010
      %3104 = vst.msk [vmem:[#allocation3 + $0x18] sm:$0xff] %vm1112, %v3012
      %3105 = vst.msk [vmem:[#allocation3 + $0x20] sm:$0xff] %vm1112, %v3014
      %3106 = vst.msk [vmem:[#allocation3 + $0x28] sm:$0xff] %vm1112, %v3016
      %3107 = vst.msk [vmem:[#allocation3 + $0x30] sm:$0xff] %vm1112, %v3018
      %3108 = vst.msk [vmem:[#allocation3 + $0x38] sm:$0xff] %vm1112, %v3020
      %3109 = vst.msk [vmem:[#allocation3 + $0x40] sm:$0xff] %vm1112, %v3022
      %3110 = vst.msk [vmem:[#allocation3 + $0x48] sm:$0xff] %vm1112, %v3024
      %3111 = vst.msk [vmem:[#allocation3 + $0x50] sm:$0xff] %vm1112, %v3026
      %3112 = vst.msk [vmem:[#allocation3 + $0x58] sm:$0xff] %vm1112, %v3028
      %3113 = vst.msk [vmem:[#allocation3 + $0x60] sm:$0xff] %vm1112, %v3030
      %3114 = vst.msk [vmem:[#allocation3 + $0x68] sm:$0xff] %vm1112, %v3032
      %3115 = vst.msk [vmem:[#allocation3 + $0x70] sm:$0xff] %vm1112, %v3034
      %3116 = vst.msk [vmem:[#allocation3 + $0x78] sm:$0xff] %vm1112, %v3036
      %3117 = vst.msk [vmem:[#allocation3 + $0x80] sm:$0xff] %vm1112, %v3038
      %3118 = vst.msk [vmem:[#allocation3 + $0x88] sm:$0xff] %vm1112, %v3040
      %3119 = vst.msk [vmem:[#allocation3 + $0x90] sm:$0xff] %vm1112, %v3042
      %3120 = vst.msk [vmem:[#allocation3 + $0x98] sm:$0xff] %vm1112, %v3044
      %3121 = vst.msk [vmem:[#allocation3 + $0xa0] sm:$0xff] %vm1112, %v3046
      %3122 = vst.msk [vmem:[#allocation3 + $0xa8] sm:$0xff] %vm1112, %v3048
      %3123 = vst.msk [vmem:[#allocation3 + $0xb0] sm:$0xff] %vm1112, %v3050
      %3124 = vst.msk [vmem:[#allocation3 + $0xb8] sm:$0xff] %vm1112, %v3052
      %3125 = vst.msk [vmem:[#allocation3 + $0xc0] sm:$0xff] %vm1112, %v3054
      %3126 = vst.msk [vmem:[#allocation3 + $0xc8] sm:$0xff] %vm1112, %v3056
      %3127 = vst.msk [vmem:[#allocation3 + $0xd0] sm:$0xff] %vm1112, %v3058
      %3128 = vst.msk [vmem:[#allocation3 + $0xd8] sm:$0xff] %vm1112, %v3060
      %3129 = vst.msk [vmem:[#allocation3 + $0xe0] sm:$0xff] %vm1112, %v3062
      %3130 = vst.msk [vmem:[#allocation3 + $0xe8] sm:$0xff] %vm1112, %v3064
      %3131 = vst.msk [vmem:[#allocation3 + $0xf0] sm:$0xff] %vm1112, %v3066
      %3132 = vst.msk [vmem:[#allocation3 + $0xf8] sm:$0xff] %vm1112, %v3068
      %v3133 = vld [vmem:[%s276 + $0x2] sm:$0xff]
      %v3134 = vld [vmem:[%s276 + $0xa] sm:$0xff]
      %v3135 = vld [vmem:[%s276 + $0x1a] sm:$0xff]
      %v3136 = vld [vmem:[%s276 + $0x22] sm:$0xff]
      %v3137 = vld [vmem:[%s276 + $0x32] sm:$0xff]
      %v3138 = vld [vmem:[%s276 + $0x3a] sm:$0xff]
      %v3139 = vld [vmem:[%s276 + $0x4a] sm:$0xff]
      %v3140 = vld [vmem:[%s276 + $0x52] sm:$0xff]
      %v3141 = vld [vmem:[%s276 + $0x62] sm:$0xff]
      %v3142 = vld [vmem:[%s276 + $0x6a] sm:$0xff]
      %v3143 = vld [vmem:[%s276 + $0x7a] sm:$0xff]
      %v3144 = vld [vmem:[%s276 + $0x82] sm:$0xff]
      %v3145 = vld [vmem:[%s276 + $0x92] sm:$0xff]
      %v3146 = vld [vmem:[%s276 + $0x9a] sm:$0xff]
      %v3147 = vld [vmem:[%s276 + $0xaa] sm:$0xff]
      %v3148 = vld [vmem:[%s276 + $0xb2] sm:$0xff]
      %v3149 = vld [vmem:[%s276 + $0xc2] sm:$0xff]
      %v3150 = vld [vmem:[%s276 + $0xca] sm:$0xff]
      %v3151 = vld [vmem:[%s276 + $0xda] sm:$0xff]
      %v3152 = vld [vmem:[%s276 + $0xe2] sm:$0xff]
      %v3153 = vld [vmem:[%s276 + $0xf2] sm:$0xff]
      %v3154 = vld [vmem:[%s276 + $0xfa] sm:$0xff]
      %v3155 = vld [vmem:[%s276 + $0x10a] sm:$0xff]
      %v3156 = vld [vmem:[%s276 + $0x112] sm:$0xff]
      %v3157 = vld [vmem:[%s276 + $0x122] sm:$0xff]
      %v3158 = vld [vmem:[%s276 + $0x12a] sm:$0xff]
      %v3159 = vld [vmem:[%s276 + $0x13a] sm:$0xff]
      %v3160 = vld [vmem:[%s276 + $0x142] sm:$0xff]
      %v3161 = vld [vmem:[%s276 + $0x152] sm:$0xff]
      %v3162 = vld [vmem:[%s276 + $0x15a] sm:$0xff]
      %v3163 = vld [vmem:[%s276 + $0x16a] sm:$0xff]
      %v3164 = vld [vmem:[%s276 + $0x172] sm:$0xff]
      %3197 = vrot.lane.b32.xlu0 %v3133, 20
      %v3198 = vpop.permute.xlu0 %3197
      %3199 = vrot.lane.b32.xlu0 %v3134, 20
      %v3200 = vpop.permute.xlu0 %3199
      %3201 = vrot.lane.b32.xlu0 %v3135, 20
      %v3202 = vpop.permute.xlu0 %3201
      %3203 = vrot.lane.b32.xlu0 %v3136, 20
      %v3204 = vpop.permute.xlu0 %3203
      %3205 = vrot.lane.b32.xlu0 %v3137, 20
      %v3206 = vpop.permute.xlu0 %3205
      %3207 = vrot.lane.b32.xlu0 %v3138, 20
      %v3208 = vpop.permute.xlu0 %3207
      %3209 = vrot.lane.b32.xlu0 %v3139, 20
      %v3210 = vpop.permute.xlu0 %3209
      %3211 = vrot.lane.b32.xlu0 %v3140, 20
      %v3212 = vpop.permute.xlu0 %3211
      %3213 = vrot.lane.b32.xlu0 %v3141, 20
      %v3214 = vpop.permute.xlu0 %3213
      %3215 = vrot.lane.b32.xlu0 %v3142, 20
      %v3216 = vpop.permute.xlu0 %3215
      %3217 = vrot.lane.b32.xlu0 %v3143, 20
      %v3218 = vpop.permute.xlu0 %3217
      %3219 = vrot.lane.b32.xlu0 %v3144, 20
      %v3220 = vpop.permute.xlu0 %3219
      %3221 = vrot.lane.b32.xlu0 %v3145, 20
      %v3222 = vpop.permute.xlu0 %3221
      %3223 = vrot.lane.b32.xlu0 %v3146, 20
      %v3224 = vpop.permute.xlu0 %3223
      %3225 = vrot.lane.b32.xlu0 %v3147, 20
      %v3226 = vpop.permute.xlu0 %3225
      %3227 = vrot.lane.b32.xlu0 %v3148, 20
      %v3228 = vpop.permute.xlu0 %3227
      %3229 = vrot.lane.b32.xlu0 %v3149, 20
      %v3230 = vpop.permute.xlu0 %3229
      %3231 = vrot.lane.b32.xlu0 %v3150, 20
      %v3232 = vpop.permute.xlu0 %3231
      %3233 = vrot.lane.b32.xlu0 %v3151, 20
      %v3234 = vpop.permute.xlu0 %3233
      %3235 = vrot.lane.b32.xlu0 %v3152, 20
      %v3236 = vpop.permute.xlu0 %3235
      %3237 = vrot.lane.b32.xlu0 %v3153, 20
      %v3238 = vpop.permute.xlu0 %3237
      %3239 = vrot.lane.b32.xlu0 %v3154, 20
      %v3240 = vpop.permute.xlu0 %3239
      %3241 = vrot.lane.b32.xlu0 %v3155, 20
      %v3242 = vpop.permute.xlu0 %3241
      %3243 = vrot.lane.b32.xlu0 %v3156, 20
      %v3244 = vpop.permute.xlu0 %3243
      %3245 = vrot.lane.b32.xlu0 %v3157, 20
      %v3246 = vpop.permute.xlu0 %3245
      %3247 = vrot.lane.b32.xlu0 %v3158, 20
      %v3248 = vpop.permute.xlu0 %3247
      %3249 = vrot.lane.b32.xlu0 %v3159, 20
      %v3250 = vpop.permute.xlu0 %3249
      %3251 = vrot.lane.b32.xlu0 %v3160, 20
      %v3252 = vpop.permute.xlu0 %3251
      %3253 = vrot.lane.b32.xlu0 %v3161, 20
      %v3254 = vpop.permute.xlu0 %3253
      %3255 = vrot.lane.b32.xlu0 %v3162, 20
      %v3256 = vpop.permute.xlu0 %3255
      %3257 = vrot.lane.b32.xlu0 %v3163, 20
      %v3258 = vpop.permute.xlu0 %3257
      %3259 = vrot.lane.b32.xlu0 %v3164, 20
      %v3260 = vpop.permute.xlu0 %3259
      %3293 = vst.msk [vmem:[#allocation3] sm:$0xff] %vm1305, %v3198
      %3294 = vst.msk [vmem:[#allocation3 + $0x8] sm:$0xff] %vm1305, %v3200
      %3295 = vst.msk [vmem:[#allocation3 + $0x10] sm:$0xff] %vm1305, %v3202
      %3296 = vst.msk [vmem:[#allocation3 + $0x18] sm:$0xff] %vm1305, %v3204
      %3297 = vst.msk [vmem:[#allocation3 + $0x20] sm:$0xff] %vm1305, %v3206
      %3298 = vst.msk [vmem:[#allocation3 + $0x28] sm:$0xff] %vm1305, %v3208
      %3299 = vst.msk [vmem:[#allocation3 + $0x30] sm:$0xff] %vm1305, %v3210
      %3300 = vst.msk [vmem:[#allocation3 + $0x38] sm:$0xff] %vm1305, %v3212
      %3301 = vst.msk [vmem:[#allocation3 + $0x40] sm:$0xff] %vm1305, %v3214
      %3302 = vst.msk [vmem:[#allocation3 + $0x48] sm:$0xff] %vm1305, %v3216
      %3303 = vst.msk [vmem:[#allocation3 + $0x50] sm:$0xff] %vm1305, %v3218
      %3304 = vst.msk [vmem:[#allocation3 + $0x58] sm:$0xff] %vm1305, %v3220
      %3305 = vst.msk [vmem:[#allocation3 + $0x60] sm:$0xff] %vm1305, %v3222
      %3306 = vst.msk [vmem:[#allocation3 + $0x68] sm:$0xff] %vm1305, %v3224
      %3307 = vst.msk [vmem:[#allocation3 + $0x70] sm:$0xff] %vm1305, %v3226
      %3308 = vst.msk [vmem:[#allocation3 + $0x78] sm:$0xff] %vm1305, %v3228
      %3309 = vst.msk [vmem:[#allocation3 + $0x80] sm:$0xff] %vm1305, %v3230
      %3310 = vst.msk [vmem:[#allocation3 + $0x88] sm:$0xff] %vm1305, %v3232
      %3311 = vst.msk [vmem:[#allocation3 + $0x90] sm:$0xff] %vm1305, %v3234
      %3312 = vst.msk [vmem:[#allocation3 + $0x98] sm:$0xff] %vm1305, %v3236
      %3313 = vst.msk [vmem:[#allocation3 + $0xa0] sm:$0xff] %vm1305, %v3238
      %3314 = vst.msk [vmem:[#allocation3 + $0xa8] sm:$0xff] %vm1305, %v3240
      %3315 = vst.msk [vmem:[#allocation3 + $0xb0] sm:$0xff] %vm1305, %v3242
      %3316 = vst.msk [vmem:[#allocation3 + $0xb8] sm:$0xff] %vm1305, %v3244
      %3317 = vst.msk [vmem:[#allocation3 + $0xc0] sm:$0xff] %vm1305, %v3246
      %3318 = vst.msk [vmem:[#allocation3 + $0xc8] sm:$0xff] %vm1305, %v3248
      %3319 = vst.msk [vmem:[#allocation3 + $0xd0] sm:$0xff] %vm1305, %v3250
      %3320 = vst.msk [vmem:[#allocation3 + $0xd8] sm:$0xff] %vm1305, %v3252
      %3321 = vst.msk [vmem:[#allocation3 + $0xe0] sm:$0xff] %vm1305, %v3254
      %3322 = vst.msk [vmem:[#allocation3 + $0xe8] sm:$0xff] %vm1305, %v3256
      %3323 = vst.msk [vmem:[#allocation3 + $0xf0] sm:$0xff] %vm1305, %v3258
      %3324 = vst.msk [vmem:[#allocation3 + $0xf8] sm:$0xff] %vm1305, %v3260
      %v3325 = vld [vmem:[%s1338] sm:$0xff]
      %v3326 = vld [vmem:[%s1338 + $0x8] sm:$0xff]
      %v3327 = vld [vmem:[%s1338 + $0x18] sm:$0xff]
      %v3328 = vld [vmem:[%s1338 + $0x20] sm:$0xff]
      %v3329 = vld [vmem:[%s1338 + $0x30] sm:$0xff]
      %v3330 = vld [vmem:[%s1338 + $0x38] sm:$0xff]
      %v3331 = vld [vmem:[%s1338 + $0x48] sm:$0xff]
      %v3332 = vld [vmem:[%s1338 + $0x50] sm:$0xff]
      %v3333 = vld [vmem:[%s1338 + $0x60] sm:$0xff]
      %v3334 = vld [vmem:[%s1338 + $0x68] sm:$0xff]
      %v3335 = vld [vmem:[%s1338 + $0x78] sm:$0xff]
      %v3336 = vld [vmem:[%s1338 + $0x80] sm:$0xff]
      %v3337 = vld [vmem:[%s1338 + $0x90] sm:$0xff]
      %v3338 = vld [vmem:[%s1338 + $0x98] sm:$0xff]
      %v3339 = vld [vmem:[%s1338 + $0xa8] sm:$0xff]
      %v3340 = vld [vmem:[%s1338 + $0xb0] sm:$0xff]
      %v3341 = vld [vmem:[%s1338 + $0xc0] sm:$0xff]
      %v3342 = vld [vmem:[%s1338 + $0xc8] sm:$0xff]
      %v3343 = vld [vmem:[%s1338 + $0xd8] sm:$0xff]
      %v3344 = vld [vmem:[%s1338 + $0xe0] sm:$0xff]
      %v3345 = vld [vmem:[%s1338 + $0xf0] sm:$0xff]
      %v3346 = vld [vmem:[%s1338 + $0xf8] sm:$0xff]
      %v3347 = vld [vmem:[%s1338 + $0x108] sm:$0xff]
      %v3348 = vld [vmem:[%s1338 + $0x110] sm:$0xff]
      %v3349 = vld [vmem:[%s1338 + $0x120] sm:$0xff]
      %v3350 = vld [vmem:[%s1338 + $0x128] sm:$0xff]
      %v3351 = vld [vmem:[%s1338 + $0x138] sm:$0xff]
      %v3352 = vld [vmem:[%s1338 + $0x140] sm:$0xff]
      %v3353 = vld [vmem:[%s1338 + $0x150] sm:$0xff]
      %v3354 = vld [vmem:[%s1338 + $0x158] sm:$0xff]
      %v3355 = vld [vmem:[%s1338 + $0x168] sm:$0xff]
      %v3356 = vld [vmem:[%s1338 + $0x170] sm:$0xff]
      %3389 = vrot.lane.b32.xlu0 %v3325, 24
      %v3390 = vpop.permute.xlu0 %3389
      %3391 = vrot.lane.b32.xlu0 %v3326, 24
      %v3392 = vpop.permute.xlu0 %3391
      %3393 = vrot.lane.b32.xlu0 %v3327, 24
      %v3394 = vpop.permute.xlu0 %3393
      %3395 = vrot.lane.b32.xlu0 %v3328, 24
      %v3396 = vpop.permute.xlu0 %3395
      %3397 = vrot.lane.b32.xlu0 %v3329, 24
      %v3398 = vpop.permute.xlu0 %3397
      %3399 = vrot.lane.b32.xlu0 %v3330, 24
      %v3400 = vpop.permute.xlu0 %3399
      %3401 = vrot.lane.b32.xlu0 %v3331, 24
      %v3402 = vpop.permute.xlu0 %3401
      %3403 = vrot.lane.b32.xlu0 %v3332, 24
      %v3404 = vpop.permute.xlu0 %3403
      %3405 = vrot.lane.b32.xlu0 %v3333, 24
      %v3406 = vpop.permute.xlu0 %3405
      %3407 = vrot.lane.b32.xlu0 %v3334, 24
      %v3408 = vpop.permute.xlu0 %3407
      %3409 = vrot.lane.b32.xlu0 %v3335, 24
      %v3410 = vpop.permute.xlu0 %3409
      %3411 = vrot.lane.b32.xlu0 %v3336, 24
      %v3412 = vpop.permute.xlu0 %3411
      %3413 = vrot.lane.b32.xlu0 %v3337, 24
      %v3414 = vpop.permute.xlu0 %3413
      %3415 = vrot.lane.b32.xlu0 %v3338, 24
      %v3416 = vpop.permute.xlu0 %3415
      %3417 = vrot.lane.b32.xlu0 %v3339, 24
      %v3418 = vpop.permute.xlu0 %3417
      %3419 = vrot.lane.b32.xlu0 %v3340, 24
      %v3420 = vpop.permute.xlu0 %3419
      %3421 = vrot.lane.b32.xlu0 %v3341, 24
      %v3422 = vpop.permute.xlu0 %3421
      %3423 = vrot.lane.b32.xlu0 %v3342, 24
      %v3424 = vpop.permute.xlu0 %3423
      %3425 = vrot.lane.b32.xlu0 %v3343, 24
      %v3426 = vpop.permute.xlu0 %3425
      %3427 = vrot.lane.b32.xlu0 %v3344, 24
      %v3428 = vpop.permute.xlu0 %3427
      %3429 = vrot.lane.b32.xlu0 %v3345, 24
      %v3430 = vpop.permute.xlu0 %3429
      %3431 = vrot.lane.b32.xlu0 %v3346, 24
      %v3432 = vpop.permute.xlu0 %3431
      %3433 = vrot.lane.b32.xlu0 %v3347, 24
      %v3434 = vpop.permute.xlu0 %3433
      %3435 = vrot.lane.b32.xlu0 %v3348, 24
      %v3436 = vpop.permute.xlu0 %3435
      %3437 = vrot.lane.b32.xlu0 %v3349, 24
      %v3438 = vpop.permute.xlu0 %3437
      %3439 = vrot.lane.b32.xlu0 %v3350, 24
      %v3440 = vpop.permute.xlu0 %3439
      %3441 = vrot.lane.b32.xlu0 %v3351, 24
      %v3442 = vpop.permute.xlu0 %3441
      %3443 = vrot.lane.b32.xlu0 %v3352, 24
      %v3444 = vpop.permute.xlu0 %3443
      %3445 = vrot.lane.b32.xlu0 %v3353, 24
      %v3446 = vpop.permute.xlu0 %3445
      %3447 = vrot.lane.b32.xlu0 %v3354, 24
      %v3448 = vpop.permute.xlu0 %3447
      %3449 = vrot.lane.b32.xlu0 %v3355, 24
      %v3450 = vpop.permute.xlu0 %3449
      %3451 = vrot.lane.b32.xlu0 %v3356, 24
      %v3452 = vpop.permute.xlu0 %3451
      %3485 = vst.msk [vmem:[#allocation3] sm:$0xff] %vm1499, %v3390
      %3486 = vst.msk [vmem:[#allocation3 + $0x8] sm:$0xff] %vm1499, %v3392
      %3487 = vst.msk [vmem:[#allocation3 + $0x10] sm:$0xff] %vm1499, %v3394
      %3488 = vst.msk [vmem:[#allocation3 + $0x18] sm:$0xff] %vm1499, %v3396
      %3489 = vst.msk [vmem:[#allocation3 + $0x20] sm:$0xff] %vm1499, %v3398
      %3490 = vst.msk [vmem:[#allocation3 + $0x28] sm:$0xff] %vm1499, %v3400
      %3491 = vst.msk [vmem:[#allocation3 + $0x30] sm:$0xff] %vm1499, %v3402
      %3492 = vst.msk [vmem:[#allocation3 + $0x38] sm:$0xff] %vm1499, %v3404
      %3493 = vst.msk [vmem:[#allocation3 + $0x40] sm:$0xff] %vm1499, %v3406
      %3494 = vst.msk [vmem:[#allocation3 + $0x48] sm:$0xff] %vm1499, %v3408
      %3495 = vst.msk [vmem:[#allocation3 + $0x50] sm:$0xff] %vm1499, %v3410
      %3496 = vst.msk [vmem:[#allocation3 + $0x58] sm:$0xff] %vm1499, %v3412
      %3497 = vst.msk [vmem:[#allocation3 + $0x60] sm:$0xff] %vm1499, %v3414
      %3498 = vst.msk [vmem:[#allocation3 + $0x68] sm:$0xff] %vm1499, %v3416
      %3499 = vst.msk [vmem:[#allocation3 + $0x70] sm:$0xff] %vm1499, %v3418
      %3500 = vst.msk [vmem:[#allocation3 + $0x78] sm:$0xff] %vm1499, %v3420
      %3501 = vst.msk [vmem:[#allocation3 + $0x80] sm:$0xff] %vm1499, %v3422
      %3502 = vst.msk [vmem:[#allocation3 + $0x88] sm:$0xff] %vm1499, %v3424
      %3503 = vst.msk [vmem:[#allocation3 + $0x90] sm:$0xff] %vm1499, %v3426
      %3504 = vst.msk [vmem:[#allocation3 + $0x98] sm:$0xff] %vm1499, %v3428
      %3505 = vst.msk [vmem:[#allocation3 + $0xa0] sm:$0xff] %vm1499, %v3430
      %3506 = vst.msk [vmem:[#allocation3 + $0xa8] sm:$0xff] %vm1499, %v3432
      %3507 = vst.msk [vmem:[#allocation3 + $0xb0] sm:$0xff] %vm1499, %v3434
      %3508 = vst.msk [vmem:[#allocation3 + $0xb8] sm:$0xff] %vm1499, %v3436
      %3509 = vst.msk [vmem:[#allocation3 + $0xc0] sm:$0xff] %vm1499, %v3438
      %3510 = vst.msk [vmem:[#allocation3 + $0xc8] sm:$0xff] %vm1499, %v3440
      %3511 = vst.msk [vmem:[#allocation3 + $0xd0] sm:$0xff] %vm1499, %v3442
      %3512 = vst.msk [vmem:[#allocation3 + $0xd8] sm:$0xff] %vm1499, %v3444
      %3513 = vst.msk [vmem:[#allocation3 + $0xe0] sm:$0xff] %vm1499, %v3446
      %3514 = vst.msk [vmem:[#allocation3 + $0xe8] sm:$0xff] %vm1499, %v3448
      %3515 = vst.msk [vmem:[#allocation3 + $0xf0] sm:$0xff] %vm1499, %v3450
      %3516 = vst.msk [vmem:[#allocation3 + $0xf8] sm:$0xff] %vm1499, %v3452
      %v3517 = vld [vmem:[%s1338 + $0x1] sm:$0xff]
      %v3518 = vld [vmem:[%s1338 + $0x9] sm:$0xff]
      %v3519 = vld [vmem:[%s1338 + $0x19] sm:$0xff]
      %v3520 = vld [vmem:[%s1338 + $0x21] sm:$0xff]
      %v3521 = vld [vmem:[%s1338 + $0x31] sm:$0xff]
      %v3522 = vld [vmem:[%s1338 + $0x39] sm:$0xff]
      %v3523 = vld [vmem:[%s1338 + $0x49] sm:$0xff]
      %v3524 = vld [vmem:[%s1338 + $0x51] sm:$0xff]
      %v3525 = vld [vmem:[%s1338 + $0x61] sm:$0xff]
      %v3526 = vld [vmem:[%s1338 + $0x69] sm:$0xff]
      %v3527 = vld [vmem:[%s1338 + $0x79] sm:$0xff]
      %v3528 = vld [vmem:[%s1338 + $0x81] sm:$0xff]
      %v3529 = vld [vmem:[%s1338 + $0x91] sm:$0xff]
      %v3530 = vld [vmem:[%s1338 + $0x99] sm:$0xff]
      %v3531 = vld [vmem:[%s1338 + $0xa9] sm:$0xff]
      %v3532 = vld [vmem:[%s1338 + $0xb1] sm:$0xff]
      %v3533 = vld [vmem:[%s1338 + $0xc1] sm:$0xff]
      %v3534 = vld [vmem:[%s1338 + $0xc9] sm:$0xff]
      %v3535 = vld [vmem:[%s1338 + $0xd9] sm:$0xff]
      %v3536 = vld [vmem:[%s1338 + $0xe1] sm:$0xff]
      %v3537 = vld [vmem:[%s1338 + $0xf1] sm:$0xff]
      %v3538 = vld [vmem:[%s1338 + $0xf9] sm:$0xff]
      %v3539 = vld [vmem:[%s1338 + $0x109] sm:$0xff]
      %v3540 = vld [vmem:[%s1338 + $0x111] sm:$0xff]
      %v3541 = vld [vmem:[%s1338 + $0x121] sm:$0xff]
      %v3542 = vld [vmem:[%s1338 + $0x129] sm:$0xff]
      %v3543 = vld [vmem:[%s1338 + $0x139] sm:$0xff]
      %v3544 = vld [vmem:[%s1338 + $0x141] sm:$0xff]
      %v3545 = vld [vmem:[%s1338 + $0x151] sm:$0xff]
      %v3546 = vld [vmem:[%s1338 + $0x159] sm:$0xff]
      %v3547 = vld [vmem:[%s1338 + $0x169] sm:$0xff]
      %v3548 = vld [vmem:[%s1338 + $0x171] sm:$0xff]
      %3581 = vrot.lane.b32.xlu0 %v3517, 28
      %v3582 = vpop.permute.xlu0 %3581
      %3583 = vrot.lane.b32.xlu0 %v3518, 28
      %v3584 = vpop.permute.xlu0 %3583
      %3585 = vrot.lane.b32.xlu0 %v3519, 28
      %v3586 = vpop.permute.xlu0 %3585
      %3587 = vrot.lane.b32.xlu0 %v3520, 28
      %v3588 = vpop.permute.xlu0 %3587
      %3589 = vrot.lane.b32.xlu0 %v3521, 28
      %v3590 = vpop.permute.xlu0 %3589
      %3591 = vrot.lane.b32.xlu0 %v3522, 28
      %v3592 = vpop.permute.xlu0 %3591
      %3593 = vrot.lane.b32.xlu0 %v3523, 28
      %v3594 = vpop.permute.xlu0 %3593
      %3595 = vrot.lane.b32.xlu0 %v3524, 28
      %v3596 = vpop.permute.xlu0 %3595
      %3597 = vrot.lane.b32.xlu0 %v3525, 28
      %v3598 = vpop.permute.xlu0 %3597
      %3599 = vrot.lane.b32.xlu0 %v3526, 28
      %v3600 = vpop.permute.xlu0 %3599
      %3601 = vrot.lane.b32.xlu0 %v3527, 28
      %v3602 = vpop.permute.xlu0 %3601
      %3603 = vrot.lane.b32.xlu0 %v3528, 28
      %v3604 = vpop.permute.xlu0 %3603
      %3605 = vrot.lane.b32.xlu0 %v3529, 28
      %v3606 = vpop.permute.xlu0 %3605
      %3607 = vrot.lane.b32.xlu0 %v3530, 28
      %v3608 = vpop.permute.xlu0 %3607
      %3609 = vrot.lane.b32.xlu0 %v3531, 28
      %v3610 = vpop.permute.xlu0 %3609
      %3611 = vrot.lane.b32.xlu0 %v3532, 28
      %v3612 = vpop.permute.xlu0 %3611
      %3613 = vrot.lane.b32.xlu0 %v3533, 28
      %v3614 = vpop.permute.xlu0 %3613
      %3615 = vrot.lane.b32.xlu0 %v3534, 28
      %v3616 = vpop.permute.xlu0 %3615
      %3617 = vrot.lane.b32.xlu0 %v3535, 28
      %v3618 = vpop.permute.xlu0 %3617
      %3619 = vrot.lane.b32.xlu0 %v3536, 28
      %v3620 = vpop.permute.xlu0 %3619
      %3621 = vrot.lane.b32.xlu0 %v3537, 28
      %v3622 = vpop.permute.xlu0 %3621
      %3623 = vrot.lane.b32.xlu0 %v3538, 28
      %v3624 = vpop.permute.xlu0 %3623
      %3625 = vrot.lane.b32.xlu0 %v3539, 28
      %v3626 = vpop.permute.xlu0 %3625
      %3627 = vrot.lane.b32.xlu0 %v3540, 28
      %v3628 = vpop.permute.xlu0 %3627
      %3629 = vrot.lane.b32.xlu0 %v3541, 28
      %v3630 = vpop.permute.xlu0 %3629
      %3631 = vrot.lane.b32.xlu0 %v3542, 28
      %v3632 = vpop.permute.xlu0 %3631
      %3633 = vrot.lane.b32.xlu0 %v3543, 28
      %v3634 = vpop.permute.xlu0 %3633
      %3635 = vrot.lane.b32.xlu0 %v3544, 28
      %v3636 = vpop.permute.xlu0 %3635
      %3637 = vrot.lane.b32.xlu0 %v3545, 28
      %v3638 = vpop.permute.xlu0 %3637
      %3639 = vrot.lane.b32.xlu0 %v3546, 28
      %v3640 = vpop.permute.xlu0 %3639
      %3641 = vrot.lane.b32.xlu0 %v3547, 28
      %v3642 = vpop.permute.xlu0 %3641
      %3643 = vrot.lane.b32.xlu0 %v3548, 28
      %v3644 = vpop.permute.xlu0 %3643
      %3677 = vst.msk [vmem:[#allocation3] sm:$0xff] %vm1692, %v3582
      %3678 = vst.msk [vmem:[#allocation3 + $0x8] sm:$0xff] %vm1692, %v3584
      %3679 = vst.msk [vmem:[#allocation3 + $0x10] sm:$0xff] %vm1692, %v3586
      %3680 = vst.msk [vmem:[#allocation3 + $0x18] sm:$0xff] %vm1692, %v3588
      %3681 = vst.msk [vmem:[#allocation3 + $0x20] sm:$0xff] %vm1692, %v3590
      %3682 = vst.msk [vmem:[#allocation3 + $0x28] sm:$0xff] %vm1692, %v3592
      %3683 = vst.msk [vmem:[#allocation3 + $0x30] sm:$0xff] %vm1692, %v3594
      %3684 = vst.msk [vmem:[#allocation3 + $0x38] sm:$0xff] %vm1692, %v3596
      %3685 = vst.msk [vmem:[#allocation3 + $0x40] sm:$0xff] %vm1692, %v3598
      %3686 = vst.msk [vmem:[#allocation3 + $0x48] sm:$0xff] %vm1692, %v3600
      %3687 = vst.msk [vmem:[#allocation3 + $0x50] sm:$0xff] %vm1692, %v3602
      %3688 = vst.msk [vmem:[#allocation3 + $0x58] sm:$0xff] %vm1692, %v3604
      %3689 = vst.msk [vmem:[#allocation3 + $0x60] sm:$0xff] %vm1692, %v3606
      %3690 = vst.msk [vmem:[#allocation3 + $0x68] sm:$0xff] %vm1692, %v3608
      %3691 = vst.msk [vmem:[#allocation3 + $0x70] sm:$0xff] %vm1692, %v3610
      %3692 = vst.msk [vmem:[#allocation3 + $0x78] sm:$0xff] %vm1692, %v3612
      %3693 = vst.msk [vmem:[#allocation3 + $0x80] sm:$0xff] %vm1692, %v3614
      %3694 = vst.msk [vmem:[#allocation3 + $0x88] sm:$0xff] %vm1692, %v3616
      %3695 = vst.msk [vmem:[#allocation3 + $0x90] sm:$0xff] %vm1692, %v3618
      %3696 = vst.msk [vmem:[#allocation3 + $0x98] sm:$0xff] %vm1692, %v3620
      %3697 = vst.msk [vmem:[#allocation3 + $0xa0] sm:$0xff] %vm1692, %v3622
      %3698 = vst.msk [vmem:[#allocation3 + $0xa8] sm:$0xff] %vm1692, %v3624
      %3699 = vst.msk [vmem:[#allocation3 + $0xb0] sm:$0xff] %vm1692, %v3626
      %3700 = vst.msk [vmem:[#allocation3 + $0xb8] sm:$0xff] %vm1692, %v3628
      %3701 = vst.msk [vmem:[#allocation3 + $0xc0] sm:$0xff] %vm1692, %v3630
      %3702 = vst.msk [vmem:[#allocation3 + $0xc8] sm:$0xff] %vm1692, %v3632
      %3703 = vst.msk [vmem:[#allocation3 + $0xd0] sm:$0xff] %vm1692, %v3634
      %3704 = vst.msk [vmem:[#allocation3 + $0xd8] sm:$0xff] %vm1692, %v3636
      %3705 = vst.msk [vmem:[#allocation3 + $0xe0] sm:$0xff] %vm1692, %v3638
      %3706 = vst.msk [vmem:[#allocation3 + $0xe8] sm:$0xff] %vm1692, %v3640
      %3707 = vst.msk [vmem:[#allocation3 + $0xf0] sm:$0xff] %vm1692, %v3642
      %3708 = vst.msk [vmem:[#allocation3 + $0xf8] sm:$0xff] %vm1692, %v3644
      %v3709 = vld [vmem:[%s1338 + $0x2] sm:$0xff]
      %v3710 = vld [vmem:[%s1338 + $0xa] sm:$0xff]
      %v3711 = vld [vmem:[%s1338 + $0x1a] sm:$0xff]
      %v3712 = vld [vmem:[%s1338 + $0x22] sm:$0xff]
      %v3713 = vld [vmem:[%s1338 + $0x32] sm:$0xff]
      %v3714 = vld [vmem:[%s1338 + $0x3a] sm:$0xff]
      %v3715 = vld [vmem:[%s1338 + $0x4a] sm:$0xff]
      %v3716 = vld [vmem:[%s1338 + $0x52] sm:$0xff]
      %v3717 = vld [vmem:[%s1338 + $0x62] sm:$0xff]
      %v3718 = vld [vmem:[%s1338 + $0x6a] sm:$0xff]
      %v3719 = vld [vmem:[%s1338 + $0x7a] sm:$0xff]
      %v3720 = vld [vmem:[%s1338 + $0x82] sm:$0xff]
      %v3721 = vld [vmem:[%s1338 + $0x92] sm:$0xff]
      %v3722 = vld [vmem:[%s1338 + $0x9a] sm:$0xff]
      %v3723 = vld [vmem:[%s1338 + $0xaa] sm:$0xff]
      %v3724 = vld [vmem:[%s1338 + $0xb2] sm:$0xff]
      %v3725 = vld [vmem:[%s1338 + $0xc2] sm:$0xff]
      %v3726 = vld [vmem:[%s1338 + $0xca] sm:$0xff]
      %v3727 = vld [vmem:[%s1338 + $0xda] sm:$0xff]
      %v3728 = vld [vmem:[%s1338 + $0xe2] sm:$0xff]
      %v3729 = vld [vmem:[%s1338 + $0xf2] sm:$0xff]
      %v3730 = vld [vmem:[%s1338 + $0xfa] sm:$0xff]
      %v3731 = vld [vmem:[%s1338 + $0x10a] sm:$0xff]
      %v3732 = vld [vmem:[%s1338 + $0x112] sm:$0xff]
      %v3733 = vld [vmem:[%s1338 + $0x122] sm:$0xff]
      %v3734 = vld [vmem:[%s1338 + $0x12a] sm:$0xff]
      %v3735 = vld [vmem:[%s1338 + $0x13a] sm:$0xff]
      %v3736 = vld [vmem:[%s1338 + $0x142] sm:$0xff]
      %v3737 = vld [vmem:[%s1338 + $0x152] sm:$0xff]
      %v3738 = vld [vmem:[%s1338 + $0x15a] sm:$0xff]
      %v3739 = vld [vmem:[%s1338 + $0x16a] sm:$0xff]
      %v3740 = vld [vmem:[%s1338 + $0x172] sm:$0xff]
      %3773 = vrot.lane.b32.xlu0 %v3709, 32
      %v3774 = vpop.permute.xlu0 %3773
      %3775 = vrot.lane.b32.xlu0 %v3710, 32
      %v3776 = vpop.permute.xlu0 %3775
      %3777 = vrot.lane.b32.xlu0 %v3711, 32
      %v3778 = vpop.permute.xlu0 %3777
      %3779 = vrot.lane.b32.xlu0 %v3712, 32
      %v3780 = vpop.permute.xlu0 %3779
      %3781 = vrot.lane.b32.xlu0 %v3713, 32
      %v3782 = vpop.permute.xlu0 %3781
      %3783 = vrot.lane.b32.xlu0 %v3714, 32
      %v3784 = vpop.permute.xlu0 %3783
      %3785 = vrot.lane.b32.xlu0 %v3715, 32
      %v3786 = vpop.permute.xlu0 %3785
      %3787 = vrot.lane.b32.xlu0 %v3716, 32
      %v3788 = vpop.permute.xlu0 %3787
      %3789 = vrot.lane.b32.xlu0 %v3717, 32
      %v3790 = vpop.permute.xlu0 %3789
      %3791 = vrot.lane.b32.xlu0 %v3718, 32
      %v3792 = vpop.permute.xlu0 %3791
      %3793 = vrot.lane.b32.xlu0 %v3719, 32
      %v3794 = vpop.permute.xlu0 %3793
      %3795 = vrot.lane.b32.xlu0 %v3720, 32
      %v3796 = vpop.permute.xlu0 %3795
      %3797 = vrot.lane.b32.xlu0 %v3721, 32
      %v3798 = vpop.permute.xlu0 %3797
      %3799 = vrot.lane.b32.xlu0 %v3722, 32
      %v3800 = vpop.permute.xlu0 %3799
      %3801 = vrot.lane.b32.xlu0 %v3723, 32
      %v3802 = vpop.permute.xlu0 %3801
      %3803 = vrot.lane.b32.xlu0 %v3724, 32
      %v3804 = vpop.permute.xlu0 %3803
      %3805 = vrot.lane.b32.xlu0 %v3725, 32
      %v3806 = vpop.permute.xlu0 %3805
      %3807 = vrot.lane.b32.xlu0 %v3726, 32
      %v3808 = vpop.permute.xlu0 %3807
      %3809 = vrot.lane.b32.xlu0 %v3727, 32
      %v3810 = vpop.permute.xlu0 %3809
      %3811 = vrot.lane.b32.xlu0 %v3728, 32
      %v3812 = vpop.permute.xlu0 %3811
      %3813 = vrot.lane.b32.xlu0 %v3729, 32
      %v3814 = vpop.permute.xlu0 %3813
      %3815 = vrot.lane.b32.xlu0 %v3730, 32
      %v3816 = vpop.permute.xlu0 %3815
      %3817 = vrot.lane.b32.xlu0 %v3731, 32
      %v3818 = vpop.permute.xlu0 %3817
      %3819 = vrot.lane.b32.xlu0 %v3732, 32
      %v3820 = vpop.permute.xlu0 %3819
      %3821 = vrot.lane.b32.xlu0 %v3733, 32
      %v3822 = vpop.permute.xlu0 %3821
      %3823 = vrot.lane.b32.xlu0 %v3734, 32
      %v3824 = vpop.permute.xlu0 %3823
      %3825 = vrot.lane.b32.xlu0 %v3735, 32
      %v3826 = vpop.permute.xlu0 %3825
      %3827 = vrot.lane.b32.xlu0 %v3736, 32
      %v3828 = vpop.permute.xlu0 %3827
      %3829 = vrot.lane.b32.xlu0 %v3737, 32
      %v3830 = vpop.permute.xlu0 %3829
      %3831 = vrot.lane.b32.xlu0 %v3738, 32
      %v3832 = vpop.permute.xlu0 %3831
      %3833 = vrot.lane.b32.xlu0 %v3739, 32
      %v3834 = vpop.permute.xlu0 %3833
      %3835 = vrot.lane.b32.xlu0 %v3740, 32
      %v3836 = vpop.permute.xlu0 %3835
      %3869 = vst.msk [vmem:[#allocation3] sm:$0xff] %vm1885, %v3774
      %3870 = vst.msk [vmem:[#allocation3 + $0x8] sm:$0xff] %vm1885, %v3776
      %3871 = vst.msk [vmem:[#allocation3 + $0x10] sm:$0xff] %vm1885, %v3778
      %3872 = vst.msk [vmem:[#allocation3 + $0x18] sm:$0xff] %vm1885, %v3780
      %3873 = vst.msk [vmem:[#allocation3 + $0x20] sm:$0xff] %vm1885, %v3782
      %3874 = vst.msk [vmem:[#allocation3 + $0x28] sm:$0xff] %vm1885, %v3784
      %3875 = vst.msk [vmem:[#allocation3 + $0x30] sm:$0xff] %vm1885, %v3786
      %3876 = vst.msk [vmem:[#allocation3 + $0x38] sm:$0xff] %vm1885, %v3788
      %3877 = vst.msk [vmem:[#allocation3 + $0x40] sm:$0xff] %vm1885, %v3790
      %3878 = vst.msk [vmem:[#allocation3 + $0x48] sm:$0xff] %vm1885, %v3792
      %3879 = vst.msk [vmem:[#allocation3 + $0x50] sm:$0xff] %vm1885, %v3794
      %3880 = vst.msk [vmem:[#allocation3 + $0x58] sm:$0xff] %vm1885, %v3796
      %3881 = vst.msk [vmem:[#allocation3 + $0x60] sm:$0xff] %vm1885, %v3798
      %3882 = vst.msk [vmem:[#allocation3 + $0x68] sm:$0xff] %vm1885, %v3800
      %3883 = vst.msk [vmem:[#allocation3 + $0x70] sm:$0xff] %vm1885, %v3802
      %3884 = vst.msk [vmem:[#allocation3 + $0x78] sm:$0xff] %vm1885, %v3804
      %3885 = vst.msk [vmem:[#allocation3 + $0x80] sm:$0xff] %vm1885, %v3806
      %3886 = vst.msk [vmem:[#allocation3 + $0x88] sm:$0xff] %vm1885, %v3808
      %3887 = vst.msk [vmem:[#allocation3 + $0x90] sm:$0xff] %vm1885, %v3810
      %3888 = vst.msk [vmem:[#allocation3 + $0x98] sm:$0xff] %vm1885, %v3812
      %3889 = vst.msk [vmem:[#allocation3 + $0xa0] sm:$0xff] %vm1885, %v3814
      %3890 = vst.msk [vmem:[#allocation3 + $0xa8] sm:$0xff] %vm1885, %v3816
      %3891 = vst.msk [vmem:[#allocation3 + $0xb0] sm:$0xff] %vm1885, %v3818
      %3892 = vst.msk [vmem:[#allocation3 + $0xb8] sm:$0xff] %vm1885, %v3820
      %3893 = vst.msk [vmem:[#allocation3 + $0xc0] sm:$0xff] %vm1885, %v3822
      %3894 = vst.msk [vmem:[#allocation3 + $0xc8] sm:$0xff] %vm1885, %v3824
      %3895 = vst.msk [vmem:[#allocation3 + $0xd0] sm:$0xff] %vm1885, %v3826
      %3896 = vst.msk [vmem:[#allocation3 + $0xd8] sm:$0xff] %vm1885, %v3828
      %3897 = vst.msk [vmem:[#allocation3 + $0xe0] sm:$0xff] %vm1885, %v3830
      %3898 = vst.msk [vmem:[#allocation3 + $0xe8] sm:$0xff] %vm1885, %v3832
      %3899 = vst.msk [vmem:[#allocation3 + $0xf0] sm:$0xff] %vm1885, %v3834
      %3900 = vst.msk [vmem:[#allocation3 + $0xf8] sm:$0xff] %vm1885, %v3836
      %v3901 = vld [vmem:[#allocation3] sm:$0xff]
      %v3902 = vld [vmem:[#allocation3 + $0x8] sm:$0xff]
      %v3903 = vld [vmem:[#allocation3 + $0x10] sm:$0xff]
      %v3904 = vld [vmem:[#allocation3 + $0x18] sm:$0xff]
      %v3905 = vld [vmem:[#allocation3 + $0x20] sm:$0xff]
      %v3906 = vld [vmem:[#allocation3 + $0x28] sm:$0xff]
      %v3907 = vld [vmem:[#allocation3 + $0x30] sm:$0xff]
      %v3908 = vld [vmem:[#allocation3 + $0x38] sm:$0xff]
      %v3909 = vld [vmem:[#allocation3 + $0x40] sm:$0xff]
      %v3910 = vld [vmem:[#allocation3 + $0x48] sm:$0xff]
      %v3911 = vld [vmem:[#allocation3 + $0x50] sm:$0xff]
      %v3912 = vld [vmem:[#allocation3 + $0x58] sm:$0xff]
      %v3913 = vld [vmem:[#allocation3 + $0x60] sm:$0xff]
      %v3914 = vld [vmem:[#allocation3 + $0x68] sm:$0xff]
      %v3915 = vld [vmem:[#allocation3 + $0x70] sm:$0xff]
      %v3916 = vld [vmem:[#allocation3 + $0x78] sm:$0xff]
      %v3917 = vld [vmem:[#allocation3 + $0x80] sm:$0xff]
      %v3918 = vld [vmem:[#allocation3 + $0x88] sm:$0xff]
      %v3919 = vld [vmem:[#allocation3 + $0x90] sm:$0xff]
      %v3920 = vld [vmem:[#allocation3 + $0x98] sm:$0xff]
      %v3921 = vld [vmem:[#allocation3 + $0xa0] sm:$0xff]
      %v3922 = vld [vmem:[#allocation3 + $0xa8] sm:$0xff]
      %v3923 = vld [vmem:[#allocation3 + $0xb0] sm:$0xff]
      %v3924 = vld [vmem:[#allocation3 + $0xb8] sm:$0xff]
      %v3925 = vld [vmem:[#allocation3 + $0xc0] sm:$0xff]
      %v3926 = vld [vmem:[#allocation3 + $0xc8] sm:$0xff]
      %v3927 = vld [vmem:[#allocation3 + $0xd0] sm:$0xff]
      %v3928 = vld [vmem:[#allocation3 + $0xd8] sm:$0xff]
      %v3929 = vld [vmem:[#allocation3 + $0xe0] sm:$0xff]
      %v3930 = vld [vmem:[#allocation3 + $0xe8] sm:$0xff]
      %v3931 = vld [vmem:[#allocation3 + $0xf0] sm:$0xff]
      %v3932 = vld [vmem:[#allocation3 + $0xf8] sm:$0xff]
      %v3933 = vld [vmem:[%s2] sm:$0xff]
      %v3934 = vld [vmem:[%s2 + $0x8] sm:$0xff]
      %v3935 = vld [vmem:[%s2 + $0x10] sm:$0xff]
      %v3936 = vld [vmem:[%s2 + $0x18] sm:$0xff]
      %v3937 = vld [vmem:[%s2 + $0x20] sm:$0xf]
      %v3939 = vsel %vm1955, %v3901, 0
      %v3942 = vsel %vm1955, %v3902, 0
      %v3945 = vsel %vm1955, %v3903, 0
      %v3948 = vsel %vm1955, %v3904, 0
      %v3951 = vsel %vm1955, %v3905, 0
      %v3954 = vsel %vm1955, %v3906, 0
      %v3957 = vsel %vm1955, %v3907, 0
      %v3960 = vsel %vm1955, %v3908, 0
      %v3963 = vsel %vm1955, %v3909, 0
      %v3966 = vsel %vm1955, %v3910, 0
      %v3969 = vsel %vm1955, %v3911, 0
      %v3972 = vsel %vm1955, %v3912, 0
      %v3975 = vsel %vm1955, %v3913, 0
      %v3978 = vsel %vm1955, %v3914, 0
      %v3981 = vsel %vm1955, %v3915, 0
      %v3984 = vsel %vm1955, %v3916, 0
      %v3987 = vsel %vm1955, %v3917, 0
      %v3990 = vsel %vm1955, %v3918, 0
      %v3993 = vsel %vm1955, %v3919, 0
      %v3996 = vsel %vm1955, %v3920, 0
      %v3999 = vsel %vm1955, %v3921, 0
      %v4002 = vsel %vm1955, %v3922, 0
      %v4005 = vsel %vm1955, %v3923, 0
      %v4008 = vsel %vm1955, %v3924, 0
      %v4011 = vsel %vm1955, %v3925, 0
      %v4014 = vsel %vm1955, %v3926, 0
      %v4017 = vsel %vm1955, %v3927, 0
      %v4020 = vsel %vm1955, %v3928, 0
      %v4023 = vsel %vm1955, %v3929, 0
      %v4026 = vsel %vm1955, %v3930, 0
      %v4029 = vsel %vm1955, %v3931, 0
      %v4032 = vsel %vm1955, %v3932, 0
      %v4035 = vsel %vm2052, %v3937, 0
      %4037 = vmatpush.msra.mxu0 0.0
      %4038 = vmatpush.msra.mxu0 0.0
      %4039 = vmatpush.msra.mxu0 0.0
      %4040 = vmatpush.msra.mxu0 0.0
      %4041 = vmatpush.msra.mxu0 0.0
      %4042 = vmatpush.msra.mxu0 0.0
      %4043 = vmatpush.msra.mxu0 0.0
      %4044 = vmatpush.msra.mxu0 0.0
      %4045 = vmatpush.msra.mxu0 0.0
      %4046 = vmatpush.msra.mxu0 0.0
      %4047 = vmatpush.msra.mxu0 0.0
      %4048 = vmatpush.msra.mxu0 %v4035
      %4049 = vmatpush.msra.mxu0 %v3936
      %4050 = vmatpush.msra.mxu0 %v3935
      %4051 = vmatpush.msra.mxu0 %v3934
      %4052 = vmatpush.msra.mxu0 %v3933
      %4053 = vmatmul.f32.gmra.mxu0 %v3939
      %v4054 = vpop.f32.mrf.mxu0
      %v4055 = vadd.f32 0.0, %v4054
      %4056 = vmatmul.f32.gmra.mxu0 %v3942
      %v4057 = vpop.f32.mrf.mxu0
      %v4058 = vadd.f32 0.0, %v4057
      %4059 = vmatmul.f32.gmra.mxu0 %v3945
      %v4060 = vpop.f32.mrf.mxu0
      %v4061 = vadd.f32 0.0, %v4060
      %4062 = vmatmul.f32.gmra.mxu0 %v3948
      %v4063 = vpop.f32.mrf.mxu0
      %v4064 = vadd.f32 0.0, %v4063
      %4065 = vmatmul.f32.gmra.mxu0 %v3951
      %v4066 = vpop.f32.mrf.mxu0
      %v4067 = vadd.f32 0.0, %v4066
      %4068 = vmatmul.f32.gmra.mxu0 %v3954
      %v4069 = vpop.f32.mrf.mxu0
      %v4070 = vadd.f32 0.0, %v4069
      %4071 = vmatmul.f32.gmra.mxu0 %v3957
      %v4072 = vpop.f32.mrf.mxu0
      %v4073 = vadd.f32 0.0, %v4072
      %4074 = vmatmul.f32.gmra.mxu0 %v3960
      %v4075 = vpop.f32.mrf.mxu0
      %v4076 = vadd.f32 0.0, %v4075
      %4077 = vmatmul.f32.gmra.mxu0 %v3963
      %v4078 = vpop.f32.mrf.mxu0
      %v4079 = vadd.f32 0.0, %v4078
      %4080 = vmatmul.f32.gmra.mxu0 %v3966
      %v4081 = vpop.f32.mrf.mxu0
      %v4082 = vadd.f32 0.0, %v4081
      %4083 = vmatmul.f32.gmra.mxu0 %v3969
      %v4084 = vpop.f32.mrf.mxu0
      %v4085 = vadd.f32 0.0, %v4084
      %4086 = vmatmul.f32.gmra.mxu0 %v3972
      %v4087 = vpop.f32.mrf.mxu0
      %v4088 = vadd.f32 0.0, %v4087
      %4089 = vmatmul.f32.gmra.mxu0 %v3975
      %v4090 = vpop.f32.mrf.mxu0
      %v4091 = vadd.f32 0.0, %v4090
      %4092 = vmatmul.f32.gmra.mxu0 %v3978
      %v4093 = vpop.f32.mrf.mxu0
      %v4094 = vadd.f32 0.0, %v4093
      %4095 = vmatmul.f32.gmra.mxu0 %v3981
      %v4096 = vpop.f32.mrf.mxu0
      %v4097 = vadd.f32 0.0, %v4096
      %4098 = vmatmul.f32.gmra.mxu0 %v3984
      %v4099 = vpop.f32.mrf.mxu0
      %v4100 = vadd.f32 0.0, %v4099
      %4101 = vmatmul.f32.gmra.mxu0 %v3987
      %v4102 = vpop.f32.mrf.mxu0
      %v4103 = vadd.f32 0.0, %v4102
      %4104 = vmatmul.f32.gmra.mxu0 %v3990
      %v4105 = vpop.f32.mrf.mxu0
      %v4106 = vadd.f32 0.0, %v4105
      %4107 = vmatmul.f32.gmra.mxu0 %v3993
      %v4108 = vpop.f32.mrf.mxu0
      %v4109 = vadd.f32 0.0, %v4108
      %4110 = vmatmul.f32.gmra.mxu0 %v3996
      %v4111 = vpop.f32.mrf.mxu0
      %v4112 = vadd.f32 0.0, %v4111
      %4113 = vmatmul.f32.gmra.mxu0 %v3999
      %v4114 = vpop.f32.mrf.mxu0
      %v4115 = vadd.f32 0.0, %v4114
      %4116 = vmatmul.f32.gmra.mxu0 %v4002
      %v4117 = vpop.f32.mrf.mxu0
      %v4118 = vadd.f32 0.0, %v4117
      %4119 = vmatmul.f32.gmra.mxu0 %v4005
      %v4120 = vpop.f32.mrf.mxu0
      %v4121 = vadd.f32 0.0, %v4120
      %4122 = vmatmul.f32.gmra.mxu0 %v4008
      %v4123 = vpop.f32.mrf.mxu0
      %v4124 = vadd.f32 0.0, %v4123
      %4125 = vmatmul.f32.gmra.mxu0 %v4011
      %v4126 = vpop.f32.mrf.mxu0
      %v4127 = vadd.f32 0.0, %v4126
      %4128 = vmatmul.f32.gmra.mxu0 %v4014
      %v4129 = vpop.f32.mrf.mxu0
      %v4130 = vadd.f32 0.0, %v4129
      %4131 = vmatmul.f32.gmra.mxu0 %v4017
      %v4132 = vpop.f32.mrf.mxu0
      %v4133 = vadd.f32 0.0, %v4132
      %4134 = vmatmul.f32.gmra.mxu0 %v4020
      %v4135 = vpop.f32.mrf.mxu0
      %v4136 = vadd.f32 0.0, %v4135
      %4137 = vmatmul.f32.gmra.mxu0 %v4023
      %v4138 = vpop.f32.mrf.mxu0
      %v4139 = vadd.f32 0.0, %v4138
      %4140 = vmatmul.f32.gmra.mxu0 %v4026
      %v4141 = vpop.f32.mrf.mxu0
      %v4142 = vadd.f32 0.0, %v4141
      %4143 = vmatmul.f32.gmra.mxu0 %v4029
      %v4144 = vpop.f32.mrf.mxu0
      %v4145 = vadd.f32 0.0, %v4144
      %4146 = vmatmul.f32.gmra.mxu0 %v4032
      %v4147 = vpop.f32.mrf.mxu0
      %v4148 = vadd.f32 0.0, %v4147
      %4149 = vdwg.mxu0
      %v4150 = vld [vmem:[%s3 + $0x2] sm:$0x1]
      %v4151 = vperm.slane %v4150, 0
      %v4152 = vmul.f32 %v4055, %v4151
      %v4153 = vmul.f32 %v4058, %v4151
      %v4154 = vmul.f32 %v4061, %v4151
      %v4155 = vmul.f32 %v4064, %v4151
      %v4156 = vmul.f32 %v4067, %v4151
      %v4157 = vmul.f32 %v4070, %v4151
      %v4158 = vmul.f32 %v4073, %v4151
      %v4159 = vmul.f32 %v4076, %v4151
      %v4160 = vmul.f32 %v4079, %v4151
      %v4161 = vmul.f32 %v4082, %v4151
      %v4162 = vmul.f32 %v4085, %v4151
      %v4163 = vmul.f32 %v4088, %v4151
      %v4164 = vmul.f32 %v4091, %v4151
      %v4165 = vmul.f32 %v4094, %v4151
      %v4166 = vmul.f32 %v4097, %v4151
      %v4167 = vmul.f32 %v4100, %v4151
      %v4168 = vmul.f32 %v4103, %v4151
      %v4169 = vmul.f32 %v4106, %v4151
      %v4170 = vmul.f32 %v4109, %v4151
      %v4171 = vmul.f32 %v4112, %v4151
      %v4172 = vmul.f32 %v4115, %v4151
      %v4173 = vmul.f32 %v4118, %v4151
      %v4174 = vmul.f32 %v4121, %v4151
      %v4175 = vmul.f32 %v4124, %v4151
      %v4176 = vmul.f32 %v4127, %v4151
      %v4177 = vmul.f32 %v4130, %v4151
      %v4178 = vmul.f32 %v4133, %v4151
      %v4179 = vmul.f32 %v4136, %v4151
      %v4180 = vmul.f32 %v4139, %v4151
      %v4181 = vmul.f32 %v4142, %v4151
      %v4182 = vmul.f32 %v4145, %v4151
      %v4183 = vmul.f32 %v4148, %v4151
      %v4184 = vld [vmem:[%s3 + $0x3] sm:$0x1]
      %v4185 = vperm.slane %v4184, 0
      %v4186 = vadd.f32 %v4152, %v4185
      %v4187 = vadd.f32 %v4153, %v4185
      %v4188 = vadd.f32 %v4154, %v4185
      %v4189 = vadd.f32 %v4155, %v4185
      %v4190 = vadd.f32 %v4156, %v4185
      %v4191 = vadd.f32 %v4157, %v4185
      %v4192 = vadd.f32 %v4158, %v4185
      %v4193 = vadd.f32 %v4159, %v4185
      %v4194 = vadd.f32 %v4160, %v4185
      %v4195 = vadd.f32 %v4161, %v4185
      %v4196 = vadd.f32 %v4162, %v4185
      %v4197 = vadd.f32 %v4163, %v4185
      %v4198 = vadd.f32 %v4164, %v4185
      %v4199 = vadd.f32 %v4165, %v4185
      %v4200 = vadd.f32 %v4166, %v4185
      %v4201 = vadd.f32 %v4167, %v4185
      %v4202 = vadd.f32 %v4168, %v4185
      %v4203 = vadd.f32 %v4169, %v4185
      %v4204 = vadd.f32 %v4170, %v4185
      %v4205 = vadd.f32 %v4171, %v4185
      %v4206 = vadd.f32 %v4172, %v4185
      %v4207 = vadd.f32 %v4173, %v4185
      %v4208 = vadd.f32 %v4174, %v4185
      %v4209 = vadd.f32 %v4175, %v4185
      %v4210 = vadd.f32 %v4176, %v4185
      %v4211 = vadd.f32 %v4177, %v4185
      %v4212 = vadd.f32 %v4178, %v4185
      %v4213 = vadd.f32 %v4179, %v4185
      %v4214 = vadd.f32 %v4180, %v4185
      %v4215 = vadd.f32 %v4181, %v4185
      %v4216 = vadd.f32 %v4182, %v4185
      %v4217 = vadd.f32 %v4183, %v4185
      %v4218 = vld [vmem:[%s192] sm:$0xff]
      %v4219 = vld [vmem:[%s192 + $0x8] sm:$0xff]
      %v4220 = vld [vmem:[%s192 + $0x10] sm:$0xff]
      %v4221 = vld [vmem:[%s192 + $0x18] sm:$0xff]
      %v4222 = vld [vmem:[%s192 + $0x20] sm:$0xff]
      %v4223 = vld [vmem:[%s192 + $0x28] sm:$0xff]
      %v4224 = vld [vmem:[%s192 + $0x30] sm:$0xff]
      %v4225 = vld [vmem:[%s192 + $0x38] sm:$0xff]
      %v4226 = vld [vmem:[%s192 + $0x40] sm:$0xff]
      %v4227 = vld [vmem:[%s192 + $0x48] sm:$0xff]
      %v4228 = vld [vmem:[%s192 + $0x50] sm:$0xff]
      %v4229 = vld [vmem:[%s192 + $0x58] sm:$0xff]
      %v4230 = vld [vmem:[%s192 + $0x60] sm:$0xff]
      %v4231 = vld [vmem:[%s192 + $0x68] sm:$0xff]
      %v4232 = vld [vmem:[%s192 + $0x70] sm:$0xff]
      %v4233 = vld [vmem:[%s192 + $0x78] sm:$0xff]
      %v4234 = vld [vmem:[%s192 + $0x80] sm:$0xff]
      %v4235 = vld [vmem:[%s192 + $0x88] sm:$0xff]
      %v4236 = vld [vmem:[%s192 + $0x90] sm:$0xff]
      %v4237 = vld [vmem:[%s192 + $0x98] sm:$0xff]
      %v4238 = vld [vmem:[%s192 + $0xa0] sm:$0xff]
      %v4239 = vld [vmem:[%s192 + $0xa8] sm:$0xff]
      %v4240 = vld [vmem:[%s192 + $0xb0] sm:$0xff]
      %v4241 = vld [vmem:[%s192 + $0xb8] sm:$0xff]
      %v4242 = vld [vmem:[%s192 + $0xc0] sm:$0xff]
      %v4243 = vld [vmem:[%s192 + $0xc8] sm:$0xff]
      %v4244 = vld [vmem:[%s192 + $0xd0] sm:$0xff]
      %v4245 = vld [vmem:[%s192 + $0xd8] sm:$0xff]
      %v4246 = vld [vmem:[%s192 + $0xe0] sm:$0xff]
      %v4247 = vld [vmem:[%s192 + $0xe8] sm:$0xff]
      %v4248 = vld [vmem:[%s192 + $0xf0] sm:$0xff]
      %v4249 = vld [vmem:[%s192 + $0xf8] sm:$0xff]
      %v4250 = vadd.f32 %v4186, %v4218
      %v4251 = vadd.f32 %v4187, %v4219
      %v4252 = vadd.f32 %v4188, %v4220
      %v4253 = vadd.f32 %v4189, %v4221
      %v4254 = vadd.f32 %v4190, %v4222
      %v4255 = vadd.f32 %v4191, %v4223
      %v4256 = vadd.f32 %v4192, %v4224
      %v4257 = vadd.f32 %v4193, %v4225
      %v4258 = vadd.f32 %v4194, %v4226
      %v4259 = vadd.f32 %v4195, %v4227
      %v4260 = vadd.f32 %v4196, %v4228
      %v4261 = vadd.f32 %v4197, %v4229
      %v4262 = vadd.f32 %v4198, %v4230
      %v4263 = vadd.f32 %v4199, %v4231
      %v4264 = vadd.f32 %v4200, %v4232
      %v4265 = vadd.f32 %v4201, %v4233
      %v4266 = vadd.f32 %v4202, %v4234
      %v4267 = vadd.f32 %v4203, %v4235
      %v4268 = vadd.f32 %v4204, %v4236
      %v4269 = vadd.f32 %v4205, %v4237
      %v4270 = vadd.f32 %v4206, %v4238
      %v4271 = vadd.f32 %v4207, %v4239
      %v4272 = vadd.f32 %v4208, %v4240
      %v4273 = vadd.f32 %v4209, %v4241
      %v4274 = vadd.f32 %v4210, %v4242
      %v4275 = vadd.f32 %v4211, %v4243
      %v4276 = vadd.f32 %v4212, %v4244
      %v4277 = vadd.f32 %v4213, %v4245
      %v4278 = vadd.f32 %v4214, %v4246
      %v4279 = vadd.f32 %v4215, %v4247
      %v4280 = vadd.f32 %v4216, %v4248
      %v4281 = vadd.f32 %v4217, %v4249
      %v4282 = vmax.f32 %v4250, 0.0
      %v4283 = vmax.f32 %v4251, 0.0
      %v4284 = vmax.f32 %v4252, 0.0
      %v4285 = vmax.f32 %v4253, 0.0
      %v4286 = vmax.f32 %v4254, 0.0
      %v4287 = vmax.f32 %v4255, 0.0
      %v4288 = vmax.f32 %v4256, 0.0
      %v4289 = vmax.f32 %v4257, 0.0
      %v4290 = vmax.f32 %v4258, 0.0
      %v4291 = vmax.f32 %v4259, 0.0
      %v4292 = vmax.f32 %v4260, 0.0
      %v4293 = vmax.f32 %v4261, 0.0
      %v4294 = vmax.f32 %v4262, 0.0
      %v4295 = vmax.f32 %v4263, 0.0
      %v4296 = vmax.f32 %v4264, 0.0
      %v4297 = vmax.f32 %v4265, 0.0
      %v4298 = vmax.f32 %v4266, 0.0
      %v4299 = vmax.f32 %v4267, 0.0
      %v4300 = vmax.f32 %v4268, 0.0
      %v4301 = vmax.f32 %v4269, 0.0
      %v4302 = vmax.f32 %v4270, 0.0
      %v4303 = vmax.f32 %v4271, 0.0
      %v4304 = vmax.f32 %v4272, 0.0
      %v4305 = vmax.f32 %v4273, 0.0
      %v4306 = vmax.f32 %v4274, 0.0
      %v4307 = vmax.f32 %v4275, 0.0
      %v4308 = vmax.f32 %v4276, 0.0
      %v4309 = vmax.f32 %v4277, 0.0
      %v4310 = vmax.f32 %v4278, 0.0
      %v4311 = vmax.f32 %v4279, 0.0
      %v4312 = vmax.f32 %v4280, 0.0
      %v4313 = vmax.f32 %v4281, 0.0
      %4314 = vst.msk [vmem:[%s197] sm:$0xff] %vm198, %v4282
      %4315 = vst.msk [vmem:[%s197 + $0x8] sm:$0xff] %vm198, %v4283
      %4316 = vst.msk [vmem:[%s197 + $0x10] sm:$0xff] %vm198, %v4284
      %4317 = vst.msk [vmem:[%s197 + $0x18] sm:$0xff] %vm198, %v4285
      %4318 = vst.msk [vmem:[%s197 + $0x20] sm:$0xff] %vm198, %v4286
      %4319 = vst.msk [vmem:[%s197 + $0x28] sm:$0xff] %vm198, %v4287
      %4320 = vst.msk [vmem:[%s197 + $0x30] sm:$0xff] %vm198, %v4288
      %4321 = vst.msk [vmem:[%s197 + $0x38] sm:$0xff] %vm198, %v4289
      %4322 = vst.msk [vmem:[%s197 + $0x40] sm:$0xff] %vm198, %v4290
      %4323 = vst.msk [vmem:[%s197 + $0x48] sm:$0xff] %vm198, %v4291
      %4324 = vst.msk [vmem:[%s197 + $0x50] sm:$0xff] %vm198, %v4292
      %4325 = vst.msk [vmem:[%s197 + $0x58] sm:$0xff] %vm198, %v4293
      %4326 = vst.msk [vmem:[%s197 + $0x60] sm:$0xff] %vm198, %v4294
      %4327 = vst.msk [vmem:[%s197 + $0x68] sm:$0xff] %vm198, %v4295
      %4328 = vst.msk [vmem:[%s197 + $0x70] sm:$0xff] %vm198, %v4296
      %4329 = vst.msk [vmem:[%s197 + $0x78] sm:$0xff] %vm198, %v4297
      %4330 = vst.msk [vmem:[%s197 + $0x80] sm:$0xff] %vm198, %v4298
      %4331 = vst.msk [vmem:[%s197 + $0x88] sm:$0xff] %vm198, %v4299
      %4332 = vst.msk [vmem:[%s197 + $0x90] sm:$0xff] %vm198, %v4300
      %4333 = vst.msk [vmem:[%s197 + $0x98] sm:$0xff] %vm198, %v4301
      %4334 = vst.msk [vmem:[%s197 + $0xa0] sm:$0xff] %vm198, %v4302
      %4335 = vst.msk [vmem:[%s197 + $0xa8] sm:$0xff] %vm198, %v4303
      %4336 = vst.msk [vmem:[%s197 + $0xb0] sm:$0xff] %vm198, %v4304
      %4337 = vst.msk [vmem:[%s197 + $0xb8] sm:$0xff] %vm198, %v4305
      %4338 = vst.msk [vmem:[%s197 + $0xc0] sm:$0xff] %vm198, %v4306
      %4339 = vst.msk [vmem:[%s197 + $0xc8] sm:$0xff] %vm198, %v4307
      %4340 = vst.msk [vmem:[%s197 + $0xd0] sm:$0xff] %vm198, %v4308
      %4341 = vst.msk [vmem:[%s197 + $0xd8] sm:$0xff] %vm198, %v4309
      %4342 = vst.msk [vmem:[%s197 + $0xe0] sm:$0xff] %vm198, %v4310
      %4343 = vst.msk [vmem:[%s197 + $0xe8] sm:$0xff] %vm198, %v4311
      %4344 = vst.msk [vmem:[%s197 + $0xf0] sm:$0xff] %vm198, %v4312
      %4345 = vst.msk [vmem:[%s197 + $0xf8] sm:$0xff] %vm198, %v4313
      %p4346 = scmp.lt.s32.totalorder %s15, 1
      %s4347 = scalar_select %p4346, %s15, 1
      %s4348 = smul.addr %s4347, 32
      %s4349 = smul.addr %s4348, 8
      %s4350 = scalar_lea.vmem %s4, %s4349
      // Predicated region
      $region37: #{tpu_custom_call.1} parent=35 // pred_check
        %p4351 = pneg %p122
      $region38: #{tpu_custom_call.1} parent=35 // pred_check_branch
        %4353 = sbr.rel (%p4351) target = $region40
      $region39: #{tpu_custom_call.1} parent=35 // pred_region
        _
      $region40: #{tpu_custom_call.1} parent=35 // pred_fallthru
        _
    $region36: #{tpu_custom_call.1} parent=5 // pred_fallthru
      _
    %p4354 = scmp.le.s32.totalorder 2, %s10
    // Predicated region
    $region41: #{tpu_custom_call.1} parent=5 // pred_check
      %p4355 = pneg %p4354
    $region42: #{tpu_custom_call.1} parent=5 // pred_check_branch
      %4357 = sbr.rel (%p4355) target = $region44
    $region43: #{tpu_custom_call.1} parent=5 // pred_region
      %s4358 = ssub.s32 %s10, 2
      // Predicated region
      $region45: #{tpu_custom_call.1} parent=43 // pred_check
        %p4359 = pneg %p128
      $region46: #{tpu_custom_call.1} parent=43 // pred_check_branch
        %4361 = sbr.rel (%p4359) target = $region48
      $region47: #{tpu_custom_call.1} parent=43 // pred_region
        %p4362 = scmp.lt.s32.totalorder %s16, 1
        %s4363 = scalar_select %p4362, %s16, 1
        %s4364 = smul.addr %s4363, 32
        %s4365 = smul.addr %s4364, 8
        %s4366 = scalar_lea.vmem %s4, %s4365
      $region48: #{tpu_custom_call.1} parent=43 // pred_fallthru
        _
    $region44: #{tpu_custom_call.1} parent=5 // pred_fallthru
      _
  $region6: #{tpu_custom_call.1} parent=0 // loop_footer
    %s14 = sadd.s32 1, %s10
  $region7: #{tpu_custom_call.1} parent=0 // loop_footer_branch
    %9 = sbr.rel target = $region3
  $region8: #{tpu_custom_call.1} parent=0 // loop_exit
    _

</llo_original>
